<compile_context>
chip_gen: v7x
topology: tpu7x:2x2x1
jax: 0.10.0
libtpu: 0.0.40
codegen_flags: <defaults>
</compile_context>

<pallas_src>
import functools

import jax
import jax.numpy as jnp
from jax.experimental import pallas as pl
from jax.experimental.pallas import tpu as pltpu

# TODO(synk): MobileNetV2 pretrained feature extractor has no clean Pallas
# equivalent (pretrained checkpoint); inputs here are its (B,1280,H,W) output.

C_FEAT = 1280    # mobilenet_v2 feature channels
HIDDEN = 128
N_CLASSES = 2
OUT_PAD = 128    # lane-dense padded output width (slice to N_CLASSES outside)


def _head_kernel(x_ref, w1_ref, b1_ref, w2_ref, b2_ref, o_ref, *, inv_hw):
    # x_ref : (TB, C, HW) f32 feature maps in native NCHW-flattened layout
    # w1_ref: (C, HIDDEN), b1_ref: (1, HIDDEN)
    # w2_ref: (HIDDEN, OUT_PAD), b2_ref: (1, OUT_PAD)  (zero-padded past col 2)
    # o_ref : (TB, OUT_PAD)
    x = x_ref[...]

    # AdaptiveAvgPool2d((1,1)) + Flatten == spatial mean.  Do the SUM here and
    # fold the 1/HW scale in after fc1 (10x fewer elements touched).
    pooled = jnp.sum(x, axis=-1)                                   # (TB, C)

    # fc1 (MXU, f32 accumulate) + mean scale + bias + ReLU
    h = jnp.dot(pooled, w1_ref[...], preferred_element_type=jnp.float32)
    h = h * inv_hw + b1_ref[...]                                   # (TB, HIDDEN)
    h = jnp.maximum(h, 0.0)

    # Dropout(0.5): inference mode -> identity (no scaling in eval).

    # fc2 (lane-dense padded output)
    out = jnp.dot(h, w2_ref[...], preferred_element_type=jnp.float32)
    out = out + b2_ref[...]
    o_ref[...] = out.astype(o_ref.dtype)


def _pick_batch_tile(B, HW, budget_bytes=4 * 1024 * 1024):
    """Batch tile so one double-buffered x block stays well inside scoped VMEM
    on every generation (v5e 16 MiB / v6e 32 MiB / v7x 32 MiB defaults)."""
    tb = max(1, budget_bytes // (C_FEAT * HW * 4))
    tb = min(tb, B)
    if tb >= 8:                      # keep MXU sublanes full when possible
        tb = (tb // 8) * 8
    return tb


def fake_image_model_head(feat_nchw, w1, b1, w2, b2):
    """feat_nchw: (B, C=1280, H, W) float32 backbone features. Returns (B, 2)."""
    B, C, H, W = feat_nchw.shape
    assert C == C_FEAT
    HW = H * W

    # Free reshape (contiguous) -- no transpose, no extra HBM pass.
    x = feat_nchw.reshape(B, C, HW)
    b1_2d = b1.reshape(1, HIDDEN)

    # Lane-dense fc2: zero-pad to 128 output columns.
    w2_pad = jnp.zeros((HIDDEN, OUT_PAD), w2.dtype).at[:, :N_CLASSES].set(w2)
    b2_pad = jnp.zeros((1, OUT_PAD), b2.dtype).at[0, :N_CLASSES].set(b2)

    TB = _pick_batch_tile(B, HW)
    grid = (pl.cdiv(B, TB),)

    kernel = functools.partial(_head_kernel, inv_hw=1.0 / float(HW))

    cost = pl.CostEstimate(
        flops=2 * B * (C_FEAT * HIDDEN + HIDDEN * OUT_PAD) + B * C_FEAT * HW,
        transcendentals=0,
        bytes_accessed=(B * C_FEAT * HW * 4
                        + (C_FEAT * HIDDEN + HIDDEN * OUT_PAD + OUT_PAD) * 4
                        + B * OUT_PAD * 4),
    )

    out_full = pl.pallas_call(
        kernel,
        out_shape=jax.ShapeDtypeStruct((B, OUT_PAD), jnp.float32),
        grid=grid,
        in_specs=[
            pl.BlockSpec((TB, C_FEAT, HW), lambda b: (b, 0, 0)),   # activations: tiled over batch
            pl.BlockSpec((C_FEAT, HIDDEN), lambda b: (0, 0)),      # weights stay resident
            pl.BlockSpec((1, HIDDEN), lambda b: (0, 0)),
            pl.BlockSpec((HIDDEN, OUT_PAD), lambda b: (0, 0)),
            pl.BlockSpec((1, OUT_PAD), lambda b: (0, 0)),
        ],
        out_specs=pl.BlockSpec((TB, OUT_PAD), lambda b: (b, 0)),
        compiler_params=pltpu.CompilerParams(
            dimension_semantics=("parallel",),    # shards batch across TCs on v7x
        ),
        cost_estimate=cost,
    )(x, w1, b1_2d, w2_pad, b2_pad)

    return out_full[:, :N_CLASSES]


def _init_params(key):
    k1, k2, k3, k4 = jax.random.split(key, 4)
    # Deterministic synthetic init (matching nn.Linear shapes).
    w1 = jax.random.normal(k1, (C_FEAT, HIDDEN), jnp.float32) * 0.02
    b1 = jax.random.normal(k2, (HIDDEN,), jnp.float32) * 0.01
    w2 = jax.random.normal(k3, (HIDDEN, N_CLASSES), jnp.float32) * 0.02
    b2 = jax.random.normal(k4, (N_CLASSES,), jnp.float32) * 0.01
    return w1, b1, w2, b2


if __name__ == "__main__":
    key = jax.random.PRNGKey(0)
    k_x, k_p = jax.random.split(key)

    # Small synthetic backbone feature map: batch=2, C=1280, 4x4 spatial (NCHW).
    B, H, W = 2, 4, 4
    feat = jax.random.normal(k_x, (B, C_FEAT, H, W), jnp.float32)

    w1, b1, w2, b2 = _init_params(k_p)

    out = fake_image_model_head(feat, w1, b1, w2, b2)
    out = jax.block_until_ready(out)

    # Pure-JAX reference check of the head.
    pooled_ref = jnp.mean(feat, axis=(2, 3))                  # (B, 1280)
    h_ref = jnp.maximum(pooled_ref @ w1 + b1, 0.0)
    out_ref = h_ref @ w2 + b2
    assert out.shape == (B, N_CLASSES)
    assert jnp.allclose(out, out_ref, atol=1e-4, rtol=1e-4)

    print("KERNEL_OK")
</pallas_src>

<mosaic_0001>
module attributes {stable_mosaic.version = 11 : i64} {
  func.func @_head_kernel(%arg0: i32, %arg1: memref<2x1280x16xf32, #tpu.memory_space<vmem>>, %arg2: memref<1280x128xf32, #tpu.memory_space<vmem>>, %arg3: memref<1x128xf32, #tpu.memory_space<vmem>>, %arg4: memref<128x128xf32, #tpu.memory_space<vmem>>, %arg5: memref<1x128xf32, #tpu.memory_space<vmem>>, %arg6: memref<2x128xf32, #tpu.memory_space<vmem>>) attributes {dimension_semantics = [#tpu.dimension_semantics<parallel>], iteration_bounds = array<i64: 1>, scalar_prefetch = 0 : i64, scratch_operands = 0 : i64, tpu.core_type = #tpu.core_type<tc>, window_params = [{transform_indices = @transform_0, window_bounds = array<i64: 2, 1280, 16>}, {pipeline_mode = #tpu.pipeline_mode<synchronous>, transform_indices = @transform_1, window_bounds = array<i64: 1280, 128>}, {pipeline_mode = #tpu.pipeline_mode<synchronous>, transform_indices = @transform_2, window_bounds = array<i64: 1, 128>}, {pipeline_mode = #tpu.pipeline_mode<synchronous>, transform_indices = @transform_3, window_bounds = array<i64: 128, 128>}, {pipeline_mode = #tpu.pipeline_mode<synchronous>, transform_indices = @transform_4, window_bounds = array<i64: 1, 128>}, {transform_indices = @transform_5, window_bounds = array<i64: 2, 128>}]} {
    %c0 = arith.constant 0 : index
    %c0_0 = arith.constant 0 : index
    %c0_1 = arith.constant 0 : index
    %0 = vector.load %arg1[%c0, %c0_0, %c0_1] : memref<2x1280x16xf32, #tpu.memory_space<vmem>>, vector<2x1280x16xf32>
    %cst = arith.constant dense<0.000000e+00> : vector<2x1280xf32>
    %1 = vector.multi_reduction <add>, %0, %cst [2] : vector<2x1280x16xf32> to vector<2x1280xf32>
    %c0_2 = arith.constant 0 : index
    %c0_3 = arith.constant 0 : index
    %2 = vector.load %arg2[%c0_2, %c0_3] : memref<1280x128xf32, #tpu.memory_space<vmem>>, vector<1280x128xf32>
    %cst_4 = arith.constant dense<0.000000e+00> : vector<2x128xf32>
    %3 = tpu.matmul %1, %2, %cst_4 {dimension_numbers = #tpu.dot_dimension_numbers<[1], [0], [0], [1], [0, 0, 1, 1], [], []>} : vector<2x1280xf32>, vector<1280x128xf32>, vector<2x128xf32> -> vector<2x128xf32>
    %cst_5 = arith.constant 6.250000e-02 : f32
    %4 = vector.broadcast %cst_5 : f32 to vector<2x128xf32>
    %5 = arith.mulf %3, %4 : vector<2x128xf32>
    %c0_6 = arith.constant 0 : index
    %c0_7 = arith.constant 0 : index
    %6 = vector.load %arg3[%c0_6, %c0_7] : memref<1x128xf32, #tpu.memory_space<vmem>>, vector<1x128xf32>
    %7 = vector.broadcast %6 : vector<1x128xf32> to vector<2x128xf32>
    %8 = arith.addf %5, %7 : vector<2x128xf32>
    %cst_8 = arith.constant 0.000000e+00 : f32
    %9 = vector.broadcast %cst_8 : f32 to vector<2x128xf32>
    %10 = arith.maximumf %8, %9 : vector<2x128xf32>
    %c0_9 = arith.constant 0 : index
    %c0_10 = arith.constant 0 : index
    %11 = vector.load %arg4[%c0_9, %c0_10] : memref<128x128xf32, #tpu.memory_space<vmem>>, vector<128x128xf32>
    %cst_11 = arith.constant dense<0.000000e+00> : vector<2x128xf32>
    %12 = tpu.matmul %10, %11, %cst_11 {dimension_numbers = #tpu.dot_dimension_numbers<[1], [0], [0], [1], [0, 0, 1, 1], [], []>} : vector<2x128xf32>, vector<128x128xf32>, vector<2x128xf32> -> vector<2x128xf32>
    %c0_12 = arith.constant 0 : index
    %c0_13 = arith.constant 0 : index
    %13 = vector.load %arg5[%c0_12, %c0_13] : memref<1x128xf32, #tpu.memory_space<vmem>>, vector<1x128xf32>
    %14 = vector.broadcast %13 : vector<1x128xf32> to vector<2x128xf32>
    %15 = arith.addf %12, %14 : vector<2x128xf32>
    %c0_14 = arith.constant 0 : index
    %c0_15 = arith.constant 0 : index
    %16 = vector.load %arg6[%c0_14, %c0_15] : memref<2x128xf32, #tpu.memory_space<vmem>>, vector<2x128xf32>
    tpu.vector_store %arg6[%c0_14, %c0_15], %15 {strides = array<i32>} : memref<2x128xf32, #tpu.memory_space<vmem>>, vector<2x128xf32>,
    return
  }
  func.func @transform_0(%arg0: i32) -> (i32, i32, i32) {
    %c0_i32 = arith.constant 0 : i32
    %c0_i32_0 = arith.constant 0 : i32
    %c0_i32_1 = arith.constant 0 : i32
    return %arg0, %c0_i32, %c0_i32_0 : i32, i32, i32
  }
  func.func @transform_1(%arg0: i32) -> (i32, i32) {
    %c0_i32 = arith.constant 0 : i32
    %c0_i32_0 = arith.constant 0 : i32
    %c0_i32_1 = arith.constant 0 : i32
    return %c0_i32, %c0_i32_0 : i32, i32
  }
  func.func @transform_2(%arg0: i32) -> (i32, i32) {
    %c0_i32 = arith.constant 0 : i32
    %c0_i32_0 = arith.constant 0 : i32
    %c0_i32_1 = arith.constant 0 : i32
    return %c0_i32, %c0_i32_0 : i32, i32
  }
  func.func @transform_3(%arg0: i32) -> (i32, i32) {
    %c0_i32 = arith.constant 0 : i32
    %c0_i32_0 = arith.constant 0 : i32
    %c0_i32_1 = arith.constant 0 : i32
    return %c0_i32, %c0_i32_0 : i32, i32
  }
  func.func @transform_4(%arg0: i32) -> (i32, i32) {
    %c0_i32 = arith.constant 0 : i32
    %c0_i32_0 = arith.constant 0 : i32
    %c0_i32_1 = arith.constant 0 : i32
    return %c0_i32, %c0_i32_0 : i32, i32
  }
  func.func @transform_5(%arg0: i32) -> (i32, i32) {
    %c0_i32 = arith.constant 0 : i32
    %c0_i32_0 = arith.constant 0 : i32
    return %arg0, %c0_i32 : i32, i32
  }
}

</mosaic_0001>

<llo_original>
// kernel: tpu_custom_call.1
$region0: #{tpu_custom_call.1}
  #allocation0 [shape = 'u32[]', space=smem, size = 0x4, offset = 0x4, fixed_abs, tag = 'smem constant byte address 0x4 - core index']
  #allocation1 [shape = 'u32[144,128]{1,0:T(1,128)}', space=vmem, size = 0x12000, scoped, tag = 'internal scratch']
  %s0 = inlined_call_operand.vmem [shape: f32[2,1280,16], index: 0, kind: input, shape index: {}]
  %s1 = inlined_call_operand.vmem [shape: f32[1280,128], index: 1, kind: input, shape index: {}]
  %s2 = inlined_call_operand.vmem [shape: f32[1,128], index: 2, kind: input, shape index: {}]
  %s3 = inlined_call_operand.vmem [shape: f32[128,128], index: 3, kind: input, shape index: {}]
  %s4 = inlined_call_operand.vmem [shape: f32[1,128], index: 4, kind: input, shape index: {}]
  %s5 = inlined_call_operand.hbm [shape: f32[2,128], index: 5, kind: output, shape index: {}]
  %s6 = sld [smem:[#allocation0]]
  $region30: #{tpu_custom_call.1} parent=0
    _
  %s8 = ssub.s32 1, %s6
  %s9 = scalar_select 0, %s8, %s6
  $region1: #{tpu_custom_call.1} parent=0
    #allocation2 [shape = 'u8[1024]{0}', space=vmem, size = 0x400, scoped, tag = 'output window, operand 0, single buffered']
    #allocation3 [shape = 's32[1]{0}', space=sflag, size = 0x4, scoped, tag = 'scoped memory for tpu_custom_call.1']
    %10 = vsyncpa [#allocation3], 0
    // Predicated region
    $region2: #{tpu_custom_call.1} parent=1 // pred_check
      _
    $region3: #{tpu_custom_call.1} parent=1 // pred_check_branch
      %12 = sbr.rel (0) target = $region5
    $region4: #{tpu_custom_call.1} parent=1 // pred_region
      _
    $region5: #{tpu_custom_call.1} parent=1 // pred_fallthru
      _
    // Predicated region
    $region6: #{tpu_custom_call.1} parent=1 // pred_check
      _
    $region7: #{tpu_custom_call.1} parent=1 // pred_check_branch
      %14 = sbr.rel (0) target = $region9
    $region8: #{tpu_custom_call.1} parent=1 // pred_region
      _
    $region9: #{tpu_custom_call.1} parent=1 // pred_fallthru
      _
    // Predicated region
    $region10: #{tpu_custom_call.1} parent=1 // pred_check
      _
    $region11: #{tpu_custom_call.1} parent=1 // pred_check_branch
      %16 = sbr.rel (0) target = $region13
    $region12: #{tpu_custom_call.1} parent=1 // pred_region
      _
    $region13: #{tpu_custom_call.1} parent=1 // pred_fallthru
      _
    // Predicated region
    $region14: #{tpu_custom_call.1} parent=1 // pred_check
      _
    $region15: #{tpu_custom_call.1} parent=1 // pred_check_branch
      %18 = sbr.rel (0) target = $region17
    $region16: #{tpu_custom_call.1} parent=1 // pred_region
      _
    $region17: #{tpu_custom_call.1} parent=1 // pred_fallthru
      _
    // Predicated region
    $region18: #{tpu_custom_call.1} parent=1 // pred_check
      _
    $region19: #{tpu_custom_call.1} parent=1 // pred_check_branch
      %20 = sbr.rel (0) target = $region21
    $region20: #{tpu_custom_call.1} parent=1 // pred_region
      _
    $region21: #{tpu_custom_call.1} parent=1 // pred_fallthru
      _
    %v21 = vld [vmem:[%s0] sm:$0xff]
    %v22 = vld [vmem:[%s0 + $0x8] sm:$0xff]
    %v23 = vld [vmem:[%s0 + $0x10] sm:$0xff]
    %v24 = vld [vmem:[%s0 + $0x18] sm:$0xff]
    %v25 = vld [vmem:[%s0 + $0x20] sm:$0xff]
    %v26 = vld [vmem:[%s0 + $0x28] sm:$0xff]
    %v27 = vld [vmem:[%s0 + $0x30] sm:$0xff]
    %v28 = vld [vmem:[%s0 + $0x38] sm:$0xff]
    %v29 = vld [vmem:[%s0 + $0x40] sm:$0xff]
    %v30 = vld [vmem:[%s0 + $0x48] sm:$0xff]
    %v31 = vld [vmem:[%s0 + $0x50] sm:$0xff]
    %v32 = vld [vmem:[%s0 + $0x58] sm:$0xff]
    %v33 = vld [vmem:[%s0 + $0x60] sm:$0xff]
    %v34 = vld [vmem:[%s0 + $0x68] sm:$0xff]
    %v35 = vld [vmem:[%s0 + $0x70] sm:$0xff]
    %v36 = vld [vmem:[%s0 + $0x78] sm:$0xff]
    %v37 = vld [vmem:[%s0 + $0x80] sm:$0xff]
    %v38 = vld [vmem:[%s0 + $0x88] sm:$0xff]
    %v39 = vld [vmem:[%s0 + $0x90] sm:$0xff]
    %v40 = vld [vmem:[%s0 + $0x98] sm:$0xff]
    %v41 = vld [vmem:[%s0 + $0xa0] sm:$0xff]
    %v42 = vld [vmem:[%s0 + $0xa8] sm:$0xff]
    %v43 = vld [vmem:[%s0 + $0xb0] sm:$0xff]
    %v44 = vld [vmem:[%s0 + $0xb8] sm:$0xff]
    %v45 = vld [vmem:[%s0 + $0xc0] sm:$0xff]
    %v46 = vld [vmem:[%s0 + $0xc8] sm:$0xff]
    %v47 = vld [vmem:[%s0 + $0xd0] sm:$0xff]
    %v48 = vld [vmem:[%s0 + $0xd8] sm:$0xff]
    %v49 = vld [vmem:[%s0 + $0xe0] sm:$0xff]
    %v50 = vld [vmem:[%s0 + $0xe8] sm:$0xff]
    %v51 = vld [vmem:[%s0 + $0xf0] sm:$0xff]
    %v52 = vld [vmem:[%s0 + $0xf8] sm:$0xff]
    %v53 = vld [vmem:[%s0 + $0x100] sm:$0xff]
    %v54 = vld [vmem:[%s0 + $0x108] sm:$0xff]
    %v55 = vld [vmem:[%s0 + $0x110] sm:$0xff]
    %v56 = vld [vmem:[%s0 + $0x118] sm:$0xff]
    %v57 = vld [vmem:[%s0 + $0x120] sm:$0xff]
    %v58 = vld [vmem:[%s0 + $0x128] sm:$0xff]
    %v59 = vld [vmem:[%s0 + $0x130] sm:$0xff]
    %v60 = vld [vmem:[%s0 + $0x138] sm:$0xff]
    %v61 = vld [vmem:[%s0 + $0x140] sm:$0xff]
    %v62 = vld [vmem:[%s0 + $0x148] sm:$0xff]
    %v63 = vld [vmem:[%s0 + $0x150] sm:$0xff]
    %v64 = vld [vmem:[%s0 + $0x158] sm:$0xff]
    %v65 = vld [vmem:[%s0 + $0x160] sm:$0xff]
    %v66 = vld [vmem:[%s0 + $0x168] sm:$0xff]
    %v67 = vld [vmem:[%s0 + $0x170] sm:$0xff]
    %v68 = vld [vmem:[%s0 + $0x178] sm:$0xff]
    %v69 = vld [vmem:[%s0 + $0x180] sm:$0xff]
    %v70 = vld [vmem:[%s0 + $0x188] sm:$0xff]
    %v71 = vld [vmem:[%s0 + $0x190] sm:$0xff]
    %v72 = vld [vmem:[%s0 + $0x198] sm:$0xff]
    %v73 = vld [vmem:[%s0 + $0x1a0] sm:$0xff]
    %v74 = vld [vmem:[%s0 + $0x1a8] sm:$0xff]
    %v75 = vld [vmem:[%s0 + $0x1b0] sm:$0xff]
    %v76 = vld [vmem:[%s0 + $0x1b8] sm:$0xff]
    %v77 = vld [vmem:[%s0 + $0x1c0] sm:$0xff]
    %v78 = vld [vmem:[%s0 + $0x1c8] sm:$0xff]
    %v79 = vld [vmem:[%s0 + $0x1d0] sm:$0xff]
    %v80 = vld [vmem:[%s0 + $0x1d8] sm:$0xff]
    %v81 = vld [vmem:[%s0 + $0x1e0] sm:$0xff]
    %v82 = vld [vmem:[%s0 + $0x1e8] sm:$0xff]
    %v83 = vld [vmem:[%s0 + $0x1f0] sm:$0xff]
    %v84 = vld [vmem:[%s0 + $0x1f8] sm:$0xff]
    %v85 = vld [vmem:[%s0 + $0x200] sm:$0xff]
    %v86 = vld [vmem:[%s0 + $0x208] sm:$0xff]
    %v87 = vld [vmem:[%s0 + $0x210] sm:$0xff]
    %v88 = vld [vmem:[%s0 + $0x218] sm:$0xff]
    %v89 = vld [vmem:[%s0 + $0x220] sm:$0xff]
    %v90 = vld [vmem:[%s0 + $0x228] sm:$0xff]
    %v91 = vld [vmem:[%s0 + $0x230] sm:$0xff]
    %v92 = vld [vmem:[%s0 + $0x238] sm:$0xff]
    %v93 = vld [vmem:[%s0 + $0x240] sm:$0xff]
    %v94 = vld [vmem:[%s0 + $0x248] sm:$0xff]
    %v95 = vld [vmem:[%s0 + $0x250] sm:$0xff]
    %v96 = vld [vmem:[%s0 + $0x258] sm:$0xff]
    %v97 = vld [vmem:[%s0 + $0x260] sm:$0xff]
    %v98 = vld [vmem:[%s0 + $0x268] sm:$0xff]
    %v99 = vld [vmem:[%s0 + $0x270] sm:$0xff]
    %v100 = vld [vmem:[%s0 + $0x278] sm:$0xff]
    %v101 = vld [vmem:[%s0 + $0x280] sm:$0xff]
    %v102 = vld [vmem:[%s0 + $0x288] sm:$0xff]
    %v103 = vld [vmem:[%s0 + $0x290] sm:$0xff]
    %v104 = vld [vmem:[%s0 + $0x298] sm:$0xff]
    %v105 = vld [vmem:[%s0 + $0x2a0] sm:$0xff]
    %v106 = vld [vmem:[%s0 + $0x2a8] sm:$0xff]
    %v107 = vld [vmem:[%s0 + $0x2b0] sm:$0xff]
    %v108 = vld [vmem:[%s0 + $0x2b8] sm:$0xff]
    %v109 = vld [vmem:[%s0 + $0x2c0] sm:$0xff]
    %v110 = vld [vmem:[%s0 + $0x2c8] sm:$0xff]
    %v111 = vld [vmem:[%s0 + $0x2d0] sm:$0xff]
    %v112 = vld [vmem:[%s0 + $0x2d8] sm:$0xff]
    %v113 = vld [vmem:[%s0 + $0x2e0] sm:$0xff]
    %v114 = vld [vmem:[%s0 + $0x2e8] sm:$0xff]
    %v115 = vld [vmem:[%s0 + $0x2f0] sm:$0xff]
    %v116 = vld [vmem:[%s0 + $0x2f8] sm:$0xff]
    %v117 = vld [vmem:[%s0 + $0x300] sm:$0xff]
    %v118 = vld [vmem:[%s0 + $0x308] sm:$0xff]
    %v119 = vld [vmem:[%s0 + $0x310] sm:$0xff]
    %v120 = vld [vmem:[%s0 + $0x318] sm:$0xff]
    %v121 = vld [vmem:[%s0 + $0x320] sm:$0xff]
    %v122 = vld [vmem:[%s0 + $0x328] sm:$0xff]
    %v123 = vld [vmem:[%s0 + $0x330] sm:$0xff]
    %v124 = vld [vmem:[%s0 + $0x338] sm:$0xff]
    %v125 = vld [vmem:[%s0 + $0x340] sm:$0xff]
    %v126 = vld [vmem:[%s0 + $0x348] sm:$0xff]
    %v127 = vld [vmem:[%s0 + $0x350] sm:$0xff]
    %v128 = vld [vmem:[%s0 + $0x358] sm:$0xff]
    %v129 = vld [vmem:[%s0 + $0x360] sm:$0xff]
    %v130 = vld [vmem:[%s0 + $0x368] sm:$0xff]
    %v131 = vld [vmem:[%s0 + $0x370] sm:$0xff]
    %v132 = vld [vmem:[%s0 + $0x378] sm:$0xff]
    %v133 = vld [vmem:[%s0 + $0x380] sm:$0xff]
    %v134 = vld [vmem:[%s0 + $0x388] sm:$0xff]
    %v135 = vld [vmem:[%s0 + $0x390] sm:$0xff]
    %v136 = vld [vmem:[%s0 + $0x398] sm:$0xff]
    %v137 = vld [vmem:[%s0 + $0x3a0] sm:$0xff]
    %v138 = vld [vmem:[%s0 + $0x3a8] sm:$0xff]
    %v139 = vld [vmem:[%s0 + $0x3b0] sm:$0xff]
    %v140 = vld [vmem:[%s0 + $0x3b8] sm:$0xff]
    %v141 = vld [vmem:[%s0 + $0x3c0] sm:$0xff]
    %v142 = vld [vmem:[%s0 + $0x3c8] sm:$0xff]
    %v143 = vld [vmem:[%s0 + $0x3d0] sm:$0xff]
    %v144 = vld [vmem:[%s0 + $0x3d8] sm:$0xff]
    %v145 = vld [vmem:[%s0 + $0x3e0] sm:$0xff]
    %v146 = vld [vmem:[%s0 + $0x3e8] sm:$0xff]
    %v147 = vld [vmem:[%s0 + $0x3f0] sm:$0xff]
    %v148 = vld [vmem:[%s0 + $0x3f8] sm:$0xff]
    %v149 = vld [vmem:[%s0 + $0x400] sm:$0xff]
    %v150 = vld [vmem:[%s0 + $0x408] sm:$0xff]
    %v151 = vld [vmem:[%s0 + $0x410] sm:$0xff]
    %v152 = vld [vmem:[%s0 + $0x418] sm:$0xff]
    %v153 = vld [vmem:[%s0 + $0x420] sm:$0xff]
    %v154 = vld [vmem:[%s0 + $0x428] sm:$0xff]
    %v155 = vld [vmem:[%s0 + $0x430] sm:$0xff]
    %v156 = vld [vmem:[%s0 + $0x438] sm:$0xff]
    %v157 = vld [vmem:[%s0 + $0x440] sm:$0xff]
    %v158 = vld [vmem:[%s0 + $0x448] sm:$0xff]
    %v159 = vld [vmem:[%s0 + $0x450] sm:$0xff]
    %v160 = vld [vmem:[%s0 + $0x458] sm:$0xff]
    %v161 = vld [vmem:[%s0 + $0x460] sm:$0xff]
    %v162 = vld [vmem:[%s0 + $0x468] sm:$0xff]
    %v163 = vld [vmem:[%s0 + $0x470] sm:$0xff]
    %v164 = vld [vmem:[%s0 + $0x478] sm:$0xff]
    %v165 = vld [vmem:[%s0 + $0x480] sm:$0xff]
    %v166 = vld [vmem:[%s0 + $0x488] sm:$0xff]
    %v167 = vld [vmem:[%s0 + $0x490] sm:$0xff]
    %v168 = vld [vmem:[%s0 + $0x498] sm:$0xff]
    %v169 = vld [vmem:[%s0 + $0x4a0] sm:$0xff]
    %v170 = vld [vmem:[%s0 + $0x4a8] sm:$0xff]
    %v171 = vld [vmem:[%s0 + $0x4b0] sm:$0xff]
    %v172 = vld [vmem:[%s0 + $0x4b8] sm:$0xff]
    %v173 = vld [vmem:[%s0 + $0x4c0] sm:$0xff]
    %v174 = vld [vmem:[%s0 + $0x4c8] sm:$0xff]
    %v175 = vld [vmem:[%s0 + $0x4d0] sm:$0xff]
    %v176 = vld [vmem:[%s0 + $0x4d8] sm:$0xff]
    %v177 = vld [vmem:[%s0 + $0x4e0] sm:$0xff]
    %v178 = vld [vmem:[%s0 + $0x4e8] sm:$0xff]
    %v179 = vld [vmem:[%s0 + $0x4f0] sm:$0xff]
    %v180 = vld [vmem:[%s0 + $0x4f8] sm:$0xff]
    %v181 = vld [vmem:[%s0 + $0x500] sm:$0xff]
    %v182 = vld [vmem:[%s0 + $0x508] sm:$0xff]
    %v183 = vld [vmem:[%s0 + $0x510] sm:$0xff]
    %v184 = vld [vmem:[%s0 + $0x518] sm:$0xff]
    %v185 = vld [vmem:[%s0 + $0x520] sm:$0xff]
    %v186 = vld [vmem:[%s0 + $0x528] sm:$0xff]
    %v187 = vld [vmem:[%s0 + $0x530] sm:$0xff]
    %v188 = vld [vmem:[%s0 + $0x538] sm:$0xff]
    %v189 = vld [vmem:[%s0 + $0x540] sm:$0xff]
    %v190 = vld [vmem:[%s0 + $0x548] sm:$0xff]
    %v191 = vld [vmem:[%s0 + $0x550] sm:$0xff]
    %v192 = vld [vmem:[%s0 + $0x558] sm:$0xff]
    %v193 = vld [vmem:[%s0 + $0x560] sm:$0xff]
    %v194 = vld [vmem:[%s0 + $0x568] sm:$0xff]
    %v195 = vld [vmem:[%s0 + $0x570] sm:$0xff]
    %v196 = vld [vmem:[%s0 + $0x578] sm:$0xff]
    %v197 = vld [vmem:[%s0 + $0x580] sm:$0xff]
    %v198 = vld [vmem:[%s0 + $0x588] sm:$0xff]
    %v199 = vld [vmem:[%s0 + $0x590] sm:$0xff]
    %v200 = vld [vmem:[%s0 + $0x598] sm:$0xff]
    %v201 = vld [vmem:[%s0 + $0x5a0] sm:$0xff]
    %v202 = vld [vmem:[%s0 + $0x5a8] sm:$0xff]
    %v203 = vld [vmem:[%s0 + $0x5b0] sm:$0xff]
    %v204 = vld [vmem:[%s0 + $0x5b8] sm:$0xff]
    %v205 = vld [vmem:[%s0 + $0x5c0] sm:$0xff]
    %v206 = vld [vmem:[%s0 + $0x5c8] sm:$0xff]
    %v207 = vld [vmem:[%s0 + $0x5d0] sm:$0xff]
    %v208 = vld [vmem:[%s0 + $0x5d8] sm:$0xff]
    %v209 = vld [vmem:[%s0 + $0x5e0] sm:$0xff]
    %v210 = vld [vmem:[%s0 + $0x5e8] sm:$0xff]
    %v211 = vld [vmem:[%s0 + $0x5f0] sm:$0xff]
    %v212 = vld [vmem:[%s0 + $0x5f8] sm:$0xff]
    %v213 = vld [vmem:[%s0 + $0x600] sm:$0xff]
    %v214 = vld [vmem:[%s0 + $0x608] sm:$0xff]
    %v215 = vld [vmem:[%s0 + $0x610] sm:$0xff]
    %v216 = vld [vmem:[%s0 + $0x618] sm:$0xff]
    %v217 = vld [vmem:[%s0 + $0x620] sm:$0xff]
    %v218 = vld [vmem:[%s0 + $0x628] sm:$0xff]
    %v219 = vld [vmem:[%s0 + $0x630] sm:$0xff]
    %v220 = vld [vmem:[%s0 + $0x638] sm:$0xff]
    %v221 = vld [vmem:[%s0 + $0x640] sm:$0xff]
    %v222 = vld [vmem:[%s0 + $0x648] sm:$0xff]
    %v223 = vld [vmem:[%s0 + $0x650] sm:$0xff]
    %v224 = vld [vmem:[%s0 + $0x658] sm:$0xff]
    %v225 = vld [vmem:[%s0 + $0x660] sm:$0xff]
    %v226 = vld [vmem:[%s0 + $0x668] sm:$0xff]
    %v227 = vld [vmem:[%s0 + $0x670] sm:$0xff]
    %v228 = vld [vmem:[%s0 + $0x678] sm:$0xff]
    %v229 = vld [vmem:[%s0 + $0x680] sm:$0xff]
    %v230 = vld [vmem:[%s0 + $0x688] sm:$0xff]
    %v231 = vld [vmem:[%s0 + $0x690] sm:$0xff]
    %v232 = vld [vmem:[%s0 + $0x698] sm:$0xff]
    %v233 = vld [vmem:[%s0 + $0x6a0] sm:$0xff]
    %v234 = vld [vmem:[%s0 + $0x6a8] sm:$0xff]
    %v235 = vld [vmem:[%s0 + $0x6b0] sm:$0xff]
    %v236 = vld [vmem:[%s0 + $0x6b8] sm:$0xff]
    %v237 = vld [vmem:[%s0 + $0x6c0] sm:$0xff]
    %v238 = vld [vmem:[%s0 + $0x6c8] sm:$0xff]
    %v239 = vld [vmem:[%s0 + $0x6d0] sm:$0xff]
    %v240 = vld [vmem:[%s0 + $0x6d8] sm:$0xff]
    %v241 = vld [vmem:[%s0 + $0x6e0] sm:$0xff]
    %v242 = vld [vmem:[%s0 + $0x6e8] sm:$0xff]
    %v243 = vld [vmem:[%s0 + $0x6f0] sm:$0xff]
    %v244 = vld [vmem:[%s0 + $0x6f8] sm:$0xff]
    %v245 = vld [vmem:[%s0 + $0x700] sm:$0xff]
    %v246 = vld [vmem:[%s0 + $0x708] sm:$0xff]
    %v247 = vld [vmem:[%s0 + $0x710] sm:$0xff]
    %v248 = vld [vmem:[%s0 + $0x718] sm:$0xff]
    %v249 = vld [vmem:[%s0 + $0x720] sm:$0xff]
    %v250 = vld [vmem:[%s0 + $0x728] sm:$0xff]
    %v251 = vld [vmem:[%s0 + $0x730] sm:$0xff]
    %v252 = vld [vmem:[%s0 + $0x738] sm:$0xff]
    %v253 = vld [vmem:[%s0 + $0x740] sm:$0xff]
    %v254 = vld [vmem:[%s0 + $0x748] sm:$0xff]
    %v255 = vld [vmem:[%s0 + $0x750] sm:$0xff]
    %v256 = vld [vmem:[%s0 + $0x758] sm:$0xff]
    %v257 = vld [vmem:[%s0 + $0x760] sm:$0xff]
    %v258 = vld [vmem:[%s0 + $0x768] sm:$0xff]
    %v259 = vld [vmem:[%s0 + $0x770] sm:$0xff]
    %v260 = vld [vmem:[%s0 + $0x778] sm:$0xff]
    %v261 = vld [vmem:[%s0 + $0x780] sm:$0xff]
    %v262 = vld [vmem:[%s0 + $0x788] sm:$0xff]
    %v263 = vld [vmem:[%s0 + $0x790] sm:$0xff]
    %v264 = vld [vmem:[%s0 + $0x798] sm:$0xff]
    %v265 = vld [vmem:[%s0 + $0x7a0] sm:$0xff]
    %v266 = vld [vmem:[%s0 + $0x7a8] sm:$0xff]
    %v267 = vld [vmem:[%s0 + $0x7b0] sm:$0xff]
    %v268 = vld [vmem:[%s0 + $0x7b8] sm:$0xff]
    %v269 = vld [vmem:[%s0 + $0x7c0] sm:$0xff]
    %v270 = vld [vmem:[%s0 + $0x7c8] sm:$0xff]
    %v271 = vld [vmem:[%s0 + $0x7d0] sm:$0xff]
    %v272 = vld [vmem:[%s0 + $0x7d8] sm:$0xff]
    %v273 = vld [vmem:[%s0 + $0x7e0] sm:$0xff]
    %v274 = vld [vmem:[%s0 + $0x7e8] sm:$0xff]
    %v275 = vld [vmem:[%s0 + $0x7f0] sm:$0xff]
    %v276 = vld [vmem:[%s0 + $0x7f8] sm:$0xff]
    %v277 = vld [vmem:[%s0 + $0x800] sm:$0xff]
    %v278 = vld [vmem:[%s0 + $0x808] sm:$0xff]
    %v279 = vld [vmem:[%s0 + $0x810] sm:$0xff]
    %v280 = vld [vmem:[%s0 + $0x818] sm:$0xff]
    %v281 = vld [vmem:[%s0 + $0x820] sm:$0xff]
    %v282 = vld [vmem:[%s0 + $0x828] sm:$0xff]
    %v283 = vld [vmem:[%s0 + $0x830] sm:$0xff]
    %v284 = vld [vmem:[%s0 + $0x838] sm:$0xff]
    %v285 = vld [vmem:[%s0 + $0x840] sm:$0xff]
    %v286 = vld [vmem:[%s0 + $0x848] sm:$0xff]
    %v287 = vld [vmem:[%s0 + $0x850] sm:$0xff]
    %v288 = vld [vmem:[%s0 + $0x858] sm:$0xff]
    %v289 = vld [vmem:[%s0 + $0x860] sm:$0xff]
    %v290 = vld [vmem:[%s0 + $0x868] sm:$0xff]
    %v291 = vld [vmem:[%s0 + $0x870] sm:$0xff]
    %v292 = vld [vmem:[%s0 + $0x878] sm:$0xff]
    %v293 = vld [vmem:[%s0 + $0x880] sm:$0xff]
    %v294 = vld [vmem:[%s0 + $0x888] sm:$0xff]
    %v295 = vld [vmem:[%s0 + $0x890] sm:$0xff]
    %v296 = vld [vmem:[%s0 + $0x898] sm:$0xff]
    %v297 = vld [vmem:[%s0 + $0x8a0] sm:$0xff]
    %v298 = vld [vmem:[%s0 + $0x8a8] sm:$0xff]
    %v299 = vld [vmem:[%s0 + $0x8b0] sm:$0xff]
    %v300 = vld [vmem:[%s0 + $0x8b8] sm:$0xff]
    %v301 = vld [vmem:[%s0 + $0x8c0] sm:$0xff]
    %v302 = vld [vmem:[%s0 + $0x8c8] sm:$0xff]
    %v303 = vld [vmem:[%s0 + $0x8d0] sm:$0xff]
    %v304 = vld [vmem:[%s0 + $0x8d8] sm:$0xff]
    %v305 = vld [vmem:[%s0 + $0x8e0] sm:$0xff]
    %v306 = vld [vmem:[%s0 + $0x8e8] sm:$0xff]
    %v307 = vld [vmem:[%s0 + $0x8f0] sm:$0xff]
    %v308 = vld [vmem:[%s0 + $0x8f8] sm:$0xff]
    %v309 = vld [vmem:[%s0 + $0x900] sm:$0xff]
    %v310 = vld [vmem:[%s0 + $0x908] sm:$0xff]
    %v311 = vld [vmem:[%s0 + $0x910] sm:$0xff]
    %v312 = vld [vmem:[%s0 + $0x918] sm:$0xff]
    %v313 = vld [vmem:[%s0 + $0x920] sm:$0xff]
    %v314 = vld [vmem:[%s0 + $0x928] sm:$0xff]
    %v315 = vld [vmem:[%s0 + $0x930] sm:$0xff]
    %v316 = vld [vmem:[%s0 + $0x938] sm:$0xff]
    %v317 = vld [vmem:[%s0 + $0x940] sm:$0xff]
    %v318 = vld [vmem:[%s0 + $0x948] sm:$0xff]
    %v319 = vld [vmem:[%s0 + $0x950] sm:$0xff]
    %v320 = vld [vmem:[%s0 + $0x958] sm:$0xff]
    %v321 = vld [vmem:[%s0 + $0x960] sm:$0xff]
    %v322 = vld [vmem:[%s0 + $0x968] sm:$0xff]
    %v323 = vld [vmem:[%s0 + $0x970] sm:$0xff]
    %v324 = vld [vmem:[%s0 + $0x978] sm:$0xff]
    %v325 = vld [vmem:[%s0 + $0x980] sm:$0xff]
    %v326 = vld [vmem:[%s0 + $0x988] sm:$0xff]
    %v327 = vld [vmem:[%s0 + $0x990] sm:$0xff]
    %v328 = vld [vmem:[%s0 + $0x998] sm:$0xff]
    %v329 = vld [vmem:[%s0 + $0x9a0] sm:$0xff]
    %v330 = vld [vmem:[%s0 + $0x9a8] sm:$0xff]
    %v331 = vld [vmem:[%s0 + $0x9b0] sm:$0xff]
    %v332 = vld [vmem:[%s0 + $0x9b8] sm:$0xff]
    %v333 = vld [vmem:[%s0 + $0x9c0] sm:$0xff]
    %v334 = vld [vmem:[%s0 + $0x9c8] sm:$0xff]
    %v335 = vld [vmem:[%s0 + $0x9d0] sm:$0xff]
    %v336 = vld [vmem:[%s0 + $0x9d8] sm:$0xff]
    %v337 = vld [vmem:[%s0 + $0x9e0] sm:$0xff]
    %v338 = vld [vmem:[%s0 + $0x9e8] sm:$0xff]
    %v339 = vld [vmem:[%s0 + $0x9f0] sm:$0xff]
    %v340 = vld [vmem:[%s0 + $0x9f8] sm:$0xff]
    %vm341 = vcmask 130048
    %v342 = vsel %vm341, %v21, 0.0
    %343 = vadd.xlane.f32.xlu0 %v342
    %v344 = vpop.xlane.xlu0 %343
    %v345 = vsel %vm341, %v22, 0.0
    %346 = vadd.xlane.f32.xlu0 %v345
    %v347 = vpop.xlane.xlu0 %346
    %v348 = vsel %vm341, %v23, 0.0
    %349 = vadd.xlane.f32.xlu0 %v348
    %v350 = vpop.xlane.xlu0 %349
    %v351 = vsel %vm341, %v24, 0.0
    %352 = vadd.xlane.f32.xlu0 %v351
    %v353 = vpop.xlane.xlu0 %352
    %v354 = vsel %vm341, %v25, 0.0
    %355 = vadd.xlane.f32.xlu0 %v354
    %v356 = vpop.xlane.xlu0 %355
    %v357 = vsel %vm341, %v26, 0.0
    %358 = vadd.xlane.f32.xlu0 %v357
    %v359 = vpop.xlane.xlu0 %358
    %v360 = vsel %vm341, %v27, 0.0
    %361 = vadd.xlane.f32.xlu0 %v360
    %v362 = vpop.xlane.xlu0 %361
    %v363 = vsel %vm341, %v28, 0.0
    %364 = vadd.xlane.f32.xlu0 %v363
    %v365 = vpop.xlane.xlu0 %364
    %v366 = vsel %vm341, %v29, 0.0
    %367 = vadd.xlane.f32.xlu0 %v366
    %v368 = vpop.xlane.xlu0 %367
    %v369 = vsel %vm341, %v30, 0.0
    %370 = vadd.xlane.f32.xlu0 %v369
    %v371 = vpop.xlane.xlu0 %370
    %v372 = vsel %vm341, %v31, 0.0
    %373 = vadd.xlane.f32.xlu0 %v372
    %v374 = vpop.xlane.xlu0 %373
    %v375 = vsel %vm341, %v32, 0.0
    %376 = vadd.xlane.f32.xlu0 %v375
    %v377 = vpop.xlane.xlu0 %376
    %v378 = vsel %vm341, %v33, 0.0
    %379 = vadd.xlane.f32.xlu0 %v378
    %v380 = vpop.xlane.xlu0 %379
    %v381 = vsel %vm341, %v34, 0.0
    %382 = vadd.xlane.f32.xlu0 %v381
    %v383 = vpop.xlane.xlu0 %382
    %v384 = vsel %vm341, %v35, 0.0
    %385 = vadd.xlane.f32.xlu0 %v384
    %v386 = vpop.xlane.xlu0 %385
    %v387 = vsel %vm341, %v36, 0.0
    %388 = vadd.xlane.f32.xlu0 %v387
    %v389 = vpop.xlane.xlu0 %388
    %v390 = vsel %vm341, %v37, 0.0
    %391 = vadd.xlane.f32.xlu0 %v390
    %v392 = vpop.xlane.xlu0 %391
    %v393 = vsel %vm341, %v38, 0.0
    %394 = vadd.xlane.f32.xlu0 %v393
    %v395 = vpop.xlane.xlu0 %394
    %v396 = vsel %vm341, %v39, 0.0
    %397 = vadd.xlane.f32.xlu0 %v396
    %v398 = vpop.xlane.xlu0 %397
    %v399 = vsel %vm341, %v40, 0.0
    %400 = vadd.xlane.f32.xlu0 %v399
    %v401 = vpop.xlane.xlu0 %400
    %v402 = vsel %vm341, %v41, 0.0
    %403 = vadd.xlane.f32.xlu0 %v402
    %v404 = vpop.xlane.xlu0 %403
    %v405 = vsel %vm341, %v42, 0.0
    %406 = vadd.xlane.f32.xlu0 %v405
    %v407 = vpop.xlane.xlu0 %406
    %v408 = vsel %vm341, %v43, 0.0
    %409 = vadd.xlane.f32.xlu0 %v408
    %v410 = vpop.xlane.xlu0 %409
    %v411 = vsel %vm341, %v44, 0.0
    %412 = vadd.xlane.f32.xlu0 %v411
    %v413 = vpop.xlane.xlu0 %412
    %v414 = vsel %vm341, %v45, 0.0
    %415 = vadd.xlane.f32.xlu0 %v414
    %v416 = vpop.xlane.xlu0 %415
    %v417 = vsel %vm341, %v46, 0.0
    %418 = vadd.xlane.f32.xlu0 %v417
    %v419 = vpop.xlane.xlu0 %418
    %v420 = vsel %vm341, %v47, 0.0
    %421 = vadd.xlane.f32.xlu0 %v420
    %v422 = vpop.xlane.xlu0 %421
    %v423 = vsel %vm341, %v48, 0.0
    %424 = vadd.xlane.f32.xlu0 %v423
    %v425 = vpop.xlane.xlu0 %424
    %v426 = vsel %vm341, %v49, 0.0
    %427 = vadd.xlane.f32.xlu0 %v426
    %v428 = vpop.xlane.xlu0 %427
    %v429 = vsel %vm341, %v50, 0.0
    %430 = vadd.xlane.f32.xlu0 %v429
    %v431 = vpop.xlane.xlu0 %430
    %v432 = vsel %vm341, %v51, 0.0
    %433 = vadd.xlane.f32.xlu0 %v432
    %v434 = vpop.xlane.xlu0 %433
    %v435 = vsel %vm341, %v52, 0.0
    %436 = vadd.xlane.f32.xlu0 %v435
    %v437 = vpop.xlane.xlu0 %436
    %v438 = vsel %vm341, %v53, 0.0
    %439 = vadd.xlane.f32.xlu0 %v438
    %v440 = vpop.xlane.xlu0 %439
    %v441 = vsel %vm341, %v54, 0.0
    %442 = vadd.xlane.f32.xlu0 %v441
    %v443 = vpop.xlane.xlu0 %442
    %v444 = vsel %vm341, %v55, 0.0
    %445 = vadd.xlane.f32.xlu0 %v444
    %v446 = vpop.xlane.xlu0 %445
    %v447 = vsel %vm341, %v56, 0.0
    %448 = vadd.xlane.f32.xlu0 %v447
    %v449 = vpop.xlane.xlu0 %448
    %v450 = vsel %vm341, %v57, 0.0
    %451 = vadd.xlane.f32.xlu0 %v450
    %v452 = vpop.xlane.xlu0 %451
    %v453 = vsel %vm341, %v58, 0.0
    %454 = vadd.xlane.f32.xlu0 %v453
    %v455 = vpop.xlane.xlu0 %454
    %v456 = vsel %vm341, %v59, 0.0
    %457 = vadd.xlane.f32.xlu0 %v456
    %v458 = vpop.xlane.xlu0 %457
    %v459 = vsel %vm341, %v60, 0.0
    %460 = vadd.xlane.f32.xlu0 %v459
    %v461 = vpop.xlane.xlu0 %460
    %v462 = vsel %vm341, %v61, 0.0
    %463 = vadd.xlane.f32.xlu0 %v462
    %v464 = vpop.xlane.xlu0 %463
    %v465 = vsel %vm341, %v62, 0.0
    %466 = vadd.xlane.f32.xlu0 %v465
    %v467 = vpop.xlane.xlu0 %466
    %v468 = vsel %vm341, %v63, 0.0
    %469 = vadd.xlane.f32.xlu0 %v468
    %v470 = vpop.xlane.xlu0 %469
    %v471 = vsel %vm341, %v64, 0.0
    %472 = vadd.xlane.f32.xlu0 %v471
    %v473 = vpop.xlane.xlu0 %472
    %v474 = vsel %vm341, %v65, 0.0
    %475 = vadd.xlane.f32.xlu0 %v474
    %v476 = vpop.xlane.xlu0 %475
    %v477 = vsel %vm341, %v66, 0.0
    %478 = vadd.xlane.f32.xlu0 %v477
    %v479 = vpop.xlane.xlu0 %478
    %v480 = vsel %vm341, %v67, 0.0
    %481 = vadd.xlane.f32.xlu0 %v480
    %v482 = vpop.xlane.xlu0 %481
    %v483 = vsel %vm341, %v68, 0.0
    %484 = vadd.xlane.f32.xlu0 %v483
    %v485 = vpop.xlane.xlu0 %484
    %v486 = vsel %vm341, %v69, 0.0
    %487 = vadd.xlane.f32.xlu0 %v486
    %v488 = vpop.xlane.xlu0 %487
    %v489 = vsel %vm341, %v70, 0.0
    %490 = vadd.xlane.f32.xlu0 %v489
    %v491 = vpop.xlane.xlu0 %490
    %v492 = vsel %vm341, %v71, 0.0
    %493 = vadd.xlane.f32.xlu0 %v492
    %v494 = vpop.xlane.xlu0 %493
    %v495 = vsel %vm341, %v72, 0.0
    %496 = vadd.xlane.f32.xlu0 %v495
    %v497 = vpop.xlane.xlu0 %496
    %v498 = vsel %vm341, %v73, 0.0
    %499 = vadd.xlane.f32.xlu0 %v498
    %v500 = vpop.xlane.xlu0 %499
    %v501 = vsel %vm341, %v74, 0.0
    %502 = vadd.xlane.f32.xlu0 %v501
    %v503 = vpop.xlane.xlu0 %502
    %v504 = vsel %vm341, %v75, 0.0
    %505 = vadd.xlane.f32.xlu0 %v504
    %v506 = vpop.xlane.xlu0 %505
    %v507 = vsel %vm341, %v76, 0.0
    %508 = vadd.xlane.f32.xlu0 %v507
    %v509 = vpop.xlane.xlu0 %508
    %v510 = vsel %vm341, %v77, 0.0
    %511 = vadd.xlane.f32.xlu0 %v510
    %v512 = vpop.xlane.xlu0 %511
    %v513 = vsel %vm341, %v78, 0.0
    %514 = vadd.xlane.f32.xlu0 %v513
    %v515 = vpop.xlane.xlu0 %514
    %v516 = vsel %vm341, %v79, 0.0
    %517 = vadd.xlane.f32.xlu0 %v516
    %v518 = vpop.xlane.xlu0 %517
    %v519 = vsel %vm341, %v80, 0.0
    %520 = vadd.xlane.f32.xlu0 %v519
    %v521 = vpop.xlane.xlu0 %520
    %v522 = vsel %vm341, %v81, 0.0
    %523 = vadd.xlane.f32.xlu0 %v522
    %v524 = vpop.xlane.xlu0 %523
    %v525 = vsel %vm341, %v82, 0.0
    %526 = vadd.xlane.f32.xlu0 %v525
    %v527 = vpop.xlane.xlu0 %526
    %v528 = vsel %vm341, %v83, 0.0
    %529 = vadd.xlane.f32.xlu0 %v528
    %v530 = vpop.xlane.xlu0 %529
    %v531 = vsel %vm341, %v84, 0.0
    %532 = vadd.xlane.f32.xlu0 %v531
    %v533 = vpop.xlane.xlu0 %532
    %v534 = vsel %vm341, %v85, 0.0
    %535 = vadd.xlane.f32.xlu0 %v534
    %v536 = vpop.xlane.xlu0 %535
    %v537 = vsel %vm341, %v86, 0.0
    %538 = vadd.xlane.f32.xlu0 %v537
    %v539 = vpop.xlane.xlu0 %538
    %v540 = vsel %vm341, %v87, 0.0
    %541 = vadd.xlane.f32.xlu0 %v540
    %v542 = vpop.xlane.xlu0 %541
    %v543 = vsel %vm341, %v88, 0.0
    %544 = vadd.xlane.f32.xlu0 %v543
    %v545 = vpop.xlane.xlu0 %544
    %v546 = vsel %vm341, %v89, 0.0
    %547 = vadd.xlane.f32.xlu0 %v546
    %v548 = vpop.xlane.xlu0 %547
    %v549 = vsel %vm341, %v90, 0.0
    %550 = vadd.xlane.f32.xlu0 %v549
    %v551 = vpop.xlane.xlu0 %550
    %v552 = vsel %vm341, %v91, 0.0
    %553 = vadd.xlane.f32.xlu0 %v552
    %v554 = vpop.xlane.xlu0 %553
    %v555 = vsel %vm341, %v92, 0.0
    %556 = vadd.xlane.f32.xlu0 %v555
    %v557 = vpop.xlane.xlu0 %556
    %v558 = vsel %vm341, %v93, 0.0
    %559 = vadd.xlane.f32.xlu0 %v558
    %v560 = vpop.xlane.xlu0 %559
    %v561 = vsel %vm341, %v94, 0.0
    %562 = vadd.xlane.f32.xlu0 %v561
    %v563 = vpop.xlane.xlu0 %562
    %v564 = vsel %vm341, %v95, 0.0
    %565 = vadd.xlane.f32.xlu0 %v564
    %v566 = vpop.xlane.xlu0 %565
    %v567 = vsel %vm341, %v96, 0.0
    %568 = vadd.xlane.f32.xlu0 %v567
    %v569 = vpop.xlane.xlu0 %568
    %v570 = vsel %vm341, %v97, 0.0
    %571 = vadd.xlane.f32.xlu0 %v570
    %v572 = vpop.xlane.xlu0 %571
    %v573 = vsel %vm341, %v98, 0.0
    %574 = vadd.xlane.f32.xlu0 %v573
    %v575 = vpop.xlane.xlu0 %574
    %v576 = vsel %vm341, %v99, 0.0
    %577 = vadd.xlane.f32.xlu0 %v576
    %v578 = vpop.xlane.xlu0 %577
    %v579 = vsel %vm341, %v100, 0.0
    %580 = vadd.xlane.f32.xlu0 %v579
    %v581 = vpop.xlane.xlu0 %580
    %v582 = vsel %vm341, %v101, 0.0
    %583 = vadd.xlane.f32.xlu0 %v582
    %v584 = vpop.xlane.xlu0 %583
    %v585 = vsel %vm341, %v102, 0.0
    %586 = vadd.xlane.f32.xlu0 %v585
    %v587 = vpop.xlane.xlu0 %586
    %v588 = vsel %vm341, %v103, 0.0
    %589 = vadd.xlane.f32.xlu0 %v588
    %v590 = vpop.xlane.xlu0 %589
    %v591 = vsel %vm341, %v104, 0.0
    %592 = vadd.xlane.f32.xlu0 %v591
    %v593 = vpop.xlane.xlu0 %592
    %v594 = vsel %vm341, %v105, 0.0
    %595 = vadd.xlane.f32.xlu0 %v594
    %v596 = vpop.xlane.xlu0 %595
    %v597 = vsel %vm341, %v106, 0.0
    %598 = vadd.xlane.f32.xlu0 %v597
    %v599 = vpop.xlane.xlu0 %598
    %v600 = vsel %vm341, %v107, 0.0
    %601 = vadd.xlane.f32.xlu0 %v600
    %v602 = vpop.xlane.xlu0 %601
    %v603 = vsel %vm341, %v108, 0.0
    %604 = vadd.xlane.f32.xlu0 %v603
    %v605 = vpop.xlane.xlu0 %604
    %v606 = vsel %vm341, %v109, 0.0
    %607 = vadd.xlane.f32.xlu0 %v606
    %v608 = vpop.xlane.xlu0 %607
    %v609 = vsel %vm341, %v110, 0.0
    %610 = vadd.xlane.f32.xlu0 %v609
    %v611 = vpop.xlane.xlu0 %610
    %v612 = vsel %vm341, %v111, 0.0
    %613 = vadd.xlane.f32.xlu0 %v612
    %v614 = vpop.xlane.xlu0 %613
    %v615 = vsel %vm341, %v112, 0.0
    %616 = vadd.xlane.f32.xlu0 %v615
    %v617 = vpop.xlane.xlu0 %616
    %v618 = vsel %vm341, %v113, 0.0
    %619 = vadd.xlane.f32.xlu0 %v618
    %v620 = vpop.xlane.xlu0 %619
    %v621 = vsel %vm341, %v114, 0.0
    %622 = vadd.xlane.f32.xlu0 %v621
    %v623 = vpop.xlane.xlu0 %622
    %v624 = vsel %vm341, %v115, 0.0
    %625 = vadd.xlane.f32.xlu0 %v624
    %v626 = vpop.xlane.xlu0 %625
    %v627 = vsel %vm341, %v116, 0.0
    %628 = vadd.xlane.f32.xlu0 %v627
    %v629 = vpop.xlane.xlu0 %628
    %v630 = vsel %vm341, %v117, 0.0
    %631 = vadd.xlane.f32.xlu0 %v630
    %v632 = vpop.xlane.xlu0 %631
    %v633 = vsel %vm341, %v118, 0.0
    %634 = vadd.xlane.f32.xlu0 %v633
    %v635 = vpop.xlane.xlu0 %634
    %v636 = vsel %vm341, %v119, 0.0
    %637 = vadd.xlane.f32.xlu0 %v636
    %v638 = vpop.xlane.xlu0 %637
    %v639 = vsel %vm341, %v120, 0.0
    %640 = vadd.xlane.f32.xlu0 %v639
    %v641 = vpop.xlane.xlu0 %640
    %v642 = vsel %vm341, %v121, 0.0
    %643 = vadd.xlane.f32.xlu0 %v642
    %v644 = vpop.xlane.xlu0 %643
    %v645 = vsel %vm341, %v122, 0.0
    %646 = vadd.xlane.f32.xlu0 %v645
    %v647 = vpop.xlane.xlu0 %646
    %v648 = vsel %vm341, %v123, 0.0
    %649 = vadd.xlane.f32.xlu0 %v648
    %v650 = vpop.xlane.xlu0 %649
    %v651 = vsel %vm341, %v124, 0.0
    %652 = vadd.xlane.f32.xlu0 %v651
    %v653 = vpop.xlane.xlu0 %652
    %v654 = vsel %vm341, %v125, 0.0
    %655 = vadd.xlane.f32.xlu0 %v654
    %v656 = vpop.xlane.xlu0 %655
    %v657 = vsel %vm341, %v126, 0.0
    %658 = vadd.xlane.f32.xlu0 %v657
    %v659 = vpop.xlane.xlu0 %658
    %v660 = vsel %vm341, %v127, 0.0
    %661 = vadd.xlane.f32.xlu0 %v660
    %v662 = vpop.xlane.xlu0 %661
    %v663 = vsel %vm341, %v128, 0.0
    %664 = vadd.xlane.f32.xlu0 %v663
    %v665 = vpop.xlane.xlu0 %664
    %v666 = vsel %vm341, %v129, 0.0
    %667 = vadd.xlane.f32.xlu0 %v666
    %v668 = vpop.xlane.xlu0 %667
    %v669 = vsel %vm341, %v130, 0.0
    %670 = vadd.xlane.f32.xlu0 %v669
    %v671 = vpop.xlane.xlu0 %670
    %v672 = vsel %vm341, %v131, 0.0
    %673 = vadd.xlane.f32.xlu0 %v672
    %v674 = vpop.xlane.xlu0 %673
    %v675 = vsel %vm341, %v132, 0.0
    %676 = vadd.xlane.f32.xlu0 %v675
    %v677 = vpop.xlane.xlu0 %676
    %v678 = vsel %vm341, %v133, 0.0
    %679 = vadd.xlane.f32.xlu0 %v678
    %v680 = vpop.xlane.xlu0 %679
    %v681 = vsel %vm341, %v134, 0.0
    %682 = vadd.xlane.f32.xlu0 %v681
    %v683 = vpop.xlane.xlu0 %682
    %v684 = vsel %vm341, %v135, 0.0
    %685 = vadd.xlane.f32.xlu0 %v684
    %v686 = vpop.xlane.xlu0 %685
    %v687 = vsel %vm341, %v136, 0.0
    %688 = vadd.xlane.f32.xlu0 %v687
    %v689 = vpop.xlane.xlu0 %688
    %v690 = vsel %vm341, %v137, 0.0
    %691 = vadd.xlane.f32.xlu0 %v690
    %v692 = vpop.xlane.xlu0 %691
    %v693 = vsel %vm341, %v138, 0.0
    %694 = vadd.xlane.f32.xlu0 %v693
    %v695 = vpop.xlane.xlu0 %694
    %v696 = vsel %vm341, %v139, 0.0
    %697 = vadd.xlane.f32.xlu0 %v696
    %v698 = vpop.xlane.xlu0 %697
    %v699 = vsel %vm341, %v140, 0.0
    %700 = vadd.xlane.f32.xlu0 %v699
    %v701 = vpop.xlane.xlu0 %700
    %v702 = vsel %vm341, %v141, 0.0
    %703 = vadd.xlane.f32.xlu0 %v702
    %v704 = vpop.xlane.xlu0 %703
    %v705 = vsel %vm341, %v142, 0.0
    %706 = vadd.xlane.f32.xlu0 %v705
    %v707 = vpop.xlane.xlu0 %706
    %v708 = vsel %vm341, %v143, 0.0
    %709 = vadd.xlane.f32.xlu0 %v708
    %v710 = vpop.xlane.xlu0 %709
    %v711 = vsel %vm341, %v144, 0.0
    %712 = vadd.xlane.f32.xlu0 %v711
    %v713 = vpop.xlane.xlu0 %712
    %v714 = vsel %vm341, %v145, 0.0
    %715 = vadd.xlane.f32.xlu0 %v714
    %v716 = vpop.xlane.xlu0 %715
    %v717 = vsel %vm341, %v146, 0.0
    %718 = vadd.xlane.f32.xlu0 %v717
    %v719 = vpop.xlane.xlu0 %718
    %v720 = vsel %vm341, %v147, 0.0
    %721 = vadd.xlane.f32.xlu0 %v720
    %v722 = vpop.xlane.xlu0 %721
    %v723 = vsel %vm341, %v148, 0.0
    %724 = vadd.xlane.f32.xlu0 %v723
    %v725 = vpop.xlane.xlu0 %724
    %v726 = vsel %vm341, %v149, 0.0
    %727 = vadd.xlane.f32.xlu0 %v726
    %v728 = vpop.xlane.xlu0 %727
    %v729 = vsel %vm341, %v150, 0.0
    %730 = vadd.xlane.f32.xlu0 %v729
    %v731 = vpop.xlane.xlu0 %730
    %v732 = vsel %vm341, %v151, 0.0
    %733 = vadd.xlane.f32.xlu0 %v732
    %v734 = vpop.xlane.xlu0 %733
    %v735 = vsel %vm341, %v152, 0.0
    %736 = vadd.xlane.f32.xlu0 %v735
    %v737 = vpop.xlane.xlu0 %736
    %v738 = vsel %vm341, %v153, 0.0
    %739 = vadd.xlane.f32.xlu0 %v738
    %v740 = vpop.xlane.xlu0 %739
    %v741 = vsel %vm341, %v154, 0.0
    %742 = vadd.xlane.f32.xlu0 %v741
    %v743 = vpop.xlane.xlu0 %742
    %v744 = vsel %vm341, %v155, 0.0
    %745 = vadd.xlane.f32.xlu0 %v744
    %v746 = vpop.xlane.xlu0 %745
    %v747 = vsel %vm341, %v156, 0.0
    %748 = vadd.xlane.f32.xlu0 %v747
    %v749 = vpop.xlane.xlu0 %748
    %v750 = vsel %vm341, %v157, 0.0
    %751 = vadd.xlane.f32.xlu0 %v750
    %v752 = vpop.xlane.xlu0 %751
    %v753 = vsel %vm341, %v158, 0.0
    %754 = vadd.xlane.f32.xlu0 %v753
    %v755 = vpop.xlane.xlu0 %754
    %v756 = vsel %vm341, %v159, 0.0
    %757 = vadd.xlane.f32.xlu0 %v756
    %v758 = vpop.xlane.xlu0 %757
    %v759 = vsel %vm341, %v160, 0.0
    %760 = vadd.xlane.f32.xlu0 %v759
    %v761 = vpop.xlane.xlu0 %760
    %v762 = vsel %vm341, %v161, 0.0
    %763 = vadd.xlane.f32.xlu0 %v762
    %v764 = vpop.xlane.xlu0 %763
    %v765 = vsel %vm341, %v162, 0.0
    %766 = vadd.xlane.f32.xlu0 %v765
    %v767 = vpop.xlane.xlu0 %766
    %v768 = vsel %vm341, %v163, 0.0
    %769 = vadd.xlane.f32.xlu0 %v768
    %v770 = vpop.xlane.xlu0 %769
    %v771 = vsel %vm341, %v164, 0.0
    %772 = vadd.xlane.f32.xlu0 %v771
    %v773 = vpop.xlane.xlu0 %772
    %v774 = vsel %vm341, %v165, 0.0
    %775 = vadd.xlane.f32.xlu0 %v774
    %v776 = vpop.xlane.xlu0 %775
    %v777 = vsel %vm341, %v166, 0.0
    %778 = vadd.xlane.f32.xlu0 %v777
    %v779 = vpop.xlane.xlu0 %778
    %v780 = vsel %vm341, %v167, 0.0
    %781 = vadd.xlane.f32.xlu0 %v780
    %v782 = vpop.xlane.xlu0 %781
    %v783 = vsel %vm341, %v168, 0.0
    %784 = vadd.xlane.f32.xlu0 %v783
    %v785 = vpop.xlane.xlu0 %784
    %v786 = vsel %vm341, %v169, 0.0
    %787 = vadd.xlane.f32.xlu0 %v786
    %v788 = vpop.xlane.xlu0 %787
    %v789 = vsel %vm341, %v170, 0.0
    %790 = vadd.xlane.f32.xlu0 %v789
    %v791 = vpop.xlane.xlu0 %790
    %v792 = vsel %vm341, %v171, 0.0
    %793 = vadd.xlane.f32.xlu0 %v792
    %v794 = vpop.xlane.xlu0 %793
    %v795 = vsel %vm341, %v172, 0.0
    %796 = vadd.xlane.f32.xlu0 %v795
    %v797 = vpop.xlane.xlu0 %796
    %v798 = vsel %vm341, %v173, 0.0
    %799 = vadd.xlane.f32.xlu0 %v798
    %v800 = vpop.xlane.xlu0 %799
    %v801 = vsel %vm341, %v174, 0.0
    %802 = vadd.xlane.f32.xlu0 %v801
    %v803 = vpop.xlane.xlu0 %802
    %v804 = vsel %vm341, %v175, 0.0
    %805 = vadd.xlane.f32.xlu0 %v804
    %v806 = vpop.xlane.xlu0 %805
    %v807 = vsel %vm341, %v176, 0.0
    %808 = vadd.xlane.f32.xlu0 %v807
    %v809 = vpop.xlane.xlu0 %808
    %v810 = vsel %vm341, %v177, 0.0
    %811 = vadd.xlane.f32.xlu0 %v810
    %v812 = vpop.xlane.xlu0 %811
    %v813 = vsel %vm341, %v178, 0.0
    %814 = vadd.xlane.f32.xlu0 %v813
    %v815 = vpop.xlane.xlu0 %814
    %v816 = vsel %vm341, %v179, 0.0
    %817 = vadd.xlane.f32.xlu0 %v816
    %v818 = vpop.xlane.xlu0 %817
    %v819 = vsel %vm341, %v180, 0.0
    %820 = vadd.xlane.f32.xlu0 %v819
    %v821 = vpop.xlane.xlu0 %820
    %v822 = vsel %vm341, %v181, 0.0
    %823 = vadd.xlane.f32.xlu0 %v822
    %v824 = vpop.xlane.xlu0 %823
    %v825 = vsel %vm341, %v182, 0.0
    %826 = vadd.xlane.f32.xlu0 %v825
    %v827 = vpop.xlane.xlu0 %826
    %v828 = vsel %vm341, %v183, 0.0
    %829 = vadd.xlane.f32.xlu0 %v828
    %v830 = vpop.xlane.xlu0 %829
    %v831 = vsel %vm341, %v184, 0.0
    %832 = vadd.xlane.f32.xlu0 %v831
    %v833 = vpop.xlane.xlu0 %832
    %v834 = vsel %vm341, %v185, 0.0
    %835 = vadd.xlane.f32.xlu0 %v834
    %v836 = vpop.xlane.xlu0 %835
    %v837 = vsel %vm341, %v186, 0.0
    %838 = vadd.xlane.f32.xlu0 %v837
    %v839 = vpop.xlane.xlu0 %838
    %v840 = vsel %vm341, %v187, 0.0
    %841 = vadd.xlane.f32.xlu0 %v840
    %v842 = vpop.xlane.xlu0 %841
    %v843 = vsel %vm341, %v188, 0.0
    %844 = vadd.xlane.f32.xlu0 %v843
    %v845 = vpop.xlane.xlu0 %844
    %v846 = vsel %vm341, %v189, 0.0
    %847 = vadd.xlane.f32.xlu0 %v846
    %v848 = vpop.xlane.xlu0 %847
    %v849 = vsel %vm341, %v190, 0.0
    %850 = vadd.xlane.f32.xlu0 %v849
    %v851 = vpop.xlane.xlu0 %850
    %v852 = vsel %vm341, %v191, 0.0
    %853 = vadd.xlane.f32.xlu0 %v852
    %v854 = vpop.xlane.xlu0 %853
    %v855 = vsel %vm341, %v192, 0.0
    %856 = vadd.xlane.f32.xlu0 %v855
    %v857 = vpop.xlane.xlu0 %856
    %v858 = vsel %vm341, %v193, 0.0
    %859 = vadd.xlane.f32.xlu0 %v858
    %v860 = vpop.xlane.xlu0 %859
    %v861 = vsel %vm341, %v194, 0.0
    %862 = vadd.xlane.f32.xlu0 %v861
    %v863 = vpop.xlane.xlu0 %862
    %v864 = vsel %vm341, %v195, 0.0
    %865 = vadd.xlane.f32.xlu0 %v864
    %v866 = vpop.xlane.xlu0 %865
    %v867 = vsel %vm341, %v196, 0.0
    %868 = vadd.xlane.f32.xlu0 %v867
    %v869 = vpop.xlane.xlu0 %868
    %v870 = vsel %vm341, %v197, 0.0
    %871 = vadd.xlane.f32.xlu0 %v870
    %v872 = vpop.xlane.xlu0 %871
    %v873 = vsel %vm341, %v198, 0.0
    %874 = vadd.xlane.f32.xlu0 %v873
    %v875 = vpop.xlane.xlu0 %874
    %v876 = vsel %vm341, %v199, 0.0
    %877 = vadd.xlane.f32.xlu0 %v876
    %v878 = vpop.xlane.xlu0 %877
    %v879 = vsel %vm341, %v200, 0.0
    %880 = vadd.xlane.f32.xlu0 %v879
    %v881 = vpop.xlane.xlu0 %880
    %v882 = vsel %vm341, %v201, 0.0
    %883 = vadd.xlane.f32.xlu0 %v882
    %v884 = vpop.xlane.xlu0 %883
    %v885 = vsel %vm341, %v202, 0.0
    %886 = vadd.xlane.f32.xlu0 %v885
    %v887 = vpop.xlane.xlu0 %886
    %v888 = vsel %vm341, %v203, 0.0
    %889 = vadd.xlane.f32.xlu0 %v888
    %v890 = vpop.xlane.xlu0 %889
    %v891 = vsel %vm341, %v204, 0.0
    %892 = vadd.xlane.f32.xlu0 %v891
    %v893 = vpop.xlane.xlu0 %892
    %v894 = vsel %vm341, %v205, 0.0
    %895 = vadd.xlane.f32.xlu0 %v894
    %v896 = vpop.xlane.xlu0 %895
    %v897 = vsel %vm341, %v206, 0.0
    %898 = vadd.xlane.f32.xlu0 %v897
    %v899 = vpop.xlane.xlu0 %898
    %v900 = vsel %vm341, %v207, 0.0
    %901 = vadd.xlane.f32.xlu0 %v900
    %v902 = vpop.xlane.xlu0 %901
    %v903 = vsel %vm341, %v208, 0.0
    %904 = vadd.xlane.f32.xlu0 %v903
    %v905 = vpop.xlane.xlu0 %904
    %v906 = vsel %vm341, %v209, 0.0
    %907 = vadd.xlane.f32.xlu0 %v906
    %v908 = vpop.xlane.xlu0 %907
    %v909 = vsel %vm341, %v210, 0.0
    %910 = vadd.xlane.f32.xlu0 %v909
    %v911 = vpop.xlane.xlu0 %910
    %v912 = vsel %vm341, %v211, 0.0
    %913 = vadd.xlane.f32.xlu0 %v912
    %v914 = vpop.xlane.xlu0 %913
    %v915 = vsel %vm341, %v212, 0.0
    %916 = vadd.xlane.f32.xlu0 %v915
    %v917 = vpop.xlane.xlu0 %916
    %v918 = vsel %vm341, %v213, 0.0
    %919 = vadd.xlane.f32.xlu0 %v918
    %v920 = vpop.xlane.xlu0 %919
    %v921 = vsel %vm341, %v214, 0.0
    %922 = vadd.xlane.f32.xlu0 %v921
    %v923 = vpop.xlane.xlu0 %922
    %v924 = vsel %vm341, %v215, 0.0
    %925 = vadd.xlane.f32.xlu0 %v924
    %v926 = vpop.xlane.xlu0 %925
    %v927 = vsel %vm341, %v216, 0.0
    %928 = vadd.xlane.f32.xlu0 %v927
    %v929 = vpop.xlane.xlu0 %928
    %v930 = vsel %vm341, %v217, 0.0
    %931 = vadd.xlane.f32.xlu0 %v930
    %v932 = vpop.xlane.xlu0 %931
    %v933 = vsel %vm341, %v218, 0.0
    %934 = vadd.xlane.f32.xlu0 %v933
    %v935 = vpop.xlane.xlu0 %934
    %v936 = vsel %vm341, %v219, 0.0
    %937 = vadd.xlane.f32.xlu0 %v936
    %v938 = vpop.xlane.xlu0 %937
    %v939 = vsel %vm341, %v220, 0.0
    %940 = vadd.xlane.f32.xlu0 %v939
    %v941 = vpop.xlane.xlu0 %940
    %v942 = vsel %vm341, %v221, 0.0
    %943 = vadd.xlane.f32.xlu0 %v942
    %v944 = vpop.xlane.xlu0 %943
    %v945 = vsel %vm341, %v222, 0.0
    %946 = vadd.xlane.f32.xlu0 %v945
    %v947 = vpop.xlane.xlu0 %946
    %v948 = vsel %vm341, %v223, 0.0
    %949 = vadd.xlane.f32.xlu0 %v948
    %v950 = vpop.xlane.xlu0 %949
    %v951 = vsel %vm341, %v224, 0.0
    %952 = vadd.xlane.f32.xlu0 %v951
    %v953 = vpop.xlane.xlu0 %952
    %v954 = vsel %vm341, %v225, 0.0
    %955 = vadd.xlane.f32.xlu0 %v954
    %v956 = vpop.xlane.xlu0 %955
    %v957 = vsel %vm341, %v226, 0.0
    %958 = vadd.xlane.f32.xlu0 %v957
    %v959 = vpop.xlane.xlu0 %958
    %v960 = vsel %vm341, %v227, 0.0
    %961 = vadd.xlane.f32.xlu0 %v960
    %v962 = vpop.xlane.xlu0 %961
    %v963 = vsel %vm341, %v228, 0.0
    %964 = vadd.xlane.f32.xlu0 %v963
    %v965 = vpop.xlane.xlu0 %964
    %v966 = vsel %vm341, %v229, 0.0
    %967 = vadd.xlane.f32.xlu0 %v966
    %v968 = vpop.xlane.xlu0 %967
    %v969 = vsel %vm341, %v230, 0.0
    %970 = vadd.xlane.f32.xlu0 %v969
    %v971 = vpop.xlane.xlu0 %970
    %v972 = vsel %vm341, %v231, 0.0
    %973 = vadd.xlane.f32.xlu0 %v972
    %v974 = vpop.xlane.xlu0 %973
    %v975 = vsel %vm341, %v232, 0.0
    %976 = vadd.xlane.f32.xlu0 %v975
    %v977 = vpop.xlane.xlu0 %976
    %v978 = vsel %vm341, %v233, 0.0
    %979 = vadd.xlane.f32.xlu0 %v978
    %v980 = vpop.xlane.xlu0 %979
    %v981 = vsel %vm341, %v234, 0.0
    %982 = vadd.xlane.f32.xlu0 %v981
    %v983 = vpop.xlane.xlu0 %982
    %v984 = vsel %vm341, %v235, 0.0
    %985 = vadd.xlane.f32.xlu0 %v984
    %v986 = vpop.xlane.xlu0 %985
    %v987 = vsel %vm341, %v236, 0.0
    %988 = vadd.xlane.f32.xlu0 %v987
    %v989 = vpop.xlane.xlu0 %988
    %v990 = vsel %vm341, %v237, 0.0
    %991 = vadd.xlane.f32.xlu0 %v990
    %v992 = vpop.xlane.xlu0 %991
    %v993 = vsel %vm341, %v238, 0.0
    %994 = vadd.xlane.f32.xlu0 %v993
    %v995 = vpop.xlane.xlu0 %994
    %v996 = vsel %vm341, %v239, 0.0
    %997 = vadd.xlane.f32.xlu0 %v996
    %v998 = vpop.xlane.xlu0 %997
    %v999 = vsel %vm341, %v240, 0.0
    %1000 = vadd.xlane.f32.xlu0 %v999
    %v1001 = vpop.xlane.xlu0 %1000
    %v1002 = vsel %vm341, %v241, 0.0
    %1003 = vadd.xlane.f32.xlu0 %v1002
    %v1004 = vpop.xlane.xlu0 %1003
    %v1005 = vsel %vm341, %v242, 0.0
    %1006 = vadd.xlane.f32.xlu0 %v1005
    %v1007 = vpop.xlane.xlu0 %1006
    %v1008 = vsel %vm341, %v243, 0.0
    %1009 = vadd.xlane.f32.xlu0 %v1008
    %v1010 = vpop.xlane.xlu0 %1009
    %v1011 = vsel %vm341, %v244, 0.0
    %1012 = vadd.xlane.f32.xlu0 %v1011
    %v1013 = vpop.xlane.xlu0 %1012
    %v1014 = vsel %vm341, %v245, 0.0
    %1015 = vadd.xlane.f32.xlu0 %v1014
    %v1016 = vpop.xlane.xlu0 %1015
    %v1017 = vsel %vm341, %v246, 0.0
    %1018 = vadd.xlane.f32.xlu0 %v1017
    %v1019 = vpop.xlane.xlu0 %1018
    %v1020 = vsel %vm341, %v247, 0.0
    %1021 = vadd.xlane.f32.xlu0 %v1020
    %v1022 = vpop.xlane.xlu0 %1021
    %v1023 = vsel %vm341, %v248, 0.0
    %1024 = vadd.xlane.f32.xlu0 %v1023
    %v1025 = vpop.xlane.xlu0 %1024
    %v1026 = vsel %vm341, %v249, 0.0
    %1027 = vadd.xlane.f32.xlu0 %v1026
    %v1028 = vpop.xlane.xlu0 %1027
    %v1029 = vsel %vm341, %v250, 0.0
    %1030 = vadd.xlane.f32.xlu0 %v1029
    %v1031 = vpop.xlane.xlu0 %1030
    %v1032 = vsel %vm341, %v251, 0.0
    %1033 = vadd.xlane.f32.xlu0 %v1032
    %v1034 = vpop.xlane.xlu0 %1033
    %v1035 = vsel %vm341, %v252, 0.0
    %1036 = vadd.xlane.f32.xlu0 %v1035
    %v1037 = vpop.xlane.xlu0 %1036
    %v1038 = vsel %vm341, %v253, 0.0
    %1039 = vadd.xlane.f32.xlu0 %v1038
    %v1040 = vpop.xlane.xlu0 %1039
    %v1041 = vsel %vm341, %v254, 0.0
    %1042 = vadd.xlane.f32.xlu0 %v1041
    %v1043 = vpop.xlane.xlu0 %1042
    %v1044 = vsel %vm341, %v255, 0.0
    %1045 = vadd.xlane.f32.xlu0 %v1044
    %v1046 = vpop.xlane.xlu0 %1045
    %v1047 = vsel %vm341, %v256, 0.0
    %1048 = vadd.xlane.f32.xlu0 %v1047
    %v1049 = vpop.xlane.xlu0 %1048
    %v1050 = vsel %vm341, %v257, 0.0
    %1051 = vadd.xlane.f32.xlu0 %v1050
    %v1052 = vpop.xlane.xlu0 %1051
    %v1053 = vsel %vm341, %v258, 0.0
    %1054 = vadd.xlane.f32.xlu0 %v1053
    %v1055 = vpop.xlane.xlu0 %1054
    %v1056 = vsel %vm341, %v259, 0.0
    %1057 = vadd.xlane.f32.xlu0 %v1056
    %v1058 = vpop.xlane.xlu0 %1057
    %v1059 = vsel %vm341, %v260, 0.0
    %1060 = vadd.xlane.f32.xlu0 %v1059
    %v1061 = vpop.xlane.xlu0 %1060
    %v1062 = vsel %vm341, %v261, 0.0
    %1063 = vadd.xlane.f32.xlu0 %v1062
    %v1064 = vpop.xlane.xlu0 %1063
    %v1065 = vsel %vm341, %v262, 0.0
    %1066 = vadd.xlane.f32.xlu0 %v1065
    %v1067 = vpop.xlane.xlu0 %1066
    %v1068 = vsel %vm341, %v263, 0.0
    %1069 = vadd.xlane.f32.xlu0 %v1068
    %v1070 = vpop.xlane.xlu0 %1069
    %v1071 = vsel %vm341, %v264, 0.0
    %1072 = vadd.xlane.f32.xlu0 %v1071
    %v1073 = vpop.xlane.xlu0 %1072
    %v1074 = vsel %vm341, %v265, 0.0
    %1075 = vadd.xlane.f32.xlu0 %v1074
    %v1076 = vpop.xlane.xlu0 %1075
    %v1077 = vsel %vm341, %v266, 0.0
    %1078 = vadd.xlane.f32.xlu0 %v1077
    %v1079 = vpop.xlane.xlu0 %1078
    %v1080 = vsel %vm341, %v267, 0.0
    %1081 = vadd.xlane.f32.xlu0 %v1080
    %v1082 = vpop.xlane.xlu0 %1081
    %v1083 = vsel %vm341, %v268, 0.0
    %1084 = vadd.xlane.f32.xlu0 %v1083
    %v1085 = vpop.xlane.xlu0 %1084
    %v1086 = vsel %vm341, %v269, 0.0
    %1087 = vadd.xlane.f32.xlu0 %v1086
    %v1088 = vpop.xlane.xlu0 %1087
    %v1089 = vsel %vm341, %v270, 0.0
    %1090 = vadd.xlane.f32.xlu0 %v1089
    %v1091 = vpop.xlane.xlu0 %1090
    %v1092 = vsel %vm341, %v271, 0.0
    %1093 = vadd.xlane.f32.xlu0 %v1092
    %v1094 = vpop.xlane.xlu0 %1093
    %v1095 = vsel %vm341, %v272, 0.0
    %1096 = vadd.xlane.f32.xlu0 %v1095
    %v1097 = vpop.xlane.xlu0 %1096
    %v1098 = vsel %vm341, %v273, 0.0
    %1099 = vadd.xlane.f32.xlu0 %v1098
    %v1100 = vpop.xlane.xlu0 %1099
    %v1101 = vsel %vm341, %v274, 0.0
    %1102 = vadd.xlane.f32.xlu0 %v1101
    %v1103 = vpop.xlane.xlu0 %1102
    %v1104 = vsel %vm341, %v275, 0.0
    %1105 = vadd.xlane.f32.xlu0 %v1104
    %v1106 = vpop.xlane.xlu0 %1105
    %v1107 = vsel %vm341, %v276, 0.0
    %1108 = vadd.xlane.f32.xlu0 %v1107
    %v1109 = vpop.xlane.xlu0 %1108
    %v1110 = vsel %vm341, %v277, 0.0
    %1111 = vadd.xlane.f32.xlu0 %v1110
    %v1112 = vpop.xlane.xlu0 %1111
    %v1113 = vsel %vm341, %v278, 0.0
    %1114 = vadd.xlane.f32.xlu0 %v1113
    %v1115 = vpop.xlane.xlu0 %1114
    %v1116 = vsel %vm341, %v279, 0.0
    %1117 = vadd.xlane.f32.xlu0 %v1116
    %v1118 = vpop.xlane.xlu0 %1117
    %v1119 = vsel %vm341, %v280, 0.0
    %1120 = vadd.xlane.f32.xlu0 %v1119
    %v1121 = vpop.xlane.xlu0 %1120
    %v1122 = vsel %vm341, %v281, 0.0
    %1123 = vadd.xlane.f32.xlu0 %v1122
    %v1124 = vpop.xlane.xlu0 %1123
    %v1125 = vsel %vm341, %v282, 0.0
    %1126 = vadd.xlane.f32.xlu0 %v1125
    %v1127 = vpop.xlane.xlu0 %1126
    %v1128 = vsel %vm341, %v283, 0.0
    %1129 = vadd.xlane.f32.xlu0 %v1128
    %v1130 = vpop.xlane.xlu0 %1129
    %v1131 = vsel %vm341, %v284, 0.0
    %1132 = vadd.xlane.f32.xlu0 %v1131
    %v1133 = vpop.xlane.xlu0 %1132
    %v1134 = vsel %vm341, %v285, 0.0
    %1135 = vadd.xlane.f32.xlu0 %v1134
    %v1136 = vpop.xlane.xlu0 %1135
    %v1137 = vsel %vm341, %v286, 0.0
    %1138 = vadd.xlane.f32.xlu0 %v1137
    %v1139 = vpop.xlane.xlu0 %1138
    %v1140 = vsel %vm341, %v287, 0.0
    %1141 = vadd.xlane.f32.xlu0 %v1140
    %v1142 = vpop.xlane.xlu0 %1141
    %v1143 = vsel %vm341, %v288, 0.0
    %1144 = vadd.xlane.f32.xlu0 %v1143
    %v1145 = vpop.xlane.xlu0 %1144
    %v1146 = vsel %vm341, %v289, 0.0
    %1147 = vadd.xlane.f32.xlu0 %v1146
    %v1148 = vpop.xlane.xlu0 %1147
    %v1149 = vsel %vm341, %v290, 0.0
    %1150 = vadd.xlane.f32.xlu0 %v1149
    %v1151 = vpop.xlane.xlu0 %1150
    %v1152 = vsel %vm341, %v291, 0.0
    %1153 = vadd.xlane.f32.xlu0 %v1152
    %v1154 = vpop.xlane.xlu0 %1153
    %v1155 = vsel %vm341, %v292, 0.0
    %1156 = vadd.xlane.f32.xlu0 %v1155
    %v1157 = vpop.xlane.xlu0 %1156
    %v1158 = vsel %vm341, %v293, 0.0
    %1159 = vadd.xlane.f32.xlu0 %v1158
    %v1160 = vpop.xlane.xlu0 %1159
    %v1161 = vsel %vm341, %v294, 0.0
    %1162 = vadd.xlane.f32.xlu0 %v1161
    %v1163 = vpop.xlane.xlu0 %1162
    %v1164 = vsel %vm341, %v295, 0.0
    %1165 = vadd.xlane.f32.xlu0 %v1164
    %v1166 = vpop.xlane.xlu0 %1165
    %v1167 = vsel %vm341, %v296, 0.0
    %1168 = vadd.xlane.f32.xlu0 %v1167
    %v1169 = vpop.xlane.xlu0 %1168
    %v1170 = vsel %vm341, %v297, 0.0
    %1171 = vadd.xlane.f32.xlu0 %v1170
    %v1172 = vpop.xlane.xlu0 %1171
    %v1173 = vsel %vm341, %v298, 0.0
    %1174 = vadd.xlane.f32.xlu0 %v1173
    %v1175 = vpop.xlane.xlu0 %1174
    %v1176 = vsel %vm341, %v299, 0.0
    %1177 = vadd.xlane.f32.xlu0 %v1176
    %v1178 = vpop.xlane.xlu0 %1177
    %v1179 = vsel %vm341, %v300, 0.0
    %1180 = vadd.xlane.f32.xlu0 %v1179
    %v1181 = vpop.xlane.xlu0 %1180
    %v1182 = vsel %vm341, %v301, 0.0
    %1183 = vadd.xlane.f32.xlu0 %v1182
    %v1184 = vpop.xlane.xlu0 %1183
    %v1185 = vsel %vm341, %v302, 0.0
    %1186 = vadd.xlane.f32.xlu0 %v1185
    %v1187 = vpop.xlane.xlu0 %1186
    %v1188 = vsel %vm341, %v303, 0.0
    %1189 = vadd.xlane.f32.xlu0 %v1188
    %v1190 = vpop.xlane.xlu0 %1189
    %v1191 = vsel %vm341, %v304, 0.0
    %1192 = vadd.xlane.f32.xlu0 %v1191
    %v1193 = vpop.xlane.xlu0 %1192
    %v1194 = vsel %vm341, %v305, 0.0
    %1195 = vadd.xlane.f32.xlu0 %v1194
    %v1196 = vpop.xlane.xlu0 %1195
    %v1197 = vsel %vm341, %v306, 0.0
    %1198 = vadd.xlane.f32.xlu0 %v1197
    %v1199 = vpop.xlane.xlu0 %1198
    %v1200 = vsel %vm341, %v307, 0.0
    %1201 = vadd.xlane.f32.xlu0 %v1200
    %v1202 = vpop.xlane.xlu0 %1201
    %v1203 = vsel %vm341, %v308, 0.0
    %1204 = vadd.xlane.f32.xlu0 %v1203
    %v1205 = vpop.xlane.xlu0 %1204
    %v1206 = vsel %vm341, %v309, 0.0
    %1207 = vadd.xlane.f32.xlu0 %v1206
    %v1208 = vpop.xlane.xlu0 %1207
    %v1209 = vsel %vm341, %v310, 0.0
    %1210 = vadd.xlane.f32.xlu0 %v1209
    %v1211 = vpop.xlane.xlu0 %1210
    %v1212 = vsel %vm341, %v311, 0.0
    %1213 = vadd.xlane.f32.xlu0 %v1212
    %v1214 = vpop.xlane.xlu0 %1213
    %v1215 = vsel %vm341, %v312, 0.0
    %1216 = vadd.xlane.f32.xlu0 %v1215
    %v1217 = vpop.xlane.xlu0 %1216
    %v1218 = vsel %vm341, %v313, 0.0
    %1219 = vadd.xlane.f32.xlu0 %v1218
    %v1220 = vpop.xlane.xlu0 %1219
    %v1221 = vsel %vm341, %v314, 0.0
    %1222 = vadd.xlane.f32.xlu0 %v1221
    %v1223 = vpop.xlane.xlu0 %1222
    %v1224 = vsel %vm341, %v315, 0.0
    %1225 = vadd.xlane.f32.xlu0 %v1224
    %v1226 = vpop.xlane.xlu0 %1225
    %v1227 = vsel %vm341, %v316, 0.0
    %1228 = vadd.xlane.f32.xlu0 %v1227
    %v1229 = vpop.xlane.xlu0 %1228
    %v1230 = vsel %vm341, %v317, 0.0
    %1231 = vadd.xlane.f32.xlu0 %v1230
    %v1232 = vpop.xlane.xlu0 %1231
    %v1233 = vsel %vm341, %v318, 0.0
    %1234 = vadd.xlane.f32.xlu0 %v1233
    %v1235 = vpop.xlane.xlu0 %1234
    %v1236 = vsel %vm341, %v319, 0.0
    %1237 = vadd.xlane.f32.xlu0 %v1236
    %v1238 = vpop.xlane.xlu0 %1237
    %v1239 = vsel %vm341, %v320, 0.0
    %1240 = vadd.xlane.f32.xlu0 %v1239
    %v1241 = vpop.xlane.xlu0 %1240
    %v1242 = vsel %vm341, %v321, 0.0
    %1243 = vadd.xlane.f32.xlu0 %v1242
    %v1244 = vpop.xlane.xlu0 %1243
    %v1245 = vsel %vm341, %v322, 0.0
    %1246 = vadd.xlane.f32.xlu0 %v1245
    %v1247 = vpop.xlane.xlu0 %1246
    %v1248 = vsel %vm341, %v323, 0.0
    %1249 = vadd.xlane.f32.xlu0 %v1248
    %v1250 = vpop.xlane.xlu0 %1249
    %v1251 = vsel %vm341, %v324, 0.0
    %1252 = vadd.xlane.f32.xlu0 %v1251
    %v1253 = vpop.xlane.xlu0 %1252
    %v1254 = vsel %vm341, %v325, 0.0
    %1255 = vadd.xlane.f32.xlu0 %v1254
    %v1256 = vpop.xlane.xlu0 %1255
    %v1257 = vsel %vm341, %v326, 0.0
    %1258 = vadd.xlane.f32.xlu0 %v1257
    %v1259 = vpop.xlane.xlu0 %1258
    %v1260 = vsel %vm341, %v327, 0.0
    %1261 = vadd.xlane.f32.xlu0 %v1260
    %v1262 = vpop.xlane.xlu0 %1261
    %v1263 = vsel %vm341, %v328, 0.0
    %1264 = vadd.xlane.f32.xlu0 %v1263
    %v1265 = vpop.xlane.xlu0 %1264
    %v1266 = vsel %vm341, %v329, 0.0
    %1267 = vadd.xlane.f32.xlu0 %v1266
    %v1268 = vpop.xlane.xlu0 %1267
    %v1269 = vsel %vm341, %v330, 0.0
    %1270 = vadd.xlane.f32.xlu0 %v1269
    %v1271 = vpop.xlane.xlu0 %1270
    %v1272 = vsel %vm341, %v331, 0.0
    %1273 = vadd.xlane.f32.xlu0 %v1272
    %v1274 = vpop.xlane.xlu0 %1273
    %v1275 = vsel %vm341, %v332, 0.0
    %1276 = vadd.xlane.f32.xlu0 %v1275
    %v1277 = vpop.xlane.xlu0 %1276
    %v1278 = vsel %vm341, %v333, 0.0
    %1279 = vadd.xlane.f32.xlu0 %v1278
    %v1280 = vpop.xlane.xlu0 %1279
    %v1281 = vsel %vm341, %v334, 0.0
    %1282 = vadd.xlane.f32.xlu0 %v1281
    %v1283 = vpop.xlane.xlu0 %1282
    %v1284 = vsel %vm341, %v335, 0.0
    %1285 = vadd.xlane.f32.xlu0 %v1284
    %v1286 = vpop.xlane.xlu0 %1285
    %v1287 = vsel %vm341, %v336, 0.0
    %1288 = vadd.xlane.f32.xlu0 %v1287
    %v1289 = vpop.xlane.xlu0 %1288
    %v1290 = vsel %vm341, %v337, 0.0
    %1291 = vadd.xlane.f32.xlu0 %v1290
    %v1292 = vpop.xlane.xlu0 %1291
    %v1293 = vsel %vm341, %v338, 0.0
    %1294 = vadd.xlane.f32.xlu0 %v1293
    %v1295 = vpop.xlane.xlu0 %1294
    %v1296 = vsel %vm341, %v339, 0.0
    %1297 = vadd.xlane.f32.xlu0 %v1296
    %v1298 = vpop.xlane.xlu0 %1297
    %v1299 = vsel %vm341, %v340, 0.0
    %1300 = vadd.xlane.f32.xlu0 %v1299
    %v1301 = vpop.xlane.xlu0 %1300
    %v1302 = vld [vmem:[%s1] sm:$0xff]
    %v1303 = vld [vmem:[%s1 + $0x8] sm:$0xff]
    %v1304 = vld [vmem:[%s1 + $0x10] sm:$0xff]
    %v1305 = vld [vmem:[%s1 + $0x18] sm:$0xff]
    %v1306 = vld [vmem:[%s1 + $0x20] sm:$0xff]
    %v1307 = vld [vmem:[%s1 + $0x28] sm:$0xff]
    %v1308 = vld [vmem:[%s1 + $0x30] sm:$0xff]
    %v1309 = vld [vmem:[%s1 + $0x38] sm:$0xff]
    %v1310 = vld [vmem:[%s1 + $0x40] sm:$0xff]
    %v1311 = vld [vmem:[%s1 + $0x48] sm:$0xff]
    %v1312 = vld [vmem:[%s1 + $0x50] sm:$0xff]
    %v1313 = vld [vmem:[%s1 + $0x58] sm:$0xff]
    %v1314 = vld [vmem:[%s1 + $0x60] sm:$0xff]
    %v1315 = vld [vmem:[%s1 + $0x68] sm:$0xff]
    %v1316 = vld [vmem:[%s1 + $0x70] sm:$0xff]
    %v1317 = vld [vmem:[%s1 + $0x78] sm:$0xff]
    %v1318 = vld [vmem:[%s1 + $0x80] sm:$0xff]
    %v1319 = vld [vmem:[%s1 + $0x88] sm:$0xff]
    %v1320 = vld [vmem:[%s1 + $0x90] sm:$0xff]
    %v1321 = vld [vmem:[%s1 + $0x98] sm:$0xff]
    %v1322 = vld [vmem:[%s1 + $0xa0] sm:$0xff]
    %v1323 = vld [vmem:[%s1 + $0xa8] sm:$0xff]
    %v1324 = vld [vmem:[%s1 + $0xb0] sm:$0xff]
    %v1325 = vld [vmem:[%s1 + $0xb8] sm:$0xff]
    %v1326 = vld [vmem:[%s1 + $0xc0] sm:$0xff]
    %v1327 = vld [vmem:[%s1 + $0xc8] sm:$0xff]
    %v1328 = vld [vmem:[%s1 + $0xd0] sm:$0xff]
    %v1329 = vld [vmem:[%s1 + $0xd8] sm:$0xff]
    %v1330 = vld [vmem:[%s1 + $0xe0] sm:$0xff]
    %v1331 = vld [vmem:[%s1 + $0xe8] sm:$0xff]
    %v1332 = vld [vmem:[%s1 + $0xf0] sm:$0xff]
    %v1333 = vld [vmem:[%s1 + $0xf8] sm:$0xff]
    %v1334 = vld [vmem:[%s1 + $0x100] sm:$0xff]
    %v1335 = vld [vmem:[%s1 + $0x108] sm:$0xff]
    %v1336 = vld [vmem:[%s1 + $0x110] sm:$0xff]
    %v1337 = vld [vmem:[%s1 + $0x118] sm:$0xff]
    %v1338 = vld [vmem:[%s1 + $0x120] sm:$0xff]
    %v1339 = vld [vmem:[%s1 + $0x128] sm:$0xff]
    %v1340 = vld [vmem:[%s1 + $0x130] sm:$0xff]
    %v1341 = vld [vmem:[%s1 + $0x138] sm:$0xff]
    %v1342 = vld [vmem:[%s1 + $0x140] sm:$0xff]
    %v1343 = vld [vmem:[%s1 + $0x148] sm:$0xff]
    %v1344 = vld [vmem:[%s1 + $0x150] sm:$0xff]
    %v1345 = vld [vmem:[%s1 + $0x158] sm:$0xff]
    %v1346 = vld [vmem:[%s1 + $0x160] sm:$0xff]
    %v1347 = vld [vmem:[%s1 + $0x168] sm:$0xff]
    %v1348 = vld [vmem:[%s1 + $0x170] sm:$0xff]
    %v1349 = vld [vmem:[%s1 + $0x178] sm:$0xff]
    %v1350 = vld [vmem:[%s1 + $0x180] sm:$0xff]
    %v1351 = vld [vmem:[%s1 + $0x188] sm:$0xff]
    %v1352 = vld [vmem:[%s1 + $0x190] sm:$0xff]
    %v1353 = vld [vmem:[%s1 + $0x198] sm:$0xff]
    %v1354 = vld [vmem:[%s1 + $0x1a0] sm:$0xff]
    %v1355 = vld [vmem:[%s1 + $0x1a8] sm:$0xff]
    %v1356 = vld [vmem:[%s1 + $0x1b0] sm:$0xff]
    %v1357 = vld [vmem:[%s1 + $0x1b8] sm:$0xff]
    %v1358 = vld [vmem:[%s1 + $0x1c0] sm:$0xff]
    %v1359 = vld [vmem:[%s1 + $0x1c8] sm:$0xff]
    %v1360 = vld [vmem:[%s1 + $0x1d0] sm:$0xff]
    %v1361 = vld [vmem:[%s1 + $0x1d8] sm:$0xff]
    %v1362 = vld [vmem:[%s1 + $0x1e0] sm:$0xff]
    %v1363 = vld [vmem:[%s1 + $0x1e8] sm:$0xff]
    %v1364 = vld [vmem:[%s1 + $0x1f0] sm:$0xff]
    %v1365 = vld [vmem:[%s1 + $0x1f8] sm:$0xff]
    %v1366 = vld [vmem:[%s1 + $0x200] sm:$0xff]
    %v1367 = vld [vmem:[%s1 + $0x208] sm:$0xff]
    %v1368 = vld [vmem:[%s1 + $0x210] sm:$0xff]
    %v1369 = vld [vmem:[%s1 + $0x218] sm:$0xff]
    %v1370 = vld [vmem:[%s1 + $0x220] sm:$0xff]
    %v1371 = vld [vmem:[%s1 + $0x228] sm:$0xff]
    %v1372 = vld [vmem:[%s1 + $0x230] sm:$0xff]
    %v1373 = vld [vmem:[%s1 + $0x238] sm:$0xff]
    %v1374 = vld [vmem:[%s1 + $0x240] sm:$0xff]
    %v1375 = vld [vmem:[%s1 + $0x248] sm:$0xff]
    %v1376 = vld [vmem:[%s1 + $0x250] sm:$0xff]
    %v1377 = vld [vmem:[%s1 + $0x258] sm:$0xff]
    %v1378 = vld [vmem:[%s1 + $0x260] sm:$0xff]
    %v1379 = vld [vmem:[%s1 + $0x268] sm:$0xff]
    %v1380 = vld [vmem:[%s1 + $0x270] sm:$0xff]
    %v1381 = vld [vmem:[%s1 + $0x278] sm:$0xff]
    %v1382 = vld [vmem:[%s1 + $0x280] sm:$0xff]
    %v1383 = vld [vmem:[%s1 + $0x288] sm:$0xff]
    %v1384 = vld [vmem:[%s1 + $0x290] sm:$0xff]
    %v1385 = vld [vmem:[%s1 + $0x298] sm:$0xff]
    %v1386 = vld [vmem:[%s1 + $0x2a0] sm:$0xff]
    %v1387 = vld [vmem:[%s1 + $0x2a8] sm:$0xff]
    %v1388 = vld [vmem:[%s1 + $0x2b0] sm:$0xff]
    %v1389 = vld [vmem:[%s1 + $0x2b8] sm:$0xff]
    %v1390 = vld [vmem:[%s1 + $0x2c0] sm:$0xff]
    %v1391 = vld [vmem:[%s1 + $0x2c8] sm:$0xff]
    %v1392 = vld [vmem:[%s1 + $0x2d0] sm:$0xff]
    %v1393 = vld [vmem:[%s1 + $0x2d8] sm:$0xff]
    %v1394 = vld [vmem:[%s1 + $0x2e0] sm:$0xff]
    %v1395 = vld [vmem:[%s1 + $0x2e8] sm:$0xff]
    %v1396 = vld [vmem:[%s1 + $0x2f0] sm:$0xff]
    %v1397 = vld [vmem:[%s1 + $0x2f8] sm:$0xff]
    %v1398 = vld [vmem:[%s1 + $0x300] sm:$0xff]
    %v1399 = vld [vmem:[%s1 + $0x308] sm:$0xff]
    %v1400 = vld [vmem:[%s1 + $0x310] sm:$0xff]
    %v1401 = vld [vmem:[%s1 + $0x318] sm:$0xff]
    %v1402 = vld [vmem:[%s1 + $0x320] sm:$0xff]
    %v1403 = vld [vmem:[%s1 + $0x328] sm:$0xff]
    %v1404 = vld [vmem:[%s1 + $0x330] sm:$0xff]
    %v1405 = vld [vmem:[%s1 + $0x338] sm:$0xff]
    %v1406 = vld [vmem:[%s1 + $0x340] sm:$0xff]
    %v1407 = vld [vmem:[%s1 + $0x348] sm:$0xff]
    %v1408 = vld [vmem:[%s1 + $0x350] sm:$0xff]
    %v1409 = vld [vmem:[%s1 + $0x358] sm:$0xff]
    %v1410 = vld [vmem:[%s1 + $0x360] sm:$0xff]
    %v1411 = vld [vmem:[%s1 + $0x368] sm:$0xff]
    %v1412 = vld [vmem:[%s1 + $0x370] sm:$0xff]
    %v1413 = vld [vmem:[%s1 + $0x378] sm:$0xff]
    %v1414 = vld [vmem:[%s1 + $0x380] sm:$0xff]
    %v1415 = vld [vmem:[%s1 + $0x388] sm:$0xff]
    %v1416 = vld [vmem:[%s1 + $0x390] sm:$0xff]
    %v1417 = vld [vmem:[%s1 + $0x398] sm:$0xff]
    %v1418 = vld [vmem:[%s1 + $0x3a0] sm:$0xff]
    %v1419 = vld [vmem:[%s1 + $0x3a8] sm:$0xff]
    %v1420 = vld [vmem:[%s1 + $0x3b0] sm:$0xff]
    %v1421 = vld [vmem:[%s1 + $0x3b8] sm:$0xff]
    %v1422 = vld [vmem:[%s1 + $0x3c0] sm:$0xff]
    %v1423 = vld [vmem:[%s1 + $0x3c8] sm:$0xff]
    %v1424 = vld [vmem:[%s1 + $0x3d0] sm:$0xff]
    %v1425 = vld [vmem:[%s1 + $0x3d8] sm:$0xff]
    %v1426 = vld [vmem:[%s1 + $0x3e0] sm:$0xff]
    %v1427 = vld [vmem:[%s1 + $0x3e8] sm:$0xff]
    %v1428 = vld [vmem:[%s1 + $0x3f0] sm:$0xff]
    %v1429 = vld [vmem:[%s1 + $0x3f8] sm:$0xff]
    %v1430 = vld [vmem:[%s1 + $0x400] sm:$0xff]
    %v1431 = vld [vmem:[%s1 + $0x408] sm:$0xff]
    %v1432 = vld [vmem:[%s1 + $0x410] sm:$0xff]
    %v1433 = vld [vmem:[%s1 + $0x418] sm:$0xff]
    %v1434 = vld [vmem:[%s1 + $0x420] sm:$0xff]
    %v1435 = vld [vmem:[%s1 + $0x428] sm:$0xff]
    %v1436 = vld [vmem:[%s1 + $0x430] sm:$0xff]
    %v1437 = vld [vmem:[%s1 + $0x438] sm:$0xff]
    %v1438 = vld [vmem:[%s1 + $0x440] sm:$0xff]
    %v1439 = vld [vmem:[%s1 + $0x448] sm:$0xff]
    %v1440 = vld [vmem:[%s1 + $0x450] sm:$0xff]
    %v1441 = vld [vmem:[%s1 + $0x458] sm:$0xff]
    %v1442 = vld [vmem:[%s1 + $0x460] sm:$0xff]
    %v1443 = vld [vmem:[%s1 + $0x468] sm:$0xff]
    %v1444 = vld [vmem:[%s1 + $0x470] sm:$0xff]
    %v1445 = vld [vmem:[%s1 + $0x478] sm:$0xff]
    %v1446 = vld [vmem:[%s1 + $0x480] sm:$0xff]
    %v1447 = vld [vmem:[%s1 + $0x488] sm:$0xff]
    %v1448 = vld [vmem:[%s1 + $0x490] sm:$0xff]
    %v1449 = vld [vmem:[%s1 + $0x498] sm:$0xff]
    %v1450 = vld [vmem:[%s1 + $0x4a0] sm:$0xff]
    %v1451 = vld [vmem:[%s1 + $0x4a8] sm:$0xff]
    %v1452 = vld [vmem:[%s1 + $0x4b0] sm:$0xff]
    %v1453 = vld [vmem:[%s1 + $0x4b8] sm:$0xff]
    %v1454 = vld [vmem:[%s1 + $0x4c0] sm:$0xff]
    %v1455 = vld [vmem:[%s1 + $0x4c8] sm:$0xff]
    %v1456 = vld [vmem:[%s1 + $0x4d0] sm:$0xff]
    %v1457 = vld [vmem:[%s1 + $0x4d8] sm:$0xff]
    %v1458 = vld [vmem:[%s1 + $0x4e0] sm:$0xff]
    %v1459 = vld [vmem:[%s1 + $0x4e8] sm:$0xff]
    %v1460 = vld [vmem:[%s1 + $0x4f0] sm:$0xff]
    %v1461 = vld [vmem:[%s1 + $0x4f8] sm:$0xff]
    %v1782 = vlaneseq
    %v1783 = vand.u32 %v1782, 127
    %v1784 = vlaneseq
    %v1785 = vshrl.u32 %v1784, 7
    %v1786 = vsub.s32 %v1783, %v1785
    %v1787 = vrot.slane %v344, %v1786
    %v1788 = vadd.s32 %v1783, 4294967288
    %v1789 = vlaneseq
    %v1790 = vshrl.u32 %v1789, 7
    %v1791 = vsub.s32 %v1788, %v1790
    %v1792 = vrot.slane %v347, %v1791
    %vm1793 = vcmask 130112
    %v1794 = vsel %vm1793, %v1792, %v1787
    %v1795 = vadd.s32 %v1783, 4294967280
    %v1796 = vlaneseq
    %v1797 = vshrl.u32 %v1796, 7
    %v1798 = vsub.s32 %v1795, %v1797
    %v1799 = vrot.slane %v350, %v1798
    %vm1800 = vcmask 195712
    %v1801 = vsel %vm1800, %v1799, %v1794
    %v1802 = vadd.s32 %v1783, 4294967272
    %v1803 = vlaneseq
    %v1804 = vshrl.u32 %v1803, 7
    %v1805 = vsub.s32 %v1802, %v1804
    %v1806 = vrot.slane %v353, %v1805
    %vm1807 = vcmask 261312
    %v1808 = vsel %vm1807, %v1806, %v1801
    %v1809 = vadd.s32 %v1783, 4294967264
    %v1810 = vlaneseq
    %v1811 = vshrl.u32 %v1810, 7
    %v1812 = vsub.s32 %v1809, %v1811
    %v1813 = vrot.slane %v356, %v1812
    %vm1814 = vcmask 326912
    %v1815 = vsel %vm1814, %v1813, %v1808
    %v1816 = vadd.s32 %v1783, 4294967256
    %v1817 = vlaneseq
    %v1818 = vshrl.u32 %v1817, 7
    %v1819 = vsub.s32 %v1816, %v1818
    %v1820 = vrot.slane %v359, %v1819
    %vm1821 = vcmask 392512
    %v1822 = vsel %vm1821, %v1820, %v1815
    %v1823 = vadd.s32 %v1783, 4294967248
    %v1824 = vlaneseq
    %v1825 = vshrl.u32 %v1824, 7
    %v1826 = vsub.s32 %v1823, %v1825
    %v1827 = vrot.slane %v362, %v1826
    %vm1828 = vcmask 458112
    %v1829 = vsel %vm1828, %v1827, %v1822
    %v1830 = vadd.s32 %v1783, 4294967240
    %v1831 = vlaneseq
    %v1832 = vshrl.u32 %v1831, 7
    %v1833 = vsub.s32 %v1830, %v1832
    %v1834 = vrot.slane %v365, %v1833
    %vm1835 = vcmask 523712
    %v1836 = vsel %vm1835, %v1834, %v1829
    %v1837 = vadd.s32 %v1783, 4294967232
    %v1838 = vlaneseq
    %v1839 = vshrl.u32 %v1838, 7
    %v1840 = vsub.s32 %v1837, %v1839
    %v1841 = vrot.slane %v368, %v1840
    %vm1842 = vcmask 589312
    %v1843 = vsel %vm1842, %v1841, %v1836
    %v1844 = vadd.s32 %v1783, 4294967224
    %v1845 = vlaneseq
    %v1846 = vshrl.u32 %v1845, 7
    %v1847 = vsub.s32 %v1844, %v1846
    %v1848 = vrot.slane %v371, %v1847
    %vm1849 = vcmask 654912
    %v1850 = vsel %vm1849, %v1848, %v1843
    %v1851 = vadd.s32 %v1783, 4294967216
    %v1852 = vlaneseq
    %v1853 = vshrl.u32 %v1852, 7
    %v1854 = vsub.s32 %v1851, %v1853
    %v1855 = vrot.slane %v374, %v1854
    %vm1856 = vcmask 720512
    %v1857 = vsel %vm1856, %v1855, %v1850
    %v1858 = vadd.s32 %v1783, 4294967208
    %v1859 = vlaneseq
    %v1860 = vshrl.u32 %v1859, 7
    %v1861 = vsub.s32 %v1858, %v1860
    %v1862 = vrot.slane %v377, %v1861
    %vm1863 = vcmask 786112
    %v1864 = vsel %vm1863, %v1862, %v1857
    %v1865 = vadd.s32 %v1783, 4294967200
    %v1866 = vlaneseq
    %v1867 = vshrl.u32 %v1866, 7
    %v1868 = vsub.s32 %v1865, %v1867
    %v1869 = vrot.slane %v380, %v1868
    %vm1870 = vcmask 851712
    %v1871 = vsel %vm1870, %v1869, %v1864
    %v1872 = vadd.s32 %v1783, 4294967192
    %v1873 = vlaneseq
    %v1874 = vshrl.u32 %v1873, 7
    %v1875 = vsub.s32 %v1872, %v1874
    %v1876 = vrot.slane %v383, %v1875
    %vm1877 = vcmask 917312
    %v1878 = vsel %vm1877, %v1876, %v1871
    %v1879 = vadd.s32 %v1783, 4294967184
    %v1880 = vlaneseq
    %v1881 = vshrl.u32 %v1880, 7
    %v1882 = vsub.s32 %v1879, %v1881
    %v1883 = vrot.slane %v386, %v1882
    %vm1884 = vcmask 982912
    %v1885 = vsel %vm1884, %v1883, %v1878
    %v1886 = vadd.s32 %v1783, 4294967176
    %v1887 = vlaneseq
    %v1888 = vshrl.u32 %v1887, 7
    %v1889 = vsub.s32 %v1886, %v1888
    %v1890 = vrot.slane %v389, %v1889
    %vm1891 = vcmask 1048512
    %v1892 = vsel %vm1891, %v1890, %v1885
    %v1893 = vlaneseq
    %v1894 = vshrl.u32 %v1893, 7
    %v1895 = vsub.s32 %v1783, %v1894
    %v1896 = vrot.slane %v392, %v1895
    %v1897 = vlaneseq
    %v1898 = vshrl.u32 %v1897, 7
    %v1899 = vsub.s32 %v1788, %v1898
    %v1900 = vrot.slane %v395, %v1899
    %v1901 = vsel %vm1793, %v1900, %v1896
    %v1902 = vlaneseq
    %v1903 = vshrl.u32 %v1902, 7
    %v1904 = vsub.s32 %v1795, %v1903
    %v1905 = vrot.slane %v398, %v1904
    %v1906 = vsel %vm1800, %v1905, %v1901
    %v1907 = vlaneseq
    %v1908 = vshrl.u32 %v1907, 7
    %v1909 = vsub.s32 %v1802, %v1908
    %v1910 = vrot.slane %v401, %v1909
    %v1911 = vsel %vm1807, %v1910, %v1906
    %v1912 = vlaneseq
    %v1913 = vshrl.u32 %v1912, 7
    %v1914 = vsub.s32 %v1809, %v1913
    %v1915 = vrot.slane %v404, %v1914
    %v1916 = vsel %vm1814, %v1915, %v1911
    %v1917 = vlaneseq
    %v1918 = vshrl.u32 %v1917, 7
    %v1919 = vsub.s32 %v1816, %v1918
    %v1920 = vrot.slane %v407, %v1919
    %v1921 = vsel %vm1821, %v1920, %v1916
    %v1922 = vlaneseq
    %v1923 = vshrl.u32 %v1922, 7
    %v1924 = vsub.s32 %v1823, %v1923
    %v1925 = vrot.slane %v410, %v1924
    %v1926 = vsel %vm1828, %v1925, %v1921
    %v1927 = vlaneseq
    %v1928 = vshrl.u32 %v1927, 7
    %v1929 = vsub.s32 %v1830, %v1928
    %v1930 = vrot.slane %v413, %v1929
    %v1931 = vsel %vm1835, %v1930, %v1926
    %v1932 = vlaneseq
    %v1933 = vshrl.u32 %v1932, 7
    %v1934 = vsub.s32 %v1837, %v1933
    %v1935 = vrot.slane %v416, %v1934
    %v1936 = vsel %vm1842, %v1935, %v1931
    %v1937 = vlaneseq
    %v1938 = vshrl.u32 %v1937, 7
    %v1939 = vsub.s32 %v1844, %v1938
    %v1940 = vrot.slane %v419, %v1939
    %v1941 = vsel %vm1849, %v1940, %v1936
    %v1942 = vlaneseq
    %v1943 = vshrl.u32 %v1942, 7
    %v1944 = vsub.s32 %v1851, %v1943
    %v1945 = vrot.slane %v422, %v1944
    %v1946 = vsel %vm1856, %v1945, %v1941
    %v1947 = vlaneseq
    %v1948 = vshrl.u32 %v1947, 7
    %v1949 = vsub.s32 %v1858, %v1948
    %v1950 = vrot.slane %v425, %v1949
    %v1951 = vsel %vm1863, %v1950, %v1946
    %v1952 = vlaneseq
    %v1953 = vshrl.u32 %v1952, 7
    %v1954 = vsub.s32 %v1865, %v1953
    %v1955 = vrot.slane %v428, %v1954
    %v1956 = vsel %vm1870, %v1955, %v1951
    %v1957 = vlaneseq
    %v1958 = vshrl.u32 %v1957, 7
    %v1959 = vsub.s32 %v1872, %v1958
    %v1960 = vrot.slane %v431, %v1959
    %v1961 = vsel %vm1877, %v1960, %v1956
    %v1962 = vlaneseq
    %v1963 = vshrl.u32 %v1962, 7
    %v1964 = vsub.s32 %v1879, %v1963
    %v1965 = vrot.slane %v434, %v1964
    %v1966 = vsel %vm1884, %v1965, %v1961
    %v1967 = vlaneseq
    %v1968 = vshrl.u32 %v1967, 7
    %v1969 = vsub.s32 %v1886, %v1968
    %v1970 = vrot.slane %v437, %v1969
    %v1971 = vsel %vm1891, %v1970, %v1966
    %v1972 = vlaneseq
    %v1973 = vshrl.u32 %v1972, 7
    %v1974 = vsub.s32 %v1783, %v1973
    %v1975 = vrot.slane %v440, %v1974
    %v1976 = vlaneseq
    %v1977 = vshrl.u32 %v1976, 7
    %v1978 = vsub.s32 %v1788, %v1977
    %v1979 = vrot.slane %v443, %v1978
    %v1980 = vsel %vm1793, %v1979, %v1975
    %v1981 = vlaneseq
    %v1982 = vshrl.u32 %v1981, 7
    %v1983 = vsub.s32 %v1795, %v1982
    %v1984 = vrot.slane %v446, %v1983
    %v1985 = vsel %vm1800, %v1984, %v1980
    %v1986 = vlaneseq
    %v1987 = vshrl.u32 %v1986, 7
    %v1988 = vsub.s32 %v1802, %v1987
    %v1989 = vrot.slane %v449, %v1988
    %v1990 = vsel %vm1807, %v1989, %v1985
    %v1991 = vlaneseq
    %v1992 = vshrl.u32 %v1991, 7
    %v1993 = vsub.s32 %v1809, %v1992
    %v1994 = vrot.slane %v452, %v1993
    %v1995 = vsel %vm1814, %v1994, %v1990
    %v1996 = vlaneseq
    %v1997 = vshrl.u32 %v1996, 7
    %v1998 = vsub.s32 %v1816, %v1997
    %v1999 = vrot.slane %v455, %v1998
    %v2000 = vsel %vm1821, %v1999, %v1995
    %v2001 = vlaneseq
    %v2002 = vshrl.u32 %v2001, 7
    %v2003 = vsub.s32 %v1823, %v2002
    %v2004 = vrot.slane %v458, %v2003
    %v2005 = vsel %vm1828, %v2004, %v2000
    %v2006 = vlaneseq
    %v2007 = vshrl.u32 %v2006, 7
    %v2008 = vsub.s32 %v1830, %v2007
    %v2009 = vrot.slane %v461, %v2008
    %v2010 = vsel %vm1835, %v2009, %v2005
    %v2011 = vlaneseq
    %v2012 = vshrl.u32 %v2011, 7
    %v2013 = vsub.s32 %v1837, %v2012
    %v2014 = vrot.slane %v464, %v2013
    %v2015 = vsel %vm1842, %v2014, %v2010
    %v2016 = vlaneseq
    %v2017 = vshrl.u32 %v2016, 7
    %v2018 = vsub.s32 %v1844, %v2017
    %v2019 = vrot.slane %v467, %v2018
    %v2020 = vsel %vm1849, %v2019, %v2015
    %v2021 = vlaneseq
    %v2022 = vshrl.u32 %v2021, 7
    %v2023 = vsub.s32 %v1851, %v2022
    %v2024 = vrot.slane %v470, %v2023
    %v2025 = vsel %vm1856, %v2024, %v2020
    %v2026 = vlaneseq
    %v2027 = vshrl.u32 %v2026, 7
    %v2028 = vsub.s32 %v1858, %v2027
    %v2029 = vrot.slane %v473, %v2028
    %v2030 = vsel %vm1863, %v2029, %v2025
    %v2031 = vlaneseq
    %v2032 = vshrl.u32 %v2031, 7
    %v2033 = vsub.s32 %v1865, %v2032
    %v2034 = vrot.slane %v476, %v2033
    %v2035 = vsel %vm1870, %v2034, %v2030
    %v2036 = vlaneseq
    %v2037 = vshrl.u32 %v2036, 7
    %v2038 = vsub.s32 %v1872, %v2037
    %v2039 = vrot.slane %v479, %v2038
    %v2040 = vsel %vm1877, %v2039, %v2035
    %v2041 = vlaneseq
    %v2042 = vshrl.u32 %v2041, 7
    %v2043 = vsub.s32 %v1879, %v2042
    %v2044 = vrot.slane %v482, %v2043
    %v2045 = vsel %vm1884, %v2044, %v2040
    %v2046 = vlaneseq
    %v2047 = vshrl.u32 %v2046, 7
    %v2048 = vsub.s32 %v1886, %v2047
    %v2049 = vrot.slane %v485, %v2048
    %v2050 = vsel %vm1891, %v2049, %v2045
    %v2051 = vlaneseq
    %v2052 = vshrl.u32 %v2051, 7
    %v2053 = vsub.s32 %v1783, %v2052
    %v2054 = vrot.slane %v488, %v2053
    %v2055 = vlaneseq
    %v2056 = vshrl.u32 %v2055, 7
    %v2057 = vsub.s32 %v1788, %v2056
    %v2058 = vrot.slane %v491, %v2057
    %v2059 = vsel %vm1793, %v2058, %v2054
    %v2060 = vlaneseq
    %v2061 = vshrl.u32 %v2060, 7
    %v2062 = vsub.s32 %v1795, %v2061
    %v2063 = vrot.slane %v494, %v2062
    %v2064 = vsel %vm1800, %v2063, %v2059
    %v2065 = vlaneseq
    %v2066 = vshrl.u32 %v2065, 7
    %v2067 = vsub.s32 %v1802, %v2066
    %v2068 = vrot.slane %v497, %v2067
    %v2069 = vsel %vm1807, %v2068, %v2064
    %v2070 = vlaneseq
    %v2071 = vshrl.u32 %v2070, 7
    %v2072 = vsub.s32 %v1809, %v2071
    %v2073 = vrot.slane %v500, %v2072
    %v2074 = vsel %vm1814, %v2073, %v2069
    %v2075 = vlaneseq
    %v2076 = vshrl.u32 %v2075, 7
    %v2077 = vsub.s32 %v1816, %v2076
    %v2078 = vrot.slane %v503, %v2077
    %v2079 = vsel %vm1821, %v2078, %v2074
    %v2080 = vlaneseq
    %v2081 = vshrl.u32 %v2080, 7
    %v2082 = vsub.s32 %v1823, %v2081
    %v2083 = vrot.slane %v506, %v2082
    %v2084 = vsel %vm1828, %v2083, %v2079
    %v2085 = vlaneseq
    %v2086 = vshrl.u32 %v2085, 7
    %v2087 = vsub.s32 %v1830, %v2086
    %v2088 = vrot.slane %v509, %v2087
    %v2089 = vsel %vm1835, %v2088, %v2084
    %v2090 = vlaneseq
    %v2091 = vshrl.u32 %v2090, 7
    %v2092 = vsub.s32 %v1837, %v2091
    %v2093 = vrot.slane %v512, %v2092
    %v2094 = vsel %vm1842, %v2093, %v2089
    %v2095 = vlaneseq
    %v2096 = vshrl.u32 %v2095, 7
    %v2097 = vsub.s32 %v1844, %v2096
    %v2098 = vrot.slane %v515, %v2097
    %v2099 = vsel %vm1849, %v2098, %v2094
    %v2100 = vlaneseq
    %v2101 = vshrl.u32 %v2100, 7
    %v2102 = vsub.s32 %v1851, %v2101
    %v2103 = vrot.slane %v518, %v2102
    %v2104 = vsel %vm1856, %v2103, %v2099
    %v2105 = vlaneseq
    %v2106 = vshrl.u32 %v2105, 7
    %v2107 = vsub.s32 %v1858, %v2106
    %v2108 = vrot.slane %v521, %v2107
    %v2109 = vsel %vm1863, %v2108, %v2104
    %v2110 = vlaneseq
    %v2111 = vshrl.u32 %v2110, 7
    %v2112 = vsub.s32 %v1865, %v2111
    %v2113 = vrot.slane %v524, %v2112
    %v2114 = vsel %vm1870, %v2113, %v2109
    %v2115 = vlaneseq
    %v2116 = vshrl.u32 %v2115, 7
    %v2117 = vsub.s32 %v1872, %v2116
    %v2118 = vrot.slane %v527, %v2117
    %v2119 = vsel %vm1877, %v2118, %v2114
    %v2120 = vlaneseq
    %v2121 = vshrl.u32 %v2120, 7
    %v2122 = vsub.s32 %v1879, %v2121
    %v2123 = vrot.slane %v530, %v2122
    %v2124 = vsel %vm1884, %v2123, %v2119
    %v2125 = vlaneseq
    %v2126 = vshrl.u32 %v2125, 7
    %v2127 = vsub.s32 %v1886, %v2126
    %v2128 = vrot.slane %v533, %v2127
    %v2129 = vsel %vm1891, %v2128, %v2124
    %v2130 = vlaneseq
    %v2131 = vshrl.u32 %v2130, 7
    %v2132 = vsub.s32 %v1783, %v2131
    %v2133 = vrot.slane %v536, %v2132
    %v2134 = vlaneseq
    %v2135 = vshrl.u32 %v2134, 7
    %v2136 = vsub.s32 %v1788, %v2135
    %v2137 = vrot.slane %v539, %v2136
    %v2138 = vsel %vm1793, %v2137, %v2133
    %v2139 = vlaneseq
    %v2140 = vshrl.u32 %v2139, 7
    %v2141 = vsub.s32 %v1795, %v2140
    %v2142 = vrot.slane %v542, %v2141
    %v2143 = vsel %vm1800, %v2142, %v2138
    %v2144 = vlaneseq
    %v2145 = vshrl.u32 %v2144, 7
    %v2146 = vsub.s32 %v1802, %v2145
    %v2147 = vrot.slane %v545, %v2146
    %v2148 = vsel %vm1807, %v2147, %v2143
    %v2149 = vlaneseq
    %v2150 = vshrl.u32 %v2149, 7
    %v2151 = vsub.s32 %v1809, %v2150
    %v2152 = vrot.slane %v548, %v2151
    %v2153 = vsel %vm1814, %v2152, %v2148
    %v2154 = vlaneseq
    %v2155 = vshrl.u32 %v2154, 7
    %v2156 = vsub.s32 %v1816, %v2155
    %v2157 = vrot.slane %v551, %v2156
    %v2158 = vsel %vm1821, %v2157, %v2153
    %v2159 = vlaneseq
    %v2160 = vshrl.u32 %v2159, 7
    %v2161 = vsub.s32 %v1823, %v2160
    %v2162 = vrot.slane %v554, %v2161
    %v2163 = vsel %vm1828, %v2162, %v2158
    %v2164 = vlaneseq
    %v2165 = vshrl.u32 %v2164, 7
    %v2166 = vsub.s32 %v1830, %v2165
    %v2167 = vrot.slane %v557, %v2166
    %v2168 = vsel %vm1835, %v2167, %v2163
    %v2169 = vlaneseq
    %v2170 = vshrl.u32 %v2169, 7
    %v2171 = vsub.s32 %v1837, %v2170
    %v2172 = vrot.slane %v560, %v2171
    %v2173 = vsel %vm1842, %v2172, %v2168
    %v2174 = vlaneseq
    %v2175 = vshrl.u32 %v2174, 7
    %v2176 = vsub.s32 %v1844, %v2175
    %v2177 = vrot.slane %v563, %v2176
    %v2178 = vsel %vm1849, %v2177, %v2173
    %v2179 = vlaneseq
    %v2180 = vshrl.u32 %v2179, 7
    %v2181 = vsub.s32 %v1851, %v2180
    %v2182 = vrot.slane %v566, %v2181
    %v2183 = vsel %vm1856, %v2182, %v2178
    %v2184 = vlaneseq
    %v2185 = vshrl.u32 %v2184, 7
    %v2186 = vsub.s32 %v1858, %v2185
    %v2187 = vrot.slane %v569, %v2186
    %v2188 = vsel %vm1863, %v2187, %v2183
    %v2189 = vlaneseq
    %v2190 = vshrl.u32 %v2189, 7
    %v2191 = vsub.s32 %v1865, %v2190
    %v2192 = vrot.slane %v572, %v2191
    %v2193 = vsel %vm1870, %v2192, %v2188
    %v2194 = vlaneseq
    %v2195 = vshrl.u32 %v2194, 7
    %v2196 = vsub.s32 %v1872, %v2195
    %v2197 = vrot.slane %v575, %v2196
    %v2198 = vsel %vm1877, %v2197, %v2193
    %v2199 = vlaneseq
    %v2200 = vshrl.u32 %v2199, 7
    %v2201 = vsub.s32 %v1879, %v2200
    %v2202 = vrot.slane %v578, %v2201
    %v2203 = vsel %vm1884, %v2202, %v2198
    %v2204 = vlaneseq
    %v2205 = vshrl.u32 %v2204, 7
    %v2206 = vsub.s32 %v1886, %v2205
    %v2207 = vrot.slane %v581, %v2206
    %v2208 = vsel %vm1891, %v2207, %v2203
    %v2209 = vlaneseq
    %v2210 = vshrl.u32 %v2209, 7
    %v2211 = vsub.s32 %v1783, %v2210
    %v2212 = vrot.slane %v584, %v2211
    %v2213 = vlaneseq
    %v2214 = vshrl.u32 %v2213, 7
    %v2215 = vsub.s32 %v1788, %v2214
    %v2216 = vrot.slane %v587, %v2215
    %v2217 = vsel %vm1793, %v2216, %v2212
    %v2218 = vlaneseq
    %v2219 = vshrl.u32 %v2218, 7
    %v2220 = vsub.s32 %v1795, %v2219
    %v2221 = vrot.slane %v590, %v2220
    %v2222 = vsel %vm1800, %v2221, %v2217
    %v2223 = vlaneseq
    %v2224 = vshrl.u32 %v2223, 7
    %v2225 = vsub.s32 %v1802, %v2224
    %v2226 = vrot.slane %v593, %v2225
    %v2227 = vsel %vm1807, %v2226, %v2222
    %v2228 = vlaneseq
    %v2229 = vshrl.u32 %v2228, 7
    %v2230 = vsub.s32 %v1809, %v2229
    %v2231 = vrot.slane %v596, %v2230
    %v2232 = vsel %vm1814, %v2231, %v2227
    %v2233 = vlaneseq
    %v2234 = vshrl.u32 %v2233, 7
    %v2235 = vsub.s32 %v1816, %v2234
    %v2236 = vrot.slane %v599, %v2235
    %v2237 = vsel %vm1821, %v2236, %v2232
    %v2238 = vlaneseq
    %v2239 = vshrl.u32 %v2238, 7
    %v2240 = vsub.s32 %v1823, %v2239
    %v2241 = vrot.slane %v602, %v2240
    %v2242 = vsel %vm1828, %v2241, %v2237
    %v2243 = vlaneseq
    %v2244 = vshrl.u32 %v2243, 7
    %v2245 = vsub.s32 %v1830, %v2244
    %v2246 = vrot.slane %v605, %v2245
    %v2247 = vsel %vm1835, %v2246, %v2242
    %v2248 = vlaneseq
    %v2249 = vshrl.u32 %v2248, 7
    %v2250 = vsub.s32 %v1837, %v2249
    %v2251 = vrot.slane %v608, %v2250
    %v2252 = vsel %vm1842, %v2251, %v2247
    %v2253 = vlaneseq
    %v2254 = vshrl.u32 %v2253, 7
    %v2255 = vsub.s32 %v1844, %v2254
    %v2256 = vrot.slane %v611, %v2255
    %v2257 = vsel %vm1849, %v2256, %v2252
    %v2258 = vlaneseq
    %v2259 = vshrl.u32 %v2258, 7
    %v2260 = vsub.s32 %v1851, %v2259
    %v2261 = vrot.slane %v614, %v2260
    %v2262 = vsel %vm1856, %v2261, %v2257
    %v2263 = vlaneseq
    %v2264 = vshrl.u32 %v2263, 7
    %v2265 = vsub.s32 %v1858, %v2264
    %v2266 = vrot.slane %v617, %v2265
    %v2267 = vsel %vm1863, %v2266, %v2262
    %v2268 = vlaneseq
    %v2269 = vshrl.u32 %v2268, 7
    %v2270 = vsub.s32 %v1865, %v2269
    %v2271 = vrot.slane %v620, %v2270
    %v2272 = vsel %vm1870, %v2271, %v2267
    %v2273 = vlaneseq
    %v2274 = vshrl.u32 %v2273, 7
    %v2275 = vsub.s32 %v1872, %v2274
    %v2276 = vrot.slane %v623, %v2275
    %v2277 = vsel %vm1877, %v2276, %v2272
    %v2278 = vlaneseq
    %v2279 = vshrl.u32 %v2278, 7
    %v2280 = vsub.s32 %v1879, %v2279
    %v2281 = vrot.slane %v626, %v2280
    %v2282 = vsel %vm1884, %v2281, %v2277
    %v2283 = vlaneseq
    %v2284 = vshrl.u32 %v2283, 7
    %v2285 = vsub.s32 %v1886, %v2284
    %v2286 = vrot.slane %v629, %v2285
    %v2287 = vsel %vm1891, %v2286, %v2282
    %v2288 = vlaneseq
    %v2289 = vshrl.u32 %v2288, 7
    %v2290 = vsub.s32 %v1783, %v2289
    %v2291 = vrot.slane %v632, %v2290
    %v2292 = vlaneseq
    %v2293 = vshrl.u32 %v2292, 7
    %v2294 = vsub.s32 %v1788, %v2293
    %v2295 = vrot.slane %v635, %v2294
    %v2296 = vsel %vm1793, %v2295, %v2291
    %v2297 = vlaneseq
    %v2298 = vshrl.u32 %v2297, 7
    %v2299 = vsub.s32 %v1795, %v2298
    %v2300 = vrot.slane %v638, %v2299
    %v2301 = vsel %vm1800, %v2300, %v2296
    %v2302 = vlaneseq
    %v2303 = vshrl.u32 %v2302, 7
    %v2304 = vsub.s32 %v1802, %v2303
    %v2305 = vrot.slane %v641, %v2304
    %v2306 = vsel %vm1807, %v2305, %v2301
    %v2307 = vlaneseq
    %v2308 = vshrl.u32 %v2307, 7
    %v2309 = vsub.s32 %v1809, %v2308
    %v2310 = vrot.slane %v644, %v2309
    %v2311 = vsel %vm1814, %v2310, %v2306
    %v2312 = vlaneseq
    %v2313 = vshrl.u32 %v2312, 7
    %v2314 = vsub.s32 %v1816, %v2313
    %v2315 = vrot.slane %v647, %v2314
    %v2316 = vsel %vm1821, %v2315, %v2311
    %v2317 = vlaneseq
    %v2318 = vshrl.u32 %v2317, 7
    %v2319 = vsub.s32 %v1823, %v2318
    %v2320 = vrot.slane %v650, %v2319
    %v2321 = vsel %vm1828, %v2320, %v2316
    %v2322 = vlaneseq
    %v2323 = vshrl.u32 %v2322, 7
    %v2324 = vsub.s32 %v1830, %v2323
    %v2325 = vrot.slane %v653, %v2324
    %v2326 = vsel %vm1835, %v2325, %v2321
    %v2327 = vlaneseq
    %v2328 = vshrl.u32 %v2327, 7
    %v2329 = vsub.s32 %v1837, %v2328
    %v2330 = vrot.slane %v656, %v2329
    %v2331 = vsel %vm1842, %v2330, %v2326
    %v2332 = vlaneseq
    %v2333 = vshrl.u32 %v2332, 7
    %v2334 = vsub.s32 %v1844, %v2333
    %v2335 = vrot.slane %v659, %v2334
    %v2336 = vsel %vm1849, %v2335, %v2331
    %v2337 = vlaneseq
    %v2338 = vshrl.u32 %v2337, 7
    %v2339 = vsub.s32 %v1851, %v2338
    %v2340 = vrot.slane %v662, %v2339
    %v2341 = vsel %vm1856, %v2340, %v2336
    %v2342 = vlaneseq
    %v2343 = vshrl.u32 %v2342, 7
    %v2344 = vsub.s32 %v1858, %v2343
    %v2345 = vrot.slane %v665, %v2344
    %v2346 = vsel %vm1863, %v2345, %v2341
    %v2347 = vlaneseq
    %v2348 = vshrl.u32 %v2347, 7
    %v2349 = vsub.s32 %v1865, %v2348
    %v2350 = vrot.slane %v668, %v2349
    %v2351 = vsel %vm1870, %v2350, %v2346
    %v2352 = vlaneseq
    %v2353 = vshrl.u32 %v2352, 7
    %v2354 = vsub.s32 %v1872, %v2353
    %v2355 = vrot.slane %v671, %v2354
    %v2356 = vsel %vm1877, %v2355, %v2351
    %v2357 = vlaneseq
    %v2358 = vshrl.u32 %v2357, 7
    %v2359 = vsub.s32 %v1879, %v2358
    %v2360 = vrot.slane %v674, %v2359
    %v2361 = vsel %vm1884, %v2360, %v2356
    %v2362 = vlaneseq
    %v2363 = vshrl.u32 %v2362, 7
    %v2364 = vsub.s32 %v1886, %v2363
    %v2365 = vrot.slane %v677, %v2364
    %v2366 = vsel %vm1891, %v2365, %v2361
    %v2367 = vlaneseq
    %v2368 = vshrl.u32 %v2367, 7
    %v2369 = vsub.s32 %v1783, %v2368
    %v2370 = vrot.slane %v680, %v2369
    %v2371 = vlaneseq
    %v2372 = vshrl.u32 %v2371, 7
    %v2373 = vsub.s32 %v1788, %v2372
    %v2374 = vrot.slane %v683, %v2373
    %v2375 = vsel %vm1793, %v2374, %v2370
    %v2376 = vlaneseq
    %v2377 = vshrl.u32 %v2376, 7
    %v2378 = vsub.s32 %v1795, %v2377
    %v2379 = vrot.slane %v686, %v2378
    %v2380 = vsel %vm1800, %v2379, %v2375
    %v2381 = vlaneseq
    %v2382 = vshrl.u32 %v2381, 7
    %v2383 = vsub.s32 %v1802, %v2382
    %v2384 = vrot.slane %v689, %v2383
    %v2385 = vsel %vm1807, %v2384, %v2380
    %v2386 = vlaneseq
    %v2387 = vshrl.u32 %v2386, 7
    %v2388 = vsub.s32 %v1809, %v2387
    %v2389 = vrot.slane %v692, %v2388
    %v2390 = vsel %vm1814, %v2389, %v2385
    %v2391 = vlaneseq
    %v2392 = vshrl.u32 %v2391, 7
    %v2393 = vsub.s32 %v1816, %v2392
    %v2394 = vrot.slane %v695, %v2393
    %v2395 = vsel %vm1821, %v2394, %v2390
    %v2396 = vlaneseq
    %v2397 = vshrl.u32 %v2396, 7
    %v2398 = vsub.s32 %v1823, %v2397
    %v2399 = vrot.slane %v698, %v2398
    %v2400 = vsel %vm1828, %v2399, %v2395
    %v2401 = vlaneseq
    %v2402 = vshrl.u32 %v2401, 7
    %v2403 = vsub.s32 %v1830, %v2402
    %v2404 = vrot.slane %v701, %v2403
    %v2405 = vsel %vm1835, %v2404, %v2400
    %v2406 = vlaneseq
    %v2407 = vshrl.u32 %v2406, 7
    %v2408 = vsub.s32 %v1837, %v2407
    %v2409 = vrot.slane %v704, %v2408
    %v2410 = vsel %vm1842, %v2409, %v2405
    %v2411 = vlaneseq
    %v2412 = vshrl.u32 %v2411, 7
    %v2413 = vsub.s32 %v1844, %v2412
    %v2414 = vrot.slane %v707, %v2413
    %v2415 = vsel %vm1849, %v2414, %v2410
    %v2416 = vlaneseq
    %v2417 = vshrl.u32 %v2416, 7
    %v2418 = vsub.s32 %v1851, %v2417
    %v2419 = vrot.slane %v710, %v2418
    %v2420 = vsel %vm1856, %v2419, %v2415
    %v2421 = vlaneseq
    %v2422 = vshrl.u32 %v2421, 7
    %v2423 = vsub.s32 %v1858, %v2422
    %v2424 = vrot.slane %v713, %v2423
    %v2425 = vsel %vm1863, %v2424, %v2420
    %v2426 = vlaneseq
    %v2427 = vshrl.u32 %v2426, 7
    %v2428 = vsub.s32 %v1865, %v2427
    %v2429 = vrot.slane %v716, %v2428
    %v2430 = vsel %vm1870, %v2429, %v2425
    %v2431 = vlaneseq
    %v2432 = vshrl.u32 %v2431, 7
    %v2433 = vsub.s32 %v1872, %v2432
    %v2434 = vrot.slane %v719, %v2433
    %v2435 = vsel %vm1877, %v2434, %v2430
    %v2436 = vlaneseq
    %v2437 = vshrl.u32 %v2436, 7
    %v2438 = vsub.s32 %v1879, %v2437
    %v2439 = vrot.slane %v722, %v2438
    %v2440 = vsel %vm1884, %v2439, %v2435
    %v2441 = vlaneseq
    %v2442 = vshrl.u32 %v2441, 7
    %v2443 = vsub.s32 %v1886, %v2442
    %v2444 = vrot.slane %v725, %v2443
    %v2445 = vsel %vm1891, %v2444, %v2440
    %v2446 = vlaneseq
    %v2447 = vshrl.u32 %v2446, 7
    %v2448 = vsub.s32 %v1783, %v2447
    %v2449 = vrot.slane %v728, %v2448
    %v2450 = vlaneseq
    %v2451 = vshrl.u32 %v2450, 7
    %v2452 = vsub.s32 %v1788, %v2451
    %v2453 = vrot.slane %v731, %v2452
    %v2454 = vsel %vm1793, %v2453, %v2449
    %v2455 = vlaneseq
    %v2456 = vshrl.u32 %v2455, 7
    %v2457 = vsub.s32 %v1795, %v2456
    %v2458 = vrot.slane %v734, %v2457
    %v2459 = vsel %vm1800, %v2458, %v2454
    %v2460 = vlaneseq
    %v2461 = vshrl.u32 %v2460, 7
    %v2462 = vsub.s32 %v1802, %v2461
    %v2463 = vrot.slane %v737, %v2462
    %v2464 = vsel %vm1807, %v2463, %v2459
    %v2465 = vlaneseq
    %v2466 = vshrl.u32 %v2465, 7
    %v2467 = vsub.s32 %v1809, %v2466
    %v2468 = vrot.slane %v740, %v2467
    %v2469 = vsel %vm1814, %v2468, %v2464
    %v2470 = vlaneseq
    %v2471 = vshrl.u32 %v2470, 7
    %v2472 = vsub.s32 %v1816, %v2471
    %v2473 = vrot.slane %v743, %v2472
    %v2474 = vsel %vm1821, %v2473, %v2469
    %v2475 = vlaneseq
    %v2476 = vshrl.u32 %v2475, 7
    %v2477 = vsub.s32 %v1823, %v2476
    %v2478 = vrot.slane %v746, %v2477
    %v2479 = vsel %vm1828, %v2478, %v2474
    %v2480 = vlaneseq
    %v2481 = vshrl.u32 %v2480, 7
    %v2482 = vsub.s32 %v1830, %v2481
    %v2483 = vrot.slane %v749, %v2482
    %v2484 = vsel %vm1835, %v2483, %v2479
    %v2485 = vlaneseq
    %v2486 = vshrl.u32 %v2485, 7
    %v2487 = vsub.s32 %v1837, %v2486
    %v2488 = vrot.slane %v752, %v2487
    %v2489 = vsel %vm1842, %v2488, %v2484
    %v2490 = vlaneseq
    %v2491 = vshrl.u32 %v2490, 7
    %v2492 = vsub.s32 %v1844, %v2491
    %v2493 = vrot.slane %v755, %v2492
    %v2494 = vsel %vm1849, %v2493, %v2489
    %v2495 = vlaneseq
    %v2496 = vshrl.u32 %v2495, 7
    %v2497 = vsub.s32 %v1851, %v2496
    %v2498 = vrot.slane %v758, %v2497
    %v2499 = vsel %vm1856, %v2498, %v2494
    %v2500 = vlaneseq
    %v2501 = vshrl.u32 %v2500, 7
    %v2502 = vsub.s32 %v1858, %v2501
    %v2503 = vrot.slane %v761, %v2502
    %v2504 = vsel %vm1863, %v2503, %v2499
    %v2505 = vlaneseq
    %v2506 = vshrl.u32 %v2505, 7
    %v2507 = vsub.s32 %v1865, %v2506
    %v2508 = vrot.slane %v764, %v2507
    %v2509 = vsel %vm1870, %v2508, %v2504
    %v2510 = vlaneseq
    %v2511 = vshrl.u32 %v2510, 7
    %v2512 = vsub.s32 %v1872, %v2511
    %v2513 = vrot.slane %v767, %v2512
    %v2514 = vsel %vm1877, %v2513, %v2509
    %v2515 = vlaneseq
    %v2516 = vshrl.u32 %v2515, 7
    %v2517 = vsub.s32 %v1879, %v2516
    %v2518 = vrot.slane %v770, %v2517
    %v2519 = vsel %vm1884, %v2518, %v2514
    %v2520 = vlaneseq
    %v2521 = vshrl.u32 %v2520, 7
    %v2522 = vsub.s32 %v1886, %v2521
    %v2523 = vrot.slane %v773, %v2522
    %v2524 = vsel %vm1891, %v2523, %v2519
    %v2525 = vlaneseq
    %v2526 = vshrl.u32 %v2525, 7
    %v2527 = vsub.s32 %v1783, %v2526
    %v2528 = vrot.slane %v776, %v2527
    %v2529 = vlaneseq
    %v2530 = vshrl.u32 %v2529, 7
    %v2531 = vsub.s32 %v1788, %v2530
    %v2532 = vrot.slane %v779, %v2531
    %v2533 = vsel %vm1793, %v2532, %v2528
    %v2534 = vlaneseq
    %v2535 = vshrl.u32 %v2534, 7
    %v2536 = vsub.s32 %v1795, %v2535
    %v2537 = vrot.slane %v782, %v2536
    %v2538 = vsel %vm1800, %v2537, %v2533
    %v2539 = vlaneseq
    %v2540 = vshrl.u32 %v2539, 7
    %v2541 = vsub.s32 %v1802, %v2540
    %v2542 = vrot.slane %v785, %v2541
    %v2543 = vsel %vm1807, %v2542, %v2538
    %v2544 = vlaneseq
    %v2545 = vshrl.u32 %v2544, 7
    %v2546 = vsub.s32 %v1809, %v2545
    %v2547 = vrot.slane %v788, %v2546
    %v2548 = vsel %vm1814, %v2547, %v2543
    %v2549 = vlaneseq
    %v2550 = vshrl.u32 %v2549, 7
    %v2551 = vsub.s32 %v1816, %v2550
    %v2552 = vrot.slane %v791, %v2551
    %v2553 = vsel %vm1821, %v2552, %v2548
    %v2554 = vlaneseq
    %v2555 = vshrl.u32 %v2554, 7
    %v2556 = vsub.s32 %v1823, %v2555
    %v2557 = vrot.slane %v794, %v2556
    %v2558 = vsel %vm1828, %v2557, %v2553
    %v2559 = vlaneseq
    %v2560 = vshrl.u32 %v2559, 7
    %v2561 = vsub.s32 %v1830, %v2560
    %v2562 = vrot.slane %v797, %v2561
    %v2563 = vsel %vm1835, %v2562, %v2558
    %v2564 = vlaneseq
    %v2565 = vshrl.u32 %v2564, 7
    %v2566 = vsub.s32 %v1837, %v2565
    %v2567 = vrot.slane %v800, %v2566
    %v2568 = vsel %vm1842, %v2567, %v2563
    %v2569 = vlaneseq
    %v2570 = vshrl.u32 %v2569, 7
    %v2571 = vsub.s32 %v1844, %v2570
    %v2572 = vrot.slane %v803, %v2571
    %v2573 = vsel %vm1849, %v2572, %v2568
    %v2574 = vlaneseq
    %v2575 = vshrl.u32 %v2574, 7
    %v2576 = vsub.s32 %v1851, %v2575
    %v2577 = vrot.slane %v806, %v2576
    %v2578 = vsel %vm1856, %v2577, %v2573
    %v2579 = vlaneseq
    %v2580 = vshrl.u32 %v2579, 7
    %v2581 = vsub.s32 %v1858, %v2580
    %v2582 = vrot.slane %v809, %v2581
    %v2583 = vsel %vm1863, %v2582, %v2578
    %v2584 = vlaneseq
    %v2585 = vshrl.u32 %v2584, 7
    %v2586 = vsub.s32 %v1865, %v2585
    %v2587 = vrot.slane %v812, %v2586
    %v2588 = vsel %vm1870, %v2587, %v2583
    %v2589 = vlaneseq
    %v2590 = vshrl.u32 %v2589, 7
    %v2591 = vsub.s32 %v1872, %v2590
    %v2592 = vrot.slane %v815, %v2591
    %v2593 = vsel %vm1877, %v2592, %v2588
    %v2594 = vlaneseq
    %v2595 = vshrl.u32 %v2594, 7
    %v2596 = vsub.s32 %v1879, %v2595
    %v2597 = vrot.slane %v818, %v2596
    %v2598 = vsel %vm1884, %v2597, %v2593
    %v2599 = vlaneseq
    %v2600 = vshrl.u32 %v2599, 7
    %v2601 = vsub.s32 %v1886, %v2600
    %v2602 = vrot.slane %v821, %v2601
    %v2603 = vsel %vm1891, %v2602, %v2598
    %v2604 = vlaneseq
    %v2605 = vshrl.u32 %v2604, 7
    %v2606 = vsub.s32 %v1783, %v2605
    %v2607 = vrot.slane %v824, %v2606
    %v2608 = vlaneseq
    %v2609 = vshrl.u32 %v2608, 7
    %v2610 = vsub.s32 %v1788, %v2609
    %v2611 = vrot.slane %v827, %v2610
    %v2612 = vsel %vm1793, %v2611, %v2607
    %v2613 = vlaneseq
    %v2614 = vshrl.u32 %v2613, 7
    %v2615 = vsub.s32 %v1795, %v2614
    %v2616 = vrot.slane %v830, %v2615
    %v2617 = vsel %vm1800, %v2616, %v2612
    %v2618 = vlaneseq
    %v2619 = vshrl.u32 %v2618, 7
    %v2620 = vsub.s32 %v1802, %v2619
    %v2621 = vrot.slane %v833, %v2620
    %v2622 = vsel %vm1807, %v2621, %v2617
    %v2623 = vlaneseq
    %v2624 = vshrl.u32 %v2623, 7
    %v2625 = vsub.s32 %v1809, %v2624
    %v2626 = vrot.slane %v836, %v2625
    %v2627 = vsel %vm1814, %v2626, %v2622
    %v2628 = vlaneseq
    %v2629 = vshrl.u32 %v2628, 7
    %v2630 = vsub.s32 %v1816, %v2629
    %v2631 = vrot.slane %v839, %v2630
    %v2632 = vsel %vm1821, %v2631, %v2627
    %v2633 = vlaneseq
    %v2634 = vshrl.u32 %v2633, 7
    %v2635 = vsub.s32 %v1823, %v2634
    %v2636 = vrot.slane %v842, %v2635
    %v2637 = vsel %vm1828, %v2636, %v2632
    %v2638 = vlaneseq
    %v2639 = vshrl.u32 %v2638, 7
    %v2640 = vsub.s32 %v1830, %v2639
    %v2641 = vrot.slane %v845, %v2640
    %v2642 = vsel %vm1835, %v2641, %v2637
    %v2643 = vlaneseq
    %v2644 = vshrl.u32 %v2643, 7
    %v2645 = vsub.s32 %v1837, %v2644
    %v2646 = vrot.slane %v848, %v2645
    %v2647 = vsel %vm1842, %v2646, %v2642
    %v2648 = vlaneseq
    %v2649 = vshrl.u32 %v2648, 7
    %v2650 = vsub.s32 %v1844, %v2649
    %v2651 = vrot.slane %v851, %v2650
    %v2652 = vsel %vm1849, %v2651, %v2647
    %v2653 = vlaneseq
    %v2654 = vshrl.u32 %v2653, 7
    %v2655 = vsub.s32 %v1851, %v2654
    %v2656 = vrot.slane %v854, %v2655
    %v2657 = vsel %vm1856, %v2656, %v2652
    %v2658 = vlaneseq
    %v2659 = vshrl.u32 %v2658, 7
    %v2660 = vsub.s32 %v1858, %v2659
    %v2661 = vrot.slane %v857, %v2660
    %v2662 = vsel %vm1863, %v2661, %v2657
    %v2663 = vlaneseq
    %v2664 = vshrl.u32 %v2663, 7
    %v2665 = vsub.s32 %v1865, %v2664
    %v2666 = vrot.slane %v860, %v2665
    %v2667 = vsel %vm1870, %v2666, %v2662
    %v2668 = vlaneseq
    %v2669 = vshrl.u32 %v2668, 7
    %v2670 = vsub.s32 %v1872, %v2669
    %v2671 = vrot.slane %v863, %v2670
    %v2672 = vsel %vm1877, %v2671, %v2667
    %v2673 = vlaneseq
    %v2674 = vshrl.u32 %v2673, 7
    %v2675 = vsub.s32 %v1879, %v2674
    %v2676 = vrot.slane %v866, %v2675
    %v2677 = vsel %vm1884, %v2676, %v2672
    %v2678 = vlaneseq
    %v2679 = vshrl.u32 %v2678, 7
    %v2680 = vsub.s32 %v1886, %v2679
    %v2681 = vrot.slane %v869, %v2680
    %v2682 = vsel %vm1891, %v2681, %v2677
    %v2683 = vlaneseq
    %v2684 = vshrl.u32 %v2683, 7
    %v2685 = vsub.s32 %v1783, %v2684
    %v2686 = vrot.slane %v872, %v2685
    %v2687 = vlaneseq
    %v2688 = vshrl.u32 %v2687, 7
    %v2689 = vsub.s32 %v1788, %v2688
    %v2690 = vrot.slane %v875, %v2689
    %v2691 = vsel %vm1793, %v2690, %v2686
    %v2692 = vlaneseq
    %v2693 = vshrl.u32 %v2692, 7
    %v2694 = vsub.s32 %v1795, %v2693
    %v2695 = vrot.slane %v878, %v2694
    %v2696 = vsel %vm1800, %v2695, %v2691
    %v2697 = vlaneseq
    %v2698 = vshrl.u32 %v2697, 7
    %v2699 = vsub.s32 %v1802, %v2698
    %v2700 = vrot.slane %v881, %v2699
    %v2701 = vsel %vm1807, %v2700, %v2696
    %v2702 = vlaneseq
    %v2703 = vshrl.u32 %v2702, 7
    %v2704 = vsub.s32 %v1809, %v2703
    %v2705 = vrot.slane %v884, %v2704
    %v2706 = vsel %vm1814, %v2705, %v2701
    %v2707 = vlaneseq
    %v2708 = vshrl.u32 %v2707, 7
    %v2709 = vsub.s32 %v1816, %v2708
    %v2710 = vrot.slane %v887, %v2709
    %v2711 = vsel %vm1821, %v2710, %v2706
    %v2712 = vlaneseq
    %v2713 = vshrl.u32 %v2712, 7
    %v2714 = vsub.s32 %v1823, %v2713
    %v2715 = vrot.slane %v890, %v2714
    %v2716 = vsel %vm1828, %v2715, %v2711
    %v2717 = vlaneseq
    %v2718 = vshrl.u32 %v2717, 7
    %v2719 = vsub.s32 %v1830, %v2718
    %v2720 = vrot.slane %v893, %v2719
    %v2721 = vsel %vm1835, %v2720, %v2716
    %v2722 = vlaneseq
    %v2723 = vshrl.u32 %v2722, 7
    %v2724 = vsub.s32 %v1837, %v2723
    %v2725 = vrot.slane %v896, %v2724
    %v2726 = vsel %vm1842, %v2725, %v2721
    %v2727 = vlaneseq
    %v2728 = vshrl.u32 %v2727, 7
    %v2729 = vsub.s32 %v1844, %v2728
    %v2730 = vrot.slane %v899, %v2729
    %v2731 = vsel %vm1849, %v2730, %v2726
    %v2732 = vlaneseq
    %v2733 = vshrl.u32 %v2732, 7
    %v2734 = vsub.s32 %v1851, %v2733
    %v2735 = vrot.slane %v902, %v2734
    %v2736 = vsel %vm1856, %v2735, %v2731
    %v2737 = vlaneseq
    %v2738 = vshrl.u32 %v2737, 7
    %v2739 = vsub.s32 %v1858, %v2738
    %v2740 = vrot.slane %v905, %v2739
    %v2741 = vsel %vm1863, %v2740, %v2736
    %v2742 = vlaneseq
    %v2743 = vshrl.u32 %v2742, 7
    %v2744 = vsub.s32 %v1865, %v2743
    %v2745 = vrot.slane %v908, %v2744
    %v2746 = vsel %vm1870, %v2745, %v2741
    %v2747 = vlaneseq
    %v2748 = vshrl.u32 %v2747, 7
    %v2749 = vsub.s32 %v1872, %v2748
    %v2750 = vrot.slane %v911, %v2749
    %v2751 = vsel %vm1877, %v2750, %v2746
    %v2752 = vlaneseq
    %v2753 = vshrl.u32 %v2752, 7
    %v2754 = vsub.s32 %v1879, %v2753
    %v2755 = vrot.slane %v914, %v2754
    %v2756 = vsel %vm1884, %v2755, %v2751
    %v2757 = vlaneseq
    %v2758 = vshrl.u32 %v2757, 7
    %v2759 = vsub.s32 %v1886, %v2758
    %v2760 = vrot.slane %v917, %v2759
    %v2761 = vsel %vm1891, %v2760, %v2756
    %v2762 = vlaneseq
    %v2763 = vshrl.u32 %v2762, 7
    %v2764 = vsub.s32 %v1783, %v2763
    %v2765 = vrot.slane %v920, %v2764
    %v2766 = vlaneseq
    %v2767 = vshrl.u32 %v2766, 7
    %v2768 = vsub.s32 %v1788, %v2767
    %v2769 = vrot.slane %v923, %v2768
    %v2770 = vsel %vm1793, %v2769, %v2765
    %v2771 = vlaneseq
    %v2772 = vshrl.u32 %v2771, 7
    %v2773 = vsub.s32 %v1795, %v2772
    %v2774 = vrot.slane %v926, %v2773
    %v2775 = vsel %vm1800, %v2774, %v2770
    %v2776 = vlaneseq
    %v2777 = vshrl.u32 %v2776, 7
    %v2778 = vsub.s32 %v1802, %v2777
    %v2779 = vrot.slane %v929, %v2778
    %v2780 = vsel %vm1807, %v2779, %v2775
    %v2781 = vlaneseq
    %v2782 = vshrl.u32 %v2781, 7
    %v2783 = vsub.s32 %v1809, %v2782
    %v2784 = vrot.slane %v932, %v2783
    %v2785 = vsel %vm1814, %v2784, %v2780
    %v2786 = vlaneseq
    %v2787 = vshrl.u32 %v2786, 7
    %v2788 = vsub.s32 %v1816, %v2787
    %v2789 = vrot.slane %v935, %v2788
    %v2790 = vsel %vm1821, %v2789, %v2785
    %v2791 = vlaneseq
    %v2792 = vshrl.u32 %v2791, 7
    %v2793 = vsub.s32 %v1823, %v2792
    %v2794 = vrot.slane %v938, %v2793
    %v2795 = vsel %vm1828, %v2794, %v2790
    %v2796 = vlaneseq
    %v2797 = vshrl.u32 %v2796, 7
    %v2798 = vsub.s32 %v1830, %v2797
    %v2799 = vrot.slane %v941, %v2798
    %v2800 = vsel %vm1835, %v2799, %v2795
    %v2801 = vlaneseq
    %v2802 = vshrl.u32 %v2801, 7
    %v2803 = vsub.s32 %v1837, %v2802
    %v2804 = vrot.slane %v944, %v2803
    %v2805 = vsel %vm1842, %v2804, %v2800
    %v2806 = vlaneseq
    %v2807 = vshrl.u32 %v2806, 7
    %v2808 = vsub.s32 %v1844, %v2807
    %v2809 = vrot.slane %v947, %v2808
    %v2810 = vsel %vm1849, %v2809, %v2805
    %v2811 = vlaneseq
    %v2812 = vshrl.u32 %v2811, 7
    %v2813 = vsub.s32 %v1851, %v2812
    %v2814 = vrot.slane %v950, %v2813
    %v2815 = vsel %vm1856, %v2814, %v2810
    %v2816 = vlaneseq
    %v2817 = vshrl.u32 %v2816, 7
    %v2818 = vsub.s32 %v1858, %v2817
    %v2819 = vrot.slane %v953, %v2818
    %v2820 = vsel %vm1863, %v2819, %v2815
    %v2821 = vlaneseq
    %v2822 = vshrl.u32 %v2821, 7
    %v2823 = vsub.s32 %v1865, %v2822
    %v2824 = vrot.slane %v956, %v2823
    %v2825 = vsel %vm1870, %v2824, %v2820
    %v2826 = vlaneseq
    %v2827 = vshrl.u32 %v2826, 7
    %v2828 = vsub.s32 %v1872, %v2827
    %v2829 = vrot.slane %v959, %v2828
    %v2830 = vsel %vm1877, %v2829, %v2825
    %v2831 = vlaneseq
    %v2832 = vshrl.u32 %v2831, 7
    %v2833 = vsub.s32 %v1879, %v2832
    %v2834 = vrot.slane %v962, %v2833
    %v2835 = vsel %vm1884, %v2834, %v2830
    %v2836 = vlaneseq
    %v2837 = vshrl.u32 %v2836, 7
    %v2838 = vsub.s32 %v1886, %v2837
    %v2839 = vrot.slane %v965, %v2838
    %v2840 = vsel %vm1891, %v2839, %v2835
    %v2841 = vlaneseq
    %v2842 = vshrl.u32 %v2841, 7
    %v2843 = vsub.s32 %v1783, %v2842
    %v2844 = vrot.slane %v968, %v2843
    %v2845 = vlaneseq
    %v2846 = vshrl.u32 %v2845, 7
    %v2847 = vsub.s32 %v1788, %v2846
    %v2848 = vrot.slane %v971, %v2847
    %v2849 = vsel %vm1793, %v2848, %v2844
    %v2850 = vlaneseq
    %v2851 = vshrl.u32 %v2850, 7
    %v2852 = vsub.s32 %v1795, %v2851
    %v2853 = vrot.slane %v974, %v2852
    %v2854 = vsel %vm1800, %v2853, %v2849
    %v2855 = vlaneseq
    %v2856 = vshrl.u32 %v2855, 7
    %v2857 = vsub.s32 %v1802, %v2856
    %v2858 = vrot.slane %v977, %v2857
    %v2859 = vsel %vm1807, %v2858, %v2854
    %v2860 = vlaneseq
    %v2861 = vshrl.u32 %v2860, 7
    %v2862 = vsub.s32 %v1809, %v2861
    %v2863 = vrot.slane %v980, %v2862
    %v2864 = vsel %vm1814, %v2863, %v2859
    %v2865 = vlaneseq
    %v2866 = vshrl.u32 %v2865, 7
    %v2867 = vsub.s32 %v1816, %v2866
    %v2868 = vrot.slane %v983, %v2867
    %v2869 = vsel %vm1821, %v2868, %v2864
    %v2870 = vlaneseq
    %v2871 = vshrl.u32 %v2870, 7
    %v2872 = vsub.s32 %v1823, %v2871
    %v2873 = vrot.slane %v986, %v2872
    %v2874 = vsel %vm1828, %v2873, %v2869
    %v2875 = vlaneseq
    %v2876 = vshrl.u32 %v2875, 7
    %v2877 = vsub.s32 %v1830, %v2876
    %v2878 = vrot.slane %v989, %v2877
    %v2879 = vsel %vm1835, %v2878, %v2874
    %v2880 = vlaneseq
    %v2881 = vshrl.u32 %v2880, 7
    %v2882 = vsub.s32 %v1837, %v2881
    %v2883 = vrot.slane %v992, %v2882
    %v2884 = vsel %vm1842, %v2883, %v2879
    %v2885 = vlaneseq
    %v2886 = vshrl.u32 %v2885, 7
    %v2887 = vsub.s32 %v1844, %v2886
    %v2888 = vrot.slane %v995, %v2887
    %v2889 = vsel %vm1849, %v2888, %v2884
    %v2890 = vlaneseq
    %v2891 = vshrl.u32 %v2890, 7
    %v2892 = vsub.s32 %v1851, %v2891
    %v2893 = vrot.slane %v998, %v2892
    %v2894 = vsel %vm1856, %v2893, %v2889
    %v2895 = vlaneseq
    %v2896 = vshrl.u32 %v2895, 7
    %v2897 = vsub.s32 %v1858, %v2896
    %v2898 = vrot.slane %v1001, %v2897
    %v2899 = vsel %vm1863, %v2898, %v2894
    %v2900 = vlaneseq
    %v2901 = vshrl.u32 %v2900, 7
    %v2902 = vsub.s32 %v1865, %v2901
    %v2903 = vrot.slane %v1004, %v2902
    %v2904 = vsel %vm1870, %v2903, %v2899
    %v2905 = vlaneseq
    %v2906 = vshrl.u32 %v2905, 7
    %v2907 = vsub.s32 %v1872, %v2906
    %v2908 = vrot.slane %v1007, %v2907
    %v2909 = vsel %vm1877, %v2908, %v2904
    %v2910 = vlaneseq
    %v2911 = vshrl.u32 %v2910, 7
    %v2912 = vsub.s32 %v1879, %v2911
    %v2913 = vrot.slane %v1010, %v2912
    %v2914 = vsel %vm1884, %v2913, %v2909
    %v2915 = vlaneseq
    %v2916 = vshrl.u32 %v2915, 7
    %v2917 = vsub.s32 %v1886, %v2916
    %v2918 = vrot.slane %v1013, %v2917
    %v2919 = vsel %vm1891, %v2918, %v2914
    %v2920 = vlaneseq
    %v2921 = vshrl.u32 %v2920, 7
    %v2922 = vsub.s32 %v1783, %v2921
    %v2923 = vrot.slane %v1016, %v2922
    %v2924 = vlaneseq
    %v2925 = vshrl.u32 %v2924, 7
    %v2926 = vsub.s32 %v1788, %v2925
    %v2927 = vrot.slane %v1019, %v2926
    %v2928 = vsel %vm1793, %v2927, %v2923
    %v2929 = vlaneseq
    %v2930 = vshrl.u32 %v2929, 7
    %v2931 = vsub.s32 %v1795, %v2930
    %v2932 = vrot.slane %v1022, %v2931
    %v2933 = vsel %vm1800, %v2932, %v2928
    %v2934 = vlaneseq
    %v2935 = vshrl.u32 %v2934, 7
    %v2936 = vsub.s32 %v1802, %v2935
    %v2937 = vrot.slane %v1025, %v2936
    %v2938 = vsel %vm1807, %v2937, %v2933
    %v2939 = vlaneseq
    %v2940 = vshrl.u32 %v2939, 7
    %v2941 = vsub.s32 %v1809, %v2940
    %v2942 = vrot.slane %v1028, %v2941
    %v2943 = vsel %vm1814, %v2942, %v2938
    %v2944 = vlaneseq
    %v2945 = vshrl.u32 %v2944, 7
    %v2946 = vsub.s32 %v1816, %v2945
    %v2947 = vrot.slane %v1031, %v2946
    %v2948 = vsel %vm1821, %v2947, %v2943
    %v2949 = vlaneseq
    %v2950 = vshrl.u32 %v2949, 7
    %v2951 = vsub.s32 %v1823, %v2950
    %v2952 = vrot.slane %v1034, %v2951
    %v2953 = vsel %vm1828, %v2952, %v2948
    %v2954 = vlaneseq
    %v2955 = vshrl.u32 %v2954, 7
    %v2956 = vsub.s32 %v1830, %v2955
    %v2957 = vrot.slane %v1037, %v2956
    %v2958 = vsel %vm1835, %v2957, %v2953
    %v2959 = vlaneseq
    %v2960 = vshrl.u32 %v2959, 7
    %v2961 = vsub.s32 %v1837, %v2960
    %v2962 = vrot.slane %v1040, %v2961
    %v2963 = vsel %vm1842, %v2962, %v2958
    %v2964 = vlaneseq
    %v2965 = vshrl.u32 %v2964, 7
    %v2966 = vsub.s32 %v1844, %v2965
    %v2967 = vrot.slane %v1043, %v2966
    %v2968 = vsel %vm1849, %v2967, %v2963
    %v2969 = vlaneseq
    %v2970 = vshrl.u32 %v2969, 7
    %v2971 = vsub.s32 %v1851, %v2970
    %v2972 = vrot.slane %v1046, %v2971
    %v2973 = vsel %vm1856, %v2972, %v2968
    %v2974 = vlaneseq
    %v2975 = vshrl.u32 %v2974, 7
    %v2976 = vsub.s32 %v1858, %v2975
    %v2977 = vrot.slane %v1049, %v2976
    %v2978 = vsel %vm1863, %v2977, %v2973
    %v2979 = vlaneseq
    %v2980 = vshrl.u32 %v2979, 7
    %v2981 = vsub.s32 %v1865, %v2980
    %v2982 = vrot.slane %v1052, %v2981
    %v2983 = vsel %vm1870, %v2982, %v2978
    %v2984 = vlaneseq
    %v2985 = vshrl.u32 %v2984, 7
    %v2986 = vsub.s32 %v1872, %v2985
    %v2987 = vrot.slane %v1055, %v2986
    %v2988 = vsel %vm1877, %v2987, %v2983
    %v2989 = vlaneseq
    %v2990 = vshrl.u32 %v2989, 7
    %v2991 = vsub.s32 %v1879, %v2990
    %v2992 = vrot.slane %v1058, %v2991
    %v2993 = vsel %vm1884, %v2992, %v2988
    %v2994 = vlaneseq
    %v2995 = vshrl.u32 %v2994, 7
    %v2996 = vsub.s32 %v1886, %v2995
    %v2997 = vrot.slane %v1061, %v2996
    %v2998 = vsel %vm1891, %v2997, %v2993
    %v2999 = vlaneseq
    %v3000 = vshrl.u32 %v2999, 7
    %v3001 = vsub.s32 %v1783, %v3000
    %v3002 = vrot.slane %v1064, %v3001
    %v3003 = vlaneseq
    %v3004 = vshrl.u32 %v3003, 7
    %v3005 = vsub.s32 %v1788, %v3004
    %v3006 = vrot.slane %v1067, %v3005
    %v3007 = vsel %vm1793, %v3006, %v3002
    %v3008 = vlaneseq
    %v3009 = vshrl.u32 %v3008, 7
    %v3010 = vsub.s32 %v1795, %v3009
    %v3011 = vrot.slane %v1070, %v3010
    %v3012 = vsel %vm1800, %v3011, %v3007
    %v3013 = vlaneseq
    %v3014 = vshrl.u32 %v3013, 7
    %v3015 = vsub.s32 %v1802, %v3014
    %v3016 = vrot.slane %v1073, %v3015
    %v3017 = vsel %vm1807, %v3016, %v3012
    %v3018 = vlaneseq
    %v3019 = vshrl.u32 %v3018, 7
    %v3020 = vsub.s32 %v1809, %v3019
    %v3021 = vrot.slane %v1076, %v3020
    %v3022 = vsel %vm1814, %v3021, %v3017
    %v3023 = vlaneseq
    %v3024 = vshrl.u32 %v3023, 7
    %v3025 = vsub.s32 %v1816, %v3024
    %v3026 = vrot.slane %v1079, %v3025
    %v3027 = vsel %vm1821, %v3026, %v3022
    %v3028 = vlaneseq
    %v3029 = vshrl.u32 %v3028, 7
    %v3030 = vsub.s32 %v1823, %v3029
    %v3031 = vrot.slane %v1082, %v3030
    %v3032 = vsel %vm1828, %v3031, %v3027
    %v3033 = vlaneseq
    %v3034 = vshrl.u32 %v3033, 7
    %v3035 = vsub.s32 %v1830, %v3034
    %v3036 = vrot.slane %v1085, %v3035
    %v3037 = vsel %vm1835, %v3036, %v3032
    %v3038 = vlaneseq
    %v3039 = vshrl.u32 %v3038, 7
    %v3040 = vsub.s32 %v1837, %v3039
    %v3041 = vrot.slane %v1088, %v3040
    %v3042 = vsel %vm1842, %v3041, %v3037
    %v3043 = vlaneseq
    %v3044 = vshrl.u32 %v3043, 7
    %v3045 = vsub.s32 %v1844, %v3044
    %v3046 = vrot.slane %v1091, %v3045
    %v3047 = vsel %vm1849, %v3046, %v3042
    %v3048 = vlaneseq
    %v3049 = vshrl.u32 %v3048, 7
    %v3050 = vsub.s32 %v1851, %v3049
    %v3051 = vrot.slane %v1094, %v3050
    %v3052 = vsel %vm1856, %v3051, %v3047
    %v3053 = vlaneseq
    %v3054 = vshrl.u32 %v3053, 7
    %v3055 = vsub.s32 %v1858, %v3054
    %v3056 = vrot.slane %v1097, %v3055
    %v3057 = vsel %vm1863, %v3056, %v3052
    %v3058 = vlaneseq
    %v3059 = vshrl.u32 %v3058, 7
    %v3060 = vsub.s32 %v1865, %v3059
    %v3061 = vrot.slane %v1100, %v3060
    %v3062 = vsel %vm1870, %v3061, %v3057
    %v3063 = vlaneseq
    %v3064 = vshrl.u32 %v3063, 7
    %v3065 = vsub.s32 %v1872, %v3064
    %v3066 = vrot.slane %v1103, %v3065
    %v3067 = vsel %vm1877, %v3066, %v3062
    %v3068 = vlaneseq
    %v3069 = vshrl.u32 %v3068, 7
    %v3070 = vsub.s32 %v1879, %v3069
    %v3071 = vrot.slane %v1106, %v3070
    %v3072 = vsel %vm1884, %v3071, %v3067
    %v3073 = vlaneseq
    %v3074 = vshrl.u32 %v3073, 7
    %v3075 = vsub.s32 %v1886, %v3074
    %v3076 = vrot.slane %v1109, %v3075
    %v3077 = vsel %vm1891, %v3076, %v3072
    %v3078 = vlaneseq
    %v3079 = vshrl.u32 %v3078, 7
    %v3080 = vsub.s32 %v1783, %v3079
    %v3081 = vrot.slane %v1112, %v3080
    %v3082 = vlaneseq
    %v3083 = vshrl.u32 %v3082, 7
    %v3084 = vsub.s32 %v1788, %v3083
    %v3085 = vrot.slane %v1115, %v3084
    %v3086 = vsel %vm1793, %v3085, %v3081
    %v3087 = vlaneseq
    %v3088 = vshrl.u32 %v3087, 7
    %v3089 = vsub.s32 %v1795, %v3088
    %v3090 = vrot.slane %v1118, %v3089
    %v3091 = vsel %vm1800, %v3090, %v3086
    %v3092 = vlaneseq
    %v3093 = vshrl.u32 %v3092, 7
    %v3094 = vsub.s32 %v1802, %v3093
    %v3095 = vrot.slane %v1121, %v3094
    %v3096 = vsel %vm1807, %v3095, %v3091
    %v3097 = vlaneseq
    %v3098 = vshrl.u32 %v3097, 7
    %v3099 = vsub.s32 %v1809, %v3098
    %v3100 = vrot.slane %v1124, %v3099
    %v3101 = vsel %vm1814, %v3100, %v3096
    %v3102 = vlaneseq
    %v3103 = vshrl.u32 %v3102, 7
    %v3104 = vsub.s32 %v1816, %v3103
    %v3105 = vrot.slane %v1127, %v3104
    %v3106 = vsel %vm1821, %v3105, %v3101
    %v3107 = vlaneseq
    %v3108 = vshrl.u32 %v3107, 7
    %v3109 = vsub.s32 %v1823, %v3108
    %v3110 = vrot.slane %v1130, %v3109
    %v3111 = vsel %vm1828, %v3110, %v3106
    %v3112 = vlaneseq
    %v3113 = vshrl.u32 %v3112, 7
    %v3114 = vsub.s32 %v1830, %v3113
    %v3115 = vrot.slane %v1133, %v3114
    %v3116 = vsel %vm1835, %v3115, %v3111
    %v3117 = vlaneseq
    %v3118 = vshrl.u32 %v3117, 7
    %v3119 = vsub.s32 %v1837, %v3118
    %v3120 = vrot.slane %v1136, %v3119
    %v3121 = vsel %vm1842, %v3120, %v3116
    %v3122 = vlaneseq
    %v3123 = vshrl.u32 %v3122, 7
    %v3124 = vsub.s32 %v1844, %v3123
    %v3125 = vrot.slane %v1139, %v3124
    %v3126 = vsel %vm1849, %v3125, %v3121
    %v3127 = vlaneseq
    %v3128 = vshrl.u32 %v3127, 7
    %v3129 = vsub.s32 %v1851, %v3128
    %v3130 = vrot.slane %v1142, %v3129
    %v3131 = vsel %vm1856, %v3130, %v3126
    %v3132 = vlaneseq
    %v3133 = vshrl.u32 %v3132, 7
    %v3134 = vsub.s32 %v1858, %v3133
    %v3135 = vrot.slane %v1145, %v3134
    %v3136 = vsel %vm1863, %v3135, %v3131
    %v3137 = vlaneseq
    %v3138 = vshrl.u32 %v3137, 7
    %v3139 = vsub.s32 %v1865, %v3138
    %v3140 = vrot.slane %v1148, %v3139
    %v3141 = vsel %vm1870, %v3140, %v3136
    %v3142 = vlaneseq
    %v3143 = vshrl.u32 %v3142, 7
    %v3144 = vsub.s32 %v1872, %v3143
    %v3145 = vrot.slane %v1151, %v3144
    %v3146 = vsel %vm1877, %v3145, %v3141
    %v3147 = vlaneseq
    %v3148 = vshrl.u32 %v3147, 7
    %v3149 = vsub.s32 %v1879, %v3148
    %v3150 = vrot.slane %v1154, %v3149
    %v3151 = vsel %vm1884, %v3150, %v3146
    %v3152 = vlaneseq
    %v3153 = vshrl.u32 %v3152, 7
    %v3154 = vsub.s32 %v1886, %v3153
    %v3155 = vrot.slane %v1157, %v3154
    %v3156 = vsel %vm1891, %v3155, %v3151
    %v3157 = vlaneseq
    %v3158 = vshrl.u32 %v3157, 7
    %v3159 = vsub.s32 %v1783, %v3158
    %v3160 = vrot.slane %v1160, %v3159
    %v3161 = vlaneseq
    %v3162 = vshrl.u32 %v3161, 7
    %v3163 = vsub.s32 %v1788, %v3162
    %v3164 = vrot.slane %v1163, %v3163
    %v3165 = vsel %vm1793, %v3164, %v3160
    %v3166 = vlaneseq
    %v3167 = vshrl.u32 %v3166, 7
    %v3168 = vsub.s32 %v1795, %v3167
    %v3169 = vrot.slane %v1166, %v3168
    %v3170 = vsel %vm1800, %v3169, %v3165
    %v3171 = vlaneseq
    %v3172 = vshrl.u32 %v3171, 7
    %v3173 = vsub.s32 %v1802, %v3172
    %v3174 = vrot.slane %v1169, %v3173
    %v3175 = vsel %vm1807, %v3174, %v3170
    %v3176 = vlaneseq
    %v3177 = vshrl.u32 %v3176, 7
    %v3178 = vsub.s32 %v1809, %v3177
    %v3179 = vrot.slane %v1172, %v3178
    %v3180 = vsel %vm1814, %v3179, %v3175
    %v3181 = vlaneseq
    %v3182 = vshrl.u32 %v3181, 7
    %v3183 = vsub.s32 %v1816, %v3182
    %v3184 = vrot.slane %v1175, %v3183
    %v3185 = vsel %vm1821, %v3184, %v3180
    %v3186 = vlaneseq
    %v3187 = vshrl.u32 %v3186, 7
    %v3188 = vsub.s32 %v1823, %v3187
    %v3189 = vrot.slane %v1178, %v3188
    %v3190 = vsel %vm1828, %v3189, %v3185
    %v3191 = vlaneseq
    %v3192 = vshrl.u32 %v3191, 7
    %v3193 = vsub.s32 %v1830, %v3192
    %v3194 = vrot.slane %v1181, %v3193
    %v3195 = vsel %vm1835, %v3194, %v3190
    %v3196 = vlaneseq
    %v3197 = vshrl.u32 %v3196, 7
    %v3198 = vsub.s32 %v1837, %v3197
    %v3199 = vrot.slane %v1184, %v3198
    %v3200 = vsel %vm1842, %v3199, %v3195
    %v3201 = vlaneseq
    %v3202 = vshrl.u32 %v3201, 7
    %v3203 = vsub.s32 %v1844, %v3202
    %v3204 = vrot.slane %v1187, %v3203
    %v3205 = vsel %vm1849, %v3204, %v3200
    %v3206 = vlaneseq
    %v3207 = vshrl.u32 %v3206, 7
    %v3208 = vsub.s32 %v1851, %v3207
    %v3209 = vrot.slane %v1190, %v3208
    %v3210 = vsel %vm1856, %v3209, %v3205
    %v3211 = vlaneseq
    %v3212 = vshrl.u32 %v3211, 7
    %v3213 = vsub.s32 %v1858, %v3212
    %v3214 = vrot.slane %v1193, %v3213
    %v3215 = vsel %vm1863, %v3214, %v3210
    %v3216 = vlaneseq
    %v3217 = vshrl.u32 %v3216, 7
    %v3218 = vsub.s32 %v1865, %v3217
    %v3219 = vrot.slane %v1196, %v3218
    %v3220 = vsel %vm1870, %v3219, %v3215
    %v3221 = vlaneseq
    %v3222 = vshrl.u32 %v3221, 7
    %v3223 = vsub.s32 %v1872, %v3222
    %v3224 = vrot.slane %v1199, %v3223
    %v3225 = vsel %vm1877, %v3224, %v3220
    %v3226 = vlaneseq
    %v3227 = vshrl.u32 %v3226, 7
    %v3228 = vsub.s32 %v1879, %v3227
    %v3229 = vrot.slane %v1202, %v3228
    %v3230 = vsel %vm1884, %v3229, %v3225
    %v3231 = vlaneseq
    %v3232 = vshrl.u32 %v3231, 7
    %v3233 = vsub.s32 %v1886, %v3232
    %v3234 = vrot.slane %v1205, %v3233
    %v3235 = vsel %vm1891, %v3234, %v3230
    %v3236 = vlaneseq
    %v3237 = vshrl.u32 %v3236, 7
    %v3238 = vsub.s32 %v1783, %v3237
    %v3239 = vrot.slane %v1208, %v3238
    %v3240 = vlaneseq
    %v3241 = vshrl.u32 %v3240, 7
    %v3242 = vsub.s32 %v1788, %v3241
    %v3243 = vrot.slane %v1211, %v3242
    %v3244 = vsel %vm1793, %v3243, %v3239
    %v3245 = vlaneseq
    %v3246 = vshrl.u32 %v3245, 7
    %v3247 = vsub.s32 %v1795, %v3246
    %v3248 = vrot.slane %v1214, %v3247
    %v3249 = vsel %vm1800, %v3248, %v3244
    %v3250 = vlaneseq
    %v3251 = vshrl.u32 %v3250, 7
    %v3252 = vsub.s32 %v1802, %v3251
    %v3253 = vrot.slane %v1217, %v3252
    %v3254 = vsel %vm1807, %v3253, %v3249
    %v3255 = vlaneseq
    %v3256 = vshrl.u32 %v3255, 7
    %v3257 = vsub.s32 %v1809, %v3256
    %v3258 = vrot.slane %v1220, %v3257
    %v3259 = vsel %vm1814, %v3258, %v3254
    %v3260 = vlaneseq
    %v3261 = vshrl.u32 %v3260, 7
    %v3262 = vsub.s32 %v1816, %v3261
    %v3263 = vrot.slane %v1223, %v3262
    %v3264 = vsel %vm1821, %v3263, %v3259
    %v3265 = vlaneseq
    %v3266 = vshrl.u32 %v3265, 7
    %v3267 = vsub.s32 %v1823, %v3266
    %v3268 = vrot.slane %v1226, %v3267
    %v3269 = vsel %vm1828, %v3268, %v3264
    %v3270 = vlaneseq
    %v3271 = vshrl.u32 %v3270, 7
    %v3272 = vsub.s32 %v1830, %v3271
    %v3273 = vrot.slane %v1229, %v3272
    %v3274 = vsel %vm1835, %v3273, %v3269
    %v3275 = vlaneseq
    %v3276 = vshrl.u32 %v3275, 7
    %v3277 = vsub.s32 %v1837, %v3276
    %v3278 = vrot.slane %v1232, %v3277
    %v3279 = vsel %vm1842, %v3278, %v3274
    %v3280 = vlaneseq
    %v3281 = vshrl.u32 %v3280, 7
    %v3282 = vsub.s32 %v1844, %v3281
    %v3283 = vrot.slane %v1235, %v3282
    %v3284 = vsel %vm1849, %v3283, %v3279
    %v3285 = vlaneseq
    %v3286 = vshrl.u32 %v3285, 7
    %v3287 = vsub.s32 %v1851, %v3286
    %v3288 = vrot.slane %v1238, %v3287
    %v3289 = vsel %vm1856, %v3288, %v3284
    %v3290 = vlaneseq
    %v3291 = vshrl.u32 %v3290, 7
    %v3292 = vsub.s32 %v1858, %v3291
    %v3293 = vrot.slane %v1241, %v3292
    %v3294 = vsel %vm1863, %v3293, %v3289
    %v3295 = vlaneseq
    %v3296 = vshrl.u32 %v3295, 7
    %v3297 = vsub.s32 %v1865, %v3296
    %v3298 = vrot.slane %v1244, %v3297
    %v3299 = vsel %vm1870, %v3298, %v3294
    %v3300 = vlaneseq
    %v3301 = vshrl.u32 %v3300, 7
    %v3302 = vsub.s32 %v1872, %v3301
    %v3303 = vrot.slane %v1247, %v3302
    %v3304 = vsel %vm1877, %v3303, %v3299
    %v3305 = vlaneseq
    %v3306 = vshrl.u32 %v3305, 7
    %v3307 = vsub.s32 %v1879, %v3306
    %v3308 = vrot.slane %v1250, %v3307
    %v3309 = vsel %vm1884, %v3308, %v3304
    %v3310 = vlaneseq
    %v3311 = vshrl.u32 %v3310, 7
    %v3312 = vsub.s32 %v1886, %v3311
    %v3313 = vrot.slane %v1253, %v3312
    %v3314 = vsel %vm1891, %v3313, %v3309
    %v3315 = vlaneseq
    %v3316 = vshrl.u32 %v3315, 7
    %v3317 = vsub.s32 %v1783, %v3316
    %v3318 = vrot.slane %v1256, %v3317
    %v3319 = vlaneseq
    %v3320 = vshrl.u32 %v3319, 7
    %v3321 = vsub.s32 %v1788, %v3320
    %v3322 = vrot.slane %v1259, %v3321
    %v3323 = vsel %vm1793, %v3322, %v3318
    %v3324 = vlaneseq
    %v3325 = vshrl.u32 %v3324, 7
    %v3326 = vsub.s32 %v1795, %v3325
    %v3327 = vrot.slane %v1262, %v3326
    %v3328 = vsel %vm1800, %v3327, %v3323
    %v3329 = vlaneseq
    %v3330 = vshrl.u32 %v3329, 7
    %v3331 = vsub.s32 %v1802, %v3330
    %v3332 = vrot.slane %v1265, %v3331
    %v3333 = vsel %vm1807, %v3332, %v3328
    %v3334 = vlaneseq
    %v3335 = vshrl.u32 %v3334, 7
    %v3336 = vsub.s32 %v1809, %v3335
    %v3337 = vrot.slane %v1268, %v3336
    %v3338 = vsel %vm1814, %v3337, %v3333
    %v3339 = vlaneseq
    %v3340 = vshrl.u32 %v3339, 7
    %v3341 = vsub.s32 %v1816, %v3340
    %v3342 = vrot.slane %v1271, %v3341
    %v3343 = vsel %vm1821, %v3342, %v3338
    %v3344 = vlaneseq
    %v3345 = vshrl.u32 %v3344, 7
    %v3346 = vsub.s32 %v1823, %v3345
    %v3347 = vrot.slane %v1274, %v3346
    %v3348 = vsel %vm1828, %v3347, %v3343
    %v3349 = vlaneseq
    %v3350 = vshrl.u32 %v3349, 7
    %v3351 = vsub.s32 %v1830, %v3350
    %v3352 = vrot.slane %v1277, %v3351
    %v3353 = vsel %vm1835, %v3352, %v3348
    %v3354 = vlaneseq
    %v3355 = vshrl.u32 %v3354, 7
    %v3356 = vsub.s32 %v1837, %v3355
    %v3357 = vrot.slane %v1280, %v3356
    %v3358 = vsel %vm1842, %v3357, %v3353
    %v3359 = vlaneseq
    %v3360 = vshrl.u32 %v3359, 7
    %v3361 = vsub.s32 %v1844, %v3360
    %v3362 = vrot.slane %v1283, %v3361
    %v3363 = vsel %vm1849, %v3362, %v3358
    %v3364 = vlaneseq
    %v3365 = vshrl.u32 %v3364, 7
    %v3366 = vsub.s32 %v1851, %v3365
    %v3367 = vrot.slane %v1286, %v3366
    %v3368 = vsel %vm1856, %v3367, %v3363
    %v3369 = vlaneseq
    %v3370 = vshrl.u32 %v3369, 7
    %v3371 = vsub.s32 %v1858, %v3370
    %v3372 = vrot.slane %v1289, %v3371
    %v3373 = vsel %vm1863, %v3372, %v3368
    %v3374 = vlaneseq
    %v3375 = vshrl.u32 %v3374, 7
    %v3376 = vsub.s32 %v1865, %v3375
    %v3377 = vrot.slane %v1292, %v3376
    %v3378 = vsel %vm1870, %v3377, %v3373
    %v3379 = vlaneseq
    %v3380 = vshrl.u32 %v3379, 7
    %v3381 = vsub.s32 %v1872, %v3380
    %v3382 = vrot.slane %v1295, %v3381
    %v3383 = vsel %vm1877, %v3382, %v3378
    %v3384 = vlaneseq
    %v3385 = vshrl.u32 %v3384, 7
    %v3386 = vsub.s32 %v1879, %v3385
    %v3387 = vrot.slane %v1298, %v3386
    %v3388 = vsel %vm1884, %v3387, %v3383
    %v3389 = vlaneseq
    %v3390 = vshrl.u32 %v3389, 7
    %v3391 = vsub.s32 %v1886, %v3390
    %v3392 = vrot.slane %v1301, %v3391
    %v3393 = vsel %vm1891, %v3392, %v3388
    %vm3394 = vcmask 1041409
    %v3395 = vsel %vm3394, %v2682, %v1892
    %v3396 = vsel %vm3394, %v2761, %v1971
    %v3397 = vsel %vm3394, %v2840, %v2050
    %v3398 = vsel %vm3394, %v2919, %v2129
    %v3399 = vsel %vm3394, %v2998, %v2208
    %v3400 = vsel %vm3394, %v3077, %v2287
    %v3401 = vsel %vm3394, %v3156, %v2366
    %v3402 = vsel %vm3394, %v3235, %v2445
    %v3403 = vsel %vm3394, %v3314, %v2524
    %v3404 = vsel %vm3394, %v3393, %v2603
    %3415 = vmatprep.subr.mxu0 0.0
    %3416 = vmatpush1.msra.mxu0 %v1302
    %3417 = vmatprep.subr.mxu0 0.0
    %3418 = vmatpush1.msra.mxu0 %v1303
    %3419 = vmatprep.subr.mxu0 0.0
    %3420 = vmatpush1.msra.mxu0 %v1304
    %3421 = vmatprep.subr.mxu0 0.0
    %3422 = vmatpush1.msra.mxu0 %v1305
    %3423 = vmatprep.subr.mxu0 0.0
    %3424 = vmatpush1.msra.mxu0 %v1306
    %3425 = vmatprep.subr.mxu0 0.0
    %3426 = vmatpush1.msra.mxu0 %v1307
    %3427 = vmatprep.subr.mxu0 0.0
    %3428 = vmatpush1.msra.mxu0 %v1308
    %3429 = vmatprep.subr.mxu0 0.0
    %3430 = vmatpush1.msra.mxu0 %v1309
    %3431 = vmatprep.subr.mxu0 0.0
    %3432 = vmatpush1.msra.mxu0 %v1310
    %3433 = vmatprep.subr.mxu0 0.0
    %3434 = vmatpush1.msra.mxu0 %v1311
    %3435 = vmatprep.subr.mxu0 0.0
    %3436 = vmatpush1.msra.mxu0 %v1312
    %3437 = vmatprep.subr.mxu0 0.0
    %3438 = vmatpush1.msra.mxu0 %v1313
    %3439 = vmatprep.subr.mxu0 0.0
    %3440 = vmatpush1.msra.mxu0 %v1314
    %3441 = vmatprep.subr.mxu0 0.0
    %3442 = vmatpush1.msra.mxu0 %v1315
    %3443 = vmatprep.subr.mxu0 0.0
    %3444 = vmatpush1.msra.mxu0 %v1316
    %3445 = vmatprep.subr.mxu0 0.0
    %3446 = vmatpush1.msra.mxu0 %v1317
    %3447 = vmatprep.subr.mxu0 0.0
    %3448 = vmatpush1.msra.mxu0 %v1318
    %3449 = vmatprep.subr.mxu0 0.0
    %3450 = vmatpush1.msra.mxu0 %v1319
    %3451 = vmatprep.subr.mxu0 0.0
    %3452 = vmatpush1.msra.mxu0 %v1320
    %3453 = vmatprep.subr.mxu0 0.0
    %3454 = vmatpush1.msra.mxu0 %v1321
    %3455 = vmatprep.subr.mxu0 0.0
    %3456 = vmatpush1.msra.mxu0 %v1322
    %3457 = vmatprep.subr.mxu0 0.0
    %3458 = vmatpush1.msra.mxu0 %v1323
    %3459 = vmatprep.subr.mxu0 0.0
    %3460 = vmatpush1.msra.mxu0 %v1324
    %3461 = vmatprep.subr.mxu0 0.0
    %3462 = vmatpush1.msra.mxu0 %v1325
    %3463 = vmatprep.subr.mxu0 0.0
    %3464 = vmatpush1.msra.mxu0 %v1326
    %3465 = vmatprep.subr.mxu0 0.0
    %3466 = vmatpush1.msra.mxu0 %v1327
    %3467 = vmatprep.subr.mxu0 0.0
    %3468 = vmatpush1.msra.mxu0 %v1328
    %3469 = vmatprep.subr.mxu0 0.0
    %3470 = vmatpush1.msra.mxu0 %v1329
    %3471 = vmatprep.subr.mxu0 0.0
    %3472 = vmatpush1.msra.mxu0 %v1330
    %3473 = vmatprep.subr.mxu0 0.0
    %3474 = vmatpush1.msra.mxu0 %v1331
    %3475 = vmatprep.subr.mxu0 0.0
    %3476 = vmatpush1.msra.mxu0 %v1332
    %3477 = vmatprep.subr.mxu0 0.0
    %3478 = vmatpush1.msra.mxu0 %v1333
    %3479 = vmatprep.mubr.f32.mxu0 %v3396
    %3480 = vmatmul.mubr.f32.gmra.mrb[0].mxu0 %v3395
    %v3481 = vpop.f32.mrb[0].mxu0
    %v3482 = vadd.f32 0.0, %v3481
    %v3483 = vpop.f32.mrb[0].mxu0
    %3484 = vdwg.mxu0
    %3485 = vmatprep.subr.mxu0 0.0
    %3486 = vmatpush1.msra.mxu0 %v1334
    %3487 = vmatprep.subr.mxu0 0.0
    %3488 = vmatpush1.msra.mxu0 %v1335
    %3489 = vmatprep.subr.mxu0 0.0
    %3490 = vmatpush1.msra.mxu0 %v1336
    %3491 = vmatprep.subr.mxu0 0.0
    %3492 = vmatpush1.msra.mxu0 %v1337
    %3493 = vmatprep.subr.mxu0 0.0
    %3494 = vmatpush1.msra.mxu0 %v1338
    %3495 = vmatprep.subr.mxu0 0.0
    %3496 = vmatpush1.msra.mxu0 %v1339
    %3497 = vmatprep.subr.mxu0 0.0
    %3498 = vmatpush1.msra.mxu0 %v1340
    %3499 = vmatprep.subr.mxu0 0.0
    %3500 = vmatpush1.msra.mxu0 %v1341
    %3501 = vmatprep.subr.mxu0 0.0
    %3502 = vmatpush1.msra.mxu0 %v1342
    %3503 = vmatprep.subr.mxu0 0.0
    %3504 = vmatpush1.msra.mxu0 %v1343
    %3505 = vmatprep.subr.mxu0 0.0
    %3506 = vmatpush1.msra.mxu0 %v1344
    %3507 = vmatprep.subr.mxu0 0.0
    %3508 = vmatpush1.msra.mxu0 %v1345
    %3509 = vmatprep.subr.mxu0 0.0
    %3510 = vmatpush1.msra.mxu0 %v1346
    %3511 = vmatprep.subr.mxu0 0.0
    %3512 = vmatpush1.msra.mxu0 %v1347
    %3513 = vmatprep.subr.mxu0 0.0
    %3514 = vmatpush1.msra.mxu0 %v1348
    %3515 = vmatprep.subr.mxu0 0.0
    %3516 = vmatpush1.msra.mxu0 %v1349
    %3517 = vmatprep.subr.mxu0 0.0
    %3518 = vmatpush1.msra.mxu0 %v1350
    %3519 = vmatprep.subr.mxu0 0.0
    %3520 = vmatpush1.msra.mxu0 %v1351
    %3521 = vmatprep.subr.mxu0 0.0
    %3522 = vmatpush1.msra.mxu0 %v1352
    %3523 = vmatprep.subr.mxu0 0.0
    %3524 = vmatpush1.msra.mxu0 %v1353
    %3525 = vmatprep.subr.mxu0 0.0
    %3526 = vmatpush1.msra.mxu0 %v1354
    %3527 = vmatprep.subr.mxu0 0.0
    %3528 = vmatpush1.msra.mxu0 %v1355
    %3529 = vmatprep.subr.mxu0 0.0
    %3530 = vmatpush1.msra.mxu0 %v1356
    %3531 = vmatprep.subr.mxu0 0.0
    %3532 = vmatpush1.msra.mxu0 %v1357
    %3533 = vmatprep.subr.mxu0 0.0
    %3534 = vmatpush1.msra.mxu0 %v1358
    %3535 = vmatprep.subr.mxu0 0.0
    %3536 = vmatpush1.msra.mxu0 %v1359
    %3537 = vmatprep.subr.mxu0 0.0
    %3538 = vmatpush1.msra.mxu0 %v1360
    %3539 = vmatprep.subr.mxu0 0.0
    %3540 = vmatpush1.msra.mxu0 %v1361
    %3541 = vmatprep.subr.mxu0 0.0
    %3542 = vmatpush1.msra.mxu0 %v1362
    %3543 = vmatprep.subr.mxu0 0.0
    %3544 = vmatpush1.msra.mxu0 %v1363
    %3545 = vmatprep.subr.mxu0 0.0
    %3546 = vmatpush1.msra.mxu0 %v1364
    %3547 = vmatprep.subr.mxu0 0.0
    %3548 = vmatpush1.msra.mxu0 %v1365
    %3549 = vmatprep.mubr.f32.mxu0 %v3398
    %3550 = vmatmul.mubr.f32.gmra.mrb[0].mxu0 %v3397
    %v3551 = vpop.f32.mrb[0].mxu0
    %v3552 = vadd.f32 %v3482, %v3551
    %v3553 = vpop.f32.mrb[0].mxu0
    %3554 = vdwg.mxu0
    %3555 = vmatprep.subr.mxu0 0.0
    %3556 = vmatpush1.msra.mxu0 %v1366
    %3557 = vmatprep.subr.mxu0 0.0
    %3558 = vmatpush1.msra.mxu0 %v1367
    %3559 = vmatprep.subr.mxu0 0.0
    %3560 = vmatpush1.msra.mxu0 %v1368
    %3561 = vmatprep.subr.mxu0 0.0
    %3562 = vmatpush1.msra.mxu0 %v1369
    %3563 = vmatprep.subr.mxu0 0.0
    %3564 = vmatpush1.msra.mxu0 %v1370
    %3565 = vmatprep.subr.mxu0 0.0
    %3566 = vmatpush1.msra.mxu0 %v1371
    %3567 = vmatprep.subr.mxu0 0.0
    %3568 = vmatpush1.msra.mxu0 %v1372
    %3569 = vmatprep.subr.mxu0 0.0
    %3570 = vmatpush1.msra.mxu0 %v1373
    %3571 = vmatprep.subr.mxu0 0.0
    %3572 = vmatpush1.msra.mxu0 %v1374
    %3573 = vmatprep.subr.mxu0 0.0
    %3574 = vmatpush1.msra.mxu0 %v1375
    %3575 = vmatprep.subr.mxu0 0.0
    %3576 = vmatpush1.msra.mxu0 %v1376
    %3577 = vmatprep.subr.mxu0 0.0
    %3578 = vmatpush1.msra.mxu0 %v1377
    %3579 = vmatprep.subr.mxu0 0.0
    %3580 = vmatpush1.msra.mxu0 %v1378
    %3581 = vmatprep.subr.mxu0 0.0
    %3582 = vmatpush1.msra.mxu0 %v1379
    %3583 = vmatprep.subr.mxu0 0.0
    %3584 = vmatpush1.msra.mxu0 %v1380
    %3585 = vmatprep.subr.mxu0 0.0
    %3586 = vmatpush1.msra.mxu0 %v1381
    %3587 = vmatprep.subr.mxu0 0.0
    %3588 = vmatpush1.msra.mxu0 %v1382
    %3589 = vmatprep.subr.mxu0 0.0
    %3590 = vmatpush1.msra.mxu0 %v1383
    %3591 = vmatprep.subr.mxu0 0.0
    %3592 = vmatpush1.msra.mxu0 %v1384
    %3593 = vmatprep.subr.mxu0 0.0
    %3594 = vmatpush1.msra.mxu0 %v1385
    %3595 = vmatprep.subr.mxu0 0.0
    %3596 = vmatpush1.msra.mxu0 %v1386
    %3597 = vmatprep.subr.mxu0 0.0
    %3598 = vmatpush1.msra.mxu0 %v1387
    %3599 = vmatprep.subr.mxu0 0.0
    %3600 = vmatpush1.msra.mxu0 %v1388
    %3601 = vmatprep.subr.mxu0 0.0
    %3602 = vmatpush1.msra.mxu0 %v1389
    %3603 = vmatprep.subr.mxu0 0.0
    %3604 = vmatpush1.msra.mxu0 %v1390
    %3605 = vmatprep.subr.mxu0 0.0
    %3606 = vmatpush1.msra.mxu0 %v1391
    %3607 = vmatprep.subr.mxu0 0.0
    %3608 = vmatpush1.msra.mxu0 %v1392
    %3609 = vmatprep.subr.mxu0 0.0
    %3610 = vmatpush1.msra.mxu0 %v1393
    %3611 = vmatprep.subr.mxu0 0.0
    %3612 = vmatpush1.msra.mxu0 %v1394
    %3613 = vmatprep.subr.mxu0 0.0
    %3614 = vmatpush1.msra.mxu0 %v1395
    %3615 = vmatprep.subr.mxu0 0.0
    %3616 = vmatpush1.msra.mxu0 %v1396
    %3617 = vmatprep.subr.mxu0 0.0
    %3618 = vmatpush1.msra.mxu0 %v1397
    %3619 = vmatprep.mubr.f32.mxu0 %v3400
    %3620 = vmatmul.mubr.f32.gmra.mrb[0].mxu0 %v3399
    %v3621 = vpop.f32.mrb[0].mxu0
    %v3622 = vadd.f32 %v3552, %v3621
    %v3623 = vpop.f32.mrb[0].mxu0
    %3624 = vdwg.mxu0
    %3625 = vmatprep.subr.mxu0 0.0
    %3626 = vmatpush1.msra.mxu0 %v1398
    %3627 = vmatprep.subr.mxu0 0.0
    %3628 = vmatpush1.msra.mxu0 %v1399
    %3629 = vmatprep.subr.mxu0 0.0
    %3630 = vmatpush1.msra.mxu0 %v1400
    %3631 = vmatprep.subr.mxu0 0.0
    %3632 = vmatpush1.msra.mxu0 %v1401
    %3633 = vmatprep.subr.mxu0 0.0
    %3634 = vmatpush1.msra.mxu0 %v1402
    %3635 = vmatprep.subr.mxu0 0.0
    %3636 = vmatpush1.msra.mxu0 %v1403
    %3637 = vmatprep.subr.mxu0 0.0
    %3638 = vmatpush1.msra.mxu0 %v1404
    %3639 = vmatprep.subr.mxu0 0.0
    %3640 = vmatpush1.msra.mxu0 %v1405
    %3641 = vmatprep.subr.mxu0 0.0
    %3642 = vmatpush1.msra.mxu0 %v1406
    %3643 = vmatprep.subr.mxu0 0.0
    %3644 = vmatpush1.msra.mxu0 %v1407
    %3645 = vmatprep.subr.mxu0 0.0
    %3646 = vmatpush1.msra.mxu0 %v1408
    %3647 = vmatprep.subr.mxu0 0.0
    %3648 = vmatpush1.msra.mxu0 %v1409
    %3649 = vmatprep.subr.mxu0 0.0
    %3650 = vmatpush1.msra.mxu0 %v1410
    %3651 = vmatprep.subr.mxu0 0.0
    %3652 = vmatpush1.msra.mxu0 %v1411
    %3653 = vmatprep.subr.mxu0 0.0
    %3654 = vmatpush1.msra.mxu0 %v1412
    %3655 = vmatprep.subr.mxu0 0.0
    %3656 = vmatpush1.msra.mxu0 %v1413
    %3657 = vmatprep.subr.mxu0 0.0
    %3658 = vmatpush1.msra.mxu0 %v1414
    %3659 = vmatprep.subr.mxu0 0.0
    %3660 = vmatpush1.msra.mxu0 %v1415
    %3661 = vmatprep.subr.mxu0 0.0
    %3662 = vmatpush1.msra.mxu0 %v1416
    %3663 = vmatprep.subr.mxu0 0.0
    %3664 = vmatpush1.msra.mxu0 %v1417
    %3665 = vmatprep.subr.mxu0 0.0
    %3666 = vmatpush1.msra.mxu0 %v1418
    %3667 = vmatprep.subr.mxu0 0.0
    %3668 = vmatpush1.msra.mxu0 %v1419
    %3669 = vmatprep.subr.mxu0 0.0
    %3670 = vmatpush1.msra.mxu0 %v1420
    %3671 = vmatprep.subr.mxu0 0.0
    %3672 = vmatpush1.msra.mxu0 %v1421
    %3673 = vmatprep.subr.mxu0 0.0
    %3674 = vmatpush1.msra.mxu0 %v1422
    %3675 = vmatprep.subr.mxu0 0.0
    %3676 = vmatpush1.msra.mxu0 %v1423
    %3677 = vmatprep.subr.mxu0 0.0
    %3678 = vmatpush1.msra.mxu0 %v1424
    %3679 = vmatprep.subr.mxu0 0.0
    %3680 = vmatpush1.msra.mxu0 %v1425
    %3681 = vmatprep.subr.mxu0 0.0
    %3682 = vmatpush1.msra.mxu0 %v1426
    %3683 = vmatprep.subr.mxu0 0.0
    %3684 = vmatpush1.msra.mxu0 %v1427
    %3685 = vmatprep.subr.mxu0 0.0
    %3686 = vmatpush1.msra.mxu0 %v1428
    %3687 = vmatprep.subr.mxu0 0.0
    %3688 = vmatpush1.msra.mxu0 %v1429
    %3689 = vmatprep.mubr.f32.mxu0 %v3402
    %3690 = vmatmul.mubr.f32.gmra.mrb[0].mxu0 %v3401
    %v3691 = vpop.f32.mrb[0].mxu0
    %v3692 = vadd.f32 %v3622, %v3691
    %v3693 = vpop.f32.mrb[0].mxu0
    %3694 = vdwg.mxu0
    %3695 = vmatprep.subr.mxu0 0.0
    %3696 = vmatpush1.msra.mxu0 %v1430
    %3697 = vmatprep.subr.mxu0 0.0
    %3698 = vmatpush1.msra.mxu0 %v1431
    %3699 = vmatprep.subr.mxu0 0.0
    %3700 = vmatpush1.msra.mxu0 %v1432
    %3701 = vmatprep.subr.mxu0 0.0
    %3702 = vmatpush1.msra.mxu0 %v1433
    %3703 = vmatprep.subr.mxu0 0.0
    %3704 = vmatpush1.msra.mxu0 %v1434
    %3705 = vmatprep.subr.mxu0 0.0
    %3706 = vmatpush1.msra.mxu0 %v1435
    %3707 = vmatprep.subr.mxu0 0.0
    %3708 = vmatpush1.msra.mxu0 %v1436
    %3709 = vmatprep.subr.mxu0 0.0
    %3710 = vmatpush1.msra.mxu0 %v1437
    %3711 = vmatprep.subr.mxu0 0.0
    %3712 = vmatpush1.msra.mxu0 %v1438
    %3713 = vmatprep.subr.mxu0 0.0
    %3714 = vmatpush1.msra.mxu0 %v1439
    %3715 = vmatprep.subr.mxu0 0.0
    %3716 = vmatpush1.msra.mxu0 %v1440
    %3717 = vmatprep.subr.mxu0 0.0
    %3718 = vmatpush1.msra.mxu0 %v1441
    %3719 = vmatprep.subr.mxu0 0.0
    %3720 = vmatpush1.msra.mxu0 %v1442
    %3721 = vmatprep.subr.mxu0 0.0
    %3722 = vmatpush1.msra.mxu0 %v1443
    %3723 = vmatprep.subr.mxu0 0.0
    %3724 = vmatpush1.msra.mxu0 %v1444
    %3725 = vmatprep.subr.mxu0 0.0
    %3726 = vmatpush1.msra.mxu0 %v1445
    %3727 = vmatprep.subr.mxu0 0.0
    %3728 = vmatpush1.msra.mxu0 %v1446
    %3729 = vmatprep.subr.mxu0 0.0
    %3730 = vmatpush1.msra.mxu0 %v1447
    %3731 = vmatprep.subr.mxu0 0.0
    %3732 = vmatpush1.msra.mxu0 %v1448
    %3733 = vmatprep.subr.mxu0 0.0
    %3734 = vmatpush1.msra.mxu0 %v1449
    %3735 = vmatprep.subr.mxu0 0.0
    %3736 = vmatpush1.msra.mxu0 %v1450
    %3737 = vmatprep.subr.mxu0 0.0
    %3738 = vmatpush1.msra.mxu0 %v1451
    %3739 = vmatprep.subr.mxu0 0.0
    %3740 = vmatpush1.msra.mxu0 %v1452
    %3741 = vmatprep.subr.mxu0 0.0
    %3742 = vmatpush1.msra.mxu0 %v1453
    %3743 = vmatprep.subr.mxu0 0.0
    %3744 = vmatpush1.msra.mxu0 %v1454
    %3745 = vmatprep.subr.mxu0 0.0
    %3746 = vmatpush1.msra.mxu0 %v1455
    %3747 = vmatprep.subr.mxu0 0.0
    %3748 = vmatpush1.msra.mxu0 %v1456
    %3749 = vmatprep.subr.mxu0 0.0
    %3750 = vmatpush1.msra.mxu0 %v1457
    %3751 = vmatprep.subr.mxu0 0.0
    %3752 = vmatpush1.msra.mxu0 %v1458
    %3753 = vmatprep.subr.mxu0 0.0
    %3754 = vmatpush1.msra.mxu0 %v1459
    %3755 = vmatprep.subr.mxu0 0.0
    %3756 = vmatpush1.msra.mxu0 %v1460
    %3757 = vmatprep.subr.mxu0 0.0
    %3758 = vmatpush1.msra.mxu0 %v1461
    %3759 = vmatprep.mubr.f32.mxu0 %v3404
    %3760 = vmatmul.mubr.f32.gmra.mrb[0].mxu0 %v3403
    %v3761 = vpop.f32.mrb[0].mxu0
    %v3762 = vadd.f32 %v3692, %v3761
    %v3763 = vpop.f32.mrb[0].mxu0
    %3764 = vdwg.mxu0
    %v3765 = vmul.f32 %v3762, 0.0625
    %v3766 = vld [vmem:[%s2] sm:$0x1]
    %v3768 = vlaneseq
    %v3769 = vshrl.u32 %v3768, 7
    %v3770 = vsub.s32 0, %v3769
    %v3771 = vrot.slane %v3766, %v3770
    %v3773 = vadd.f32 %v3765, %v3771
    %v3774 = vmax.f32 %v3773, 0.0
    %v3775 = vld [vmem:[%s3] sm:$0xff]
    %v3776 = vld [vmem:[%s3 + $0x8] sm:$0xff]
    %v3777 = vld [vmem:[%s3 + $0x10] sm:$0xff]
    %v3778 = vld [vmem:[%s3 + $0x18] sm:$0xff]
    %v3779 = vld [vmem:[%s3 + $0x20] sm:$0xff]
    %v3780 = vld [vmem:[%s3 + $0x28] sm:$0xff]
    %v3781 = vld [vmem:[%s3 + $0x30] sm:$0xff]
    %v3782 = vld [vmem:[%s3 + $0x38] sm:$0xff]
    %v3783 = vld [vmem:[%s3 + $0x40] sm:$0xff]
    %v3784 = vld [vmem:[%s3 + $0x48] sm:$0xff]
    %v3785 = vld [vmem:[%s3 + $0x50] sm:$0xff]
    %v3786 = vld [vmem:[%s3 + $0x58] sm:$0xff]
    %v3787 = vld [vmem:[%s3 + $0x60] sm:$0xff]
    %v3788 = vld [vmem:[%s3 + $0x68] sm:$0xff]
    %v3789 = vld [vmem:[%s3 + $0x70] sm:$0xff]
    %v3790 = vld [vmem:[%s3 + $0x78] sm:$0xff]
    %v3791 = vld [vmem:[%s4] sm:$0x1]
    %v3793 = vlaneseq
    %v3794 = vshrl.u32 %v3793, 7
    %v3795 = vsub.s32 0, %v3794
    %v3796 = vrot.slane %v3791, %v3795
    %3798 = vmatprep.subr.mxu0 0.0
    %3799 = vmatpush1.msra.mxu0 %v3775
    %3800 = vmatprep.subr.mxu0 0.0
    %3801 = vmatpush1.msra.mxu0 %v3776
    %3802 = vmatprep.subr.mxu0 0.0
    %3803 = vmatpush1.msra.mxu0 %v3777
    %3804 = vmatprep.subr.mxu0 0.0
    %3805 = vmatpush1.msra.mxu0 %v3778
    %3806 = vmatprep.subr.mxu0 0.0
    %3807 = vmatpush1.msra.mxu0 %v3779
    %3808 = vmatprep.subr.mxu0 0.0
    %3809 = vmatpush1.msra.mxu0 %v3780
    %3810 = vmatprep.subr.mxu0 0.0
    %3811 = vmatpush1.msra.mxu0 %v3781
    %3812 = vmatprep.subr.mxu0 0.0
    %3813 = vmatpush1.msra.mxu0 %v3782
    %3814 = vmatprep.subr.mxu0 0.0
    %3815 = vmatpush1.msra.mxu0 %v3783
    %3816 = vmatprep.subr.mxu0 0.0
    %3817 = vmatpush1.msra.mxu0 %v3784
    %3818 = vmatprep.subr.mxu0 0.0
    %3819 = vmatpush1.msra.mxu0 %v3785
    %3820 = vmatprep.subr.mxu0 0.0
    %3821 = vmatpush1.msra.mxu0 %v3786
    %3822 = vmatprep.subr.mxu0 0.0
    %3823 = vmatpush1.msra.mxu0 %v3787
    %3824 = vmatprep.subr.mxu0 0.0
    %3825 = vmatpush1.msra.mxu0 %v3788
    %3826 = vmatprep.subr.mxu0 0.0
    %3827 = vmatpush1.msra.mxu0 %v3789
    %3828 = vmatprep.subr.mxu0 0.0
    %3829 = vmatpush1.msra.mxu0 %v3790
    %3830 = vmatprep.subr.mxu0 0.0
    %3831 = vmatpush1.msra.mxu0 0.0
    %3832 = vmatprep.subr.mxu0 0.0
    %3833 = vmatpush1.msra.mxu0 0.0
    %3834 = vmatprep.subr.mxu0 0.0
    %3835 = vmatpush1.msra.mxu0 0.0
    %3836 = vmatprep.subr.mxu0 0.0
    %3837 = vmatpush1.msra.mxu0 0.0
    %3838 = vmatprep.subr.mxu0 0.0
    %3839 = vmatpush1.msra.mxu0 0.0
    %3840 = vmatprep.subr.mxu0 0.0
    %3841 = vmatpush1.msra.mxu0 0.0
    %3842 = vmatprep.subr.mxu0 0.0
    %3843 = vmatpush1.msra.mxu0 0.0
    %3844 = vmatprep.subr.mxu0 0.0
    %3845 = vmatpush1.msra.mxu0 0.0
    %3846 = vmatprep.subr.mxu0 0.0
    %3847 = vmatpush1.msra.mxu0 0.0
    %3848 = vmatprep.subr.mxu0 0.0
    %3849 = vmatpush1.msra.mxu0 0.0
    %3850 = vmatprep.subr.mxu0 0.0
    %3851 = vmatpush1.msra.mxu0 0.0
    %3852 = vmatprep.subr.mxu0 0.0
    %3853 = vmatpush1.msra.mxu0 0.0
    %3854 = vmatprep.subr.mxu0 0.0
    %3855 = vmatpush1.msra.mxu0 0.0
    %3856 = vmatprep.subr.mxu0 0.0
    %3857 = vmatpush1.msra.mxu0 0.0
    %3858 = vmatprep.subr.mxu0 0.0
    %3859 = vmatpush1.msra.mxu0 0.0
    %3860 = vmatprep.subr.mxu0 0.0
    %3861 = vmatpush1.msra.mxu0 0.0
    %3862 = vmatprep.mubr.f32.mxu0 0.0
    %3863 = vmatmul.mubr.f32.gmra.mrb[0].mxu0 %v3774
    %v3864 = vpop.f32.mrb[0].mxu0
    %v3865 = vadd.f32 %v3796, %v3864
    %v3866 = vpop.f32.mrb[0].mxu0
    %3867 = vdwg.mxu0
    %3868 = vst [vmem:[#allocation2] sm:$0x3] %v3865
    // Predicated region
    $region22: #{tpu_custom_call.1} parent=1 // pred_check
      _
    $region23: #{tpu_custom_call.1} parent=1 // pred_check_branch
      %3870 = sbr.rel (0) target = $region25
    $region24: #{tpu_custom_call.1} parent=1 // pred_region
      %s3872 = ssub.s32 32, 32
      %3873 = vsyncadd [#allocation3], %s3872
      %s3875 = sshll.u32 [#allocation2], 4
      %s3876 = int_to_ptr.vmem [resolvable:$true] %s3875
      %3878 = dma.vmem_to_hbm [thread:$0]  %s3876, 32, %s5, [#allocation3]
    $region25: #{tpu_custom_call.1} parent=1 // pred_fallthru
      _
    // Predicated region
    $region26: #{tpu_custom_call.1} parent=1 // pred_check
      _
    $region27: #{tpu_custom_call.1} parent=1 // pred_check_branch
      %3880 = sbr.rel (0) target = $region29
    $region28: #{tpu_custom_call.1} parent=1 // pred_region
      %3881 = dma.done [#allocation3], 32
    $region29: #{tpu_custom_call.1} parent=1 // pred_fallthru
      _
    %3882 = vsyncpa [#allocation3], 1

</llo_original>
